<compile_context>
chip_gen: v6e
topology: v6e:2x2x1
jax: 0.10.0
libtpu: 0.0.40
codegen_flags: <defaults>
</compile_context>

<pallas_src>
import functools

import jax
import jax.numpy as jnp
from jax.experimental import pallas as pl
from jax.experimental.pallas import tpu as pltpu


LEAKY_SLOPE = 0.2
BN_EPS = 1e-5


# ------------------------------- helpers ----------------------------------- #

def _round_up(x, m):
    return ((x + m - 1) // m) * m


def _choose_m_tiling(M, tm_max):
    """tm % 8 == 0, Mp = ntiles*tm >= M.  No forced splitting: tiny late layers run as
    a single grid step (the grid is a sequential loop per TensorCore); large early
    layers naturally get multiple 'parallel' tiles for v7x megacore sharding."""
    Mp8 = _round_up(max(M, 1), 8)
    tm = min(tm_max, Mp8)
    ntiles = -(-Mp8 // tm)
    return tm, tm * ntiles


@functools.lru_cache(maxsize=None)
def _physical_vmem_bytes():
    try:
        return int(getattr(pltpu.get_tpu_info(), "vmem_capacity_bytes", 64 << 20))
    except Exception:
        return 64 << 20


def _vmem_limit_bytes(block_bytes):
    # Real double-buffered block budget + ~4 MiB headroom; cap by chip generation so
    # we never starve scoped VMEM for surrounding XLA fusions on v7x (64 MiB phys).
    cap = (32 << 20) if _physical_vmem_bytes() <= (64 << 20) else (64 << 20)
    want = int(block_bytes) + (4 << 20)
    return int(min(cap, max(16 << 20, want)))


def _apply_bn_leaky(x_nhwc, scale, shift):
    """Deferred BatchNorm (per-channel scale/shift) + LeakyReLU(0.2), f32 math."""
    xf = x_nhwc.astype(jnp.float32) * scale + shift
    return jnp.maximum(xf, LEAKY_SLOPE * xf).astype(jnp.bfloat16)


# ----------------------------- Pallas kernels ------------------------------ #

def _conv_kernel(p_ref, w_ref, o_ref, *, act, slope):
    # Stats-free variant (conv1): bf16 matmul, f32 acc, optional fused LeakyReLU.
    acc = jnp.dot(p_ref[...], w_ref[...], preferred_element_type=jnp.float32)
    if act == "leaky":
        acc = jnp.maximum(acc, slope * acc)          # one VPU op, no compare+select
    o_ref[...] = acc.astype(o_ref.dtype)


def _conv_stats_kernel(p_ref, w_ref, o_ref, s_ref):
    # BN-stats variant (conv2/3/4): matmul + per-tile (sum, sumsq) over rows.
    # Zero-padded rows contribute zero; the wrapper divides by the true row count.
    acc = jnp.dot(p_ref[...], w_ref[...], preferred_element_type=jnp.float32)
    o_ref[...] = acc.astype(o_ref.dtype)
    row_sum = jnp.sum(acc, axis=0, keepdims=True)            # (1, OCp)
    row_sq = jnp.sum(acc * acc, axis=0, keepdims=True)       # (1, OCp)
    pad_rows = jnp.zeros((6, acc.shape[1]), dtype=jnp.float32)
    # 8-sublane stats block -> full unmasked vst every grid step.
    s_ref[...] = jnp.concatenate([row_sum, row_sq, pad_rows], axis=0)[None]


# ------------------------------ JAX wrappers ------------------------------- #

def conv2d_block(x_nhwc, w_khwio, gamma=None, beta=None, *, stride, pad,
                 act="none", in_scale=None, in_shift=None):
    """Bias-free conv as im2col + Pallas MXU matmul (bf16 operands / f32 acc).

    in_scale/in_shift: deferred BatchNorm scale/shift of the *previous* layer; applied
    (with LeakyReLU) to x before im2col so XLA fuses it into the patch construction.
    If gamma/beta are given, the kernel additionally emits per-tile channel statistics
    and the call returns (y, scale, shift) for the *next* layer to apply.
    """
    if in_scale is not None:
        x_nhwc = _apply_bn_leaky(x_nhwc, in_scale, in_shift)

    N, H, W, C = x_nhwc.shape
    KH, KW, _, OC = w_khwio.shape
    OH = (H + 2 * pad - KH) // stride + 1
    OW = (W + 2 * pad - KW) // stride + 1
    M = N * OH * OW
    K = KH * KW * C
    OCp = _round_up(OC, 128)              # full 128-lane stores / MXU columns
    # TODO(synk): for conv1 (OC=16) the 128-lane padding inflates the output write 8x;
    # an unpadded (masked-store) output may win for that one layer -- needs measurement.

    with_stats = gamma is not None
    tm_max = 256 if with_stats else 512    # keep acc + acc*acc within ~half the vregs
    tm, Mp = _choose_m_tiling(M, tm_max)
    ntiles = Mp // tm

    # im2col with (kh, kw, c) ordering along K, matching w.reshape(K, OC); bf16.
    # TODO(synk): patches are still materialized in HBM (see header note).
    xp = jnp.pad(x_nhwc.astype(jnp.bfloat16),
                 ((0, 0), (pad, pad), (pad, pad), (0, 0)))
    slices = []
    for kh in range(KH):
        for kw in range(KW):
            slices.append(
                xp[:, kh:kh + stride * OH:stride, kw:kw + stride * OW:stride, :])
    patches = jnp.stack(slices, axis=3).reshape(M, K)
    if Mp != M:
        patches = jnp.pad(patches, ((0, Mp - M), (0, 0)))

    w_mat = w_khwio.reshape(K, OC).astype(jnp.bfloat16)
    if OCp != OC:
        w_mat = jnp.pad(w_mat, ((0, 0), (0, OCp - OC)))

    block_bytes = 2 * (tm * K * 2 + K * OCp * 2 + tm * OCp * 2)
    if with_stats:
        block_bytes += 2 * (8 * OCp * 4)
    vmem_limit = _vmem_limit_bytes(block_bytes)

    if with_stats:
        y, part = pl.pallas_call(
            _conv_stats_kernel,
            out_shape=(jax.ShapeDtypeStruct((Mp, OCp), jnp.bfloat16),
                       jax.ShapeDtypeStruct((ntiles, 8, OCp), jnp.float32)),
            grid=(ntiles,),
            in_specs=[
                pl.BlockSpec((tm, K), lambda i: (i, 0)),
                pl.BlockSpec((K, OCp), lambda i: (0, 0)),
            ],
            out_specs=[
                pl.BlockSpec((tm, OCp), lambda i: (i, 0)),
                pl.BlockSpec((1, 8, OCp), lambda i: (i, 0, 0)),
            ],
            compiler_params=pltpu.CompilerParams(
                dimension_semantics=("parallel",),
                vmem_limit_bytes=vmem_limit),
        )(patches, w_mat)

        # Fold batch statistics into per-channel scale/shift (tiny f32 work).
        totals = jnp.sum(part, axis=0)                     # (8, OCp)
        s = totals[0, :OC]
        ss = totals[1, :OC]
        mean = s / M
        # E[x^2]-mean^2 in f32 (clamped); fine for near-zero-mean conv outputs.
        var = jnp.maximum(ss / M - mean * mean, 0.0)       # biased (training) var
        inv = jax.lax.rsqrt(var + BN_EPS)
        scale = gamma.astype(jnp.float32) * inv
        shift = beta.astype(jnp.float32) - mean * scale
        y = y[:M, :OC].reshape(N, OH, OW, OC)
        return y, scale, shift

    y = pl.pallas_call(
        functools.partial(_conv_kernel, act=act, slope=LEAKY_SLOPE),
        out_shape=jax.ShapeDtypeStruct((Mp, OCp), jnp.bfloat16),
        grid=(ntiles,),
        in_specs=[
            pl.BlockSpec((tm, K), lambda i: (i, 0)),
            pl.BlockSpec((K, OCp), lambda i: (0, 0)),
        ],
        out_specs=pl.BlockSpec((tm, OCp), lambda i: (i, 0)),
        compiler_params=pltpu.CompilerParams(
            dimension_semantics=("parallel",),
            vmem_limit_bytes=vmem_limit),
    )(patches, w_mat)
    return y[:M, :OC].reshape(N, OH, OW, OC)


# ---------------------------- Discriminator model --------------------------- #

def init_params(key, img_channels=3, feature_maps=16):
    F = feature_maps
    conv_specs = [
        (img_channels, F),       # conv1: 4x4 s2 p1
        (F, 2 * F),              # conv2
        (2 * F, 4 * F),          # conv3
        (4 * F, 8 * F),          # conv4
        (8 * F, 1),              # conv5: 4x4 s1 p0
    ]
    params = {"conv": [], "gamma": [], "beta": []}
    keys = jax.random.split(key, len(conv_specs))
    for k, (ci, co) in zip(keys, conv_specs):
        # weights stored as [KH, KW, IC, OC]; deterministic synthetic init
        params["conv"].append(
            0.05 * jax.random.normal(k, (4, 4, ci, co), dtype=jnp.float32))
    for co in (2 * F, 4 * F, 8 * F):
        params["gamma"].append(jnp.ones((co,), jnp.float32))   # PyTorch BN defaults
        params["beta"].append(jnp.zeros((co,), jnp.float32))
    return params


@jax.jit
def discriminator_forward(params, img_nchw):
    x = jnp.transpose(img_nchw, (0, 2, 3, 1)).astype(jnp.bfloat16)   # NCHW -> NHWC

    # Layer 1: Conv(4,2,1) + LeakyReLU(0.2) fused in the matmul epilogue (no BN stats).
    x = conv2d_block(x, params["conv"][0], stride=2, pad=1, act="leaky")

    # Layers 2-4: Conv(4,2,1); each layer's BatchNorm(batch stats)+LeakyReLU is folded
    # into scale/shift from the kernel's per-tile statistics and applied at the start
    # of the *next* layer (fused into its im2col producer -- no extra HBM round trip).
    scale = shift = None
    for i in range(3):
        x, scale, shift = conv2d_block(
            x, params["conv"][i + 1],
            params["gamma"][i], params["beta"][i],
            stride=2, pad=1, in_scale=scale, in_shift=shift)

    # Deferred BN(conv4)+LeakyReLU, then Conv(4,1,0, OC=1) + Sigmoid.  The spatial
    # extent equals the kernel, so this is a plain [N, K] x [K, 1] matvec in jnp
    # (a Pallas call with a 1-lane output is pure launch / masked-store overhead).
    assert x.shape[1] == 4 and x.shape[2] == 4, "Discriminator expects 64x64 inputs"
    x = _apply_bn_leaky(x, scale, shift)
    n = x.shape[0]
    w5 = params["conv"][4]
    logits = jnp.dot(x.reshape(n, -1),
                     w5.reshape(-1, 1).astype(jnp.bfloat16),
                     preferred_element_type=jnp.float32)
    return jax.nn.sigmoid(logits).reshape(-1, 1)


if __name__ == "__main__":
    key = jax.random.PRNGKey(0)
    kp, kx = jax.random.split(key)
    # 64x64 input is the smallest spatial size compatible with the 5-conv stack
    # (64 -> 32 -> 16 -> 8 -> 4 -> 1); feature_maps kept small (16) for speed.
    params = init_params(kp, img_channels=3, feature_maps=16)
    img = jax.random.normal(kx, (2, 3, 64, 64), dtype=jnp.float32)  # NCHW

    out = discriminator_forward(params, img)
    jax.block_until_ready(out)
    assert out.shape == (2, 1)
    assert bool(jnp.all((out >= 0.0) & (out <= 1.0)))
    print("KERNEL_OK")
</pallas_src>

<mosaic_0001>
module attributes {stable_mosaic.version = 11 : i64} {
  func.func @_conv_kernel(%arg0: i32, %arg1: memref<512x48xbf16, #tpu.memory_space<vmem>>, %arg2: memref<48x128xbf16, #tpu.memory_space<vmem>>, %arg3: memref<512x128xbf16, #tpu.memory_space<vmem>>) attributes {dimension_semantics = [#tpu.dimension_semantics<parallel>], iteration_bounds = array<i64: 4>, scalar_prefetch = 0 : i64, scratch_operands = 0 : i64, tpu.core_type = #tpu.core_type<tc>, window_params = [{transform_indices = @transform_0, window_bounds = array<i64: 512, 48>}, {pipeline_mode = #tpu.pipeline_mode<synchronous>, transform_indices = @transform_1, window_bounds = array<i64: 48, 128>}, {transform_indices = @transform_2, window_bounds = array<i64: 512, 128>}]} {
    %c0 = arith.constant 0 : index
    %c0_0 = arith.constant 0 : index
    %0 = vector.load %arg1[%c0, %c0_0] : memref<512x48xbf16, #tpu.memory_space<vmem>>, vector<512x48xbf16>
    %c0_1 = arith.constant 0 : index
    %c0_2 = arith.constant 0 : index
    %1 = vector.load %arg2[%c0_1, %c0_2] : memref<48x128xbf16, #tpu.memory_space<vmem>>, vector<48x128xbf16>
    %cst = arith.constant dense<0.000000e+00> : vector<512x128xf32>
    %2 = tpu.matmul %0, %1, %cst {dimension_numbers = #tpu.dot_dimension_numbers<[1], [0], [0], [1], [0, 0, 1, 1], [], []>} : vector<512x48xbf16>, vector<48x128xbf16>, vector<512x128xf32> -> vector<512x128xf32>
    %cst_3 = arith.constant 2.000000e-01 : f32
    %3 = vector.broadcast %cst_3 : f32 to vector<512x128xf32>
    %4 = arith.mulf %3, %2 : vector<512x128xf32>
    %5 = arith.maximumf %2, %4 : vector<512x128xf32>
    %6 = arith.truncf %5 : vector<512x128xf32> to vector<512x128xbf16>
    %c0_4 = arith.constant 0 : index
    %c0_5 = arith.constant 0 : index
    %7 = vector.load %arg3[%c0_4, %c0_5] : memref<512x128xbf16, #tpu.memory_space<vmem>>, vector<512x128xbf16>
    tpu.vector_store %arg3[%c0_4, %c0_5], %6 {strides = array<i32>} : memref<512x128xbf16, #tpu.memory_space<vmem>>, vector<512x128xbf16>,
    return
  }
  func.func @transform_0(%arg0: i32) -> (i32, i32) {
    %c0_i32 = arith.constant 0 : i32
    %c0_i32_0 = arith.constant 0 : i32
    return %arg0, %c0_i32 : i32, i32
  }
  func.func @transform_1(%arg0: i32) -> (i32, i32) {
    %c0_i32 = arith.constant 0 : i32
    %c0_i32_0 = arith.constant 0 : i32
    %c0_i32_1 = arith.constant 0 : i32
    return %c0_i32, %c0_i32_0 : i32, i32
  }
  func.func @transform_2(%arg0: i32) -> (i32, i32) {
    %c0_i32 = arith.constant 0 : i32
    %c0_i32_0 = arith.constant 0 : i32
    return %arg0, %c0_i32 : i32, i32
  }
}

module attributes {stable_mosaic.version = 11 : i64} {
  func.func @_conv_stats_kernel(%arg0: i32, %arg1: memref<256x256xbf16, #tpu.memory_space<vmem>>, %arg2: memref<256x128xbf16, #tpu.memory_space<vmem>>, %arg3: memref<256x128xbf16, #tpu.memory_space<vmem>>, %arg4: memref<1x8x128xf32, #tpu.memory_space<vmem>>) attributes {dimension_semantics = [#tpu.dimension_semantics<parallel>], iteration_bounds = array<i64: 2>, scalar_prefetch = 0 : i64, scratch_operands = 0 : i64, tpu.core_type = #tpu.core_type<tc>, window_params = [{transform_indices = @transform_0, window_bounds = array<i64: 256, 256>}, {pipeline_mode = #tpu.pipeline_mode<synchronous>, transform_indices = @transform_1, window_bounds = array<i64: 256, 128>}, {transform_indices = @transform_2, window_bounds = array<i64: 256, 128>}, {transform_indices = @transform_3, window_bounds = array<i64: 1, 8, 128>}]} {
    %c0 = arith.constant 0 : index
    %c0_0 = arith.constant 0 : index
    %0 = vector.load %arg1[%c0, %c0_0] : memref<256x256xbf16, #tpu.memory_space<vmem>>, vector<256x256xbf16>
    %c0_1 = arith.constant 0 : index
    %c0_2 = arith.constant 0 : index
    %1 = vector.load %arg2[%c0_1, %c0_2] : memref<256x128xbf16, #tpu.memory_space<vmem>>, vector<256x128xbf16>
    %cst = arith.constant dense<0.000000e+00> : vector<256x128xf32>
    %2 = tpu.matmul %0, %1, %cst {dimension_numbers = #tpu.dot_dimension_numbers<[1], [0], [0], [1], [0, 0, 1, 1], [], []>} : vector<256x256xbf16>, vector<256x128xbf16>, vector<256x128xf32> -> vector<256x128xf32>
    %3 = arith.truncf %2 : vector<256x128xf32> to vector<256x128xbf16>
    %c0_3 = arith.constant 0 : index
    %c0_4 = arith.constant 0 : index
    %4 = vector.load %arg3[%c0_3, %c0_4] : memref<256x128xbf16, #tpu.memory_space<vmem>>, vector<256x128xbf16>
    tpu.vector_store %arg3[%c0_3, %c0_4], %3 {strides = array<i32>} : memref<256x128xbf16, #tpu.memory_space<vmem>>, vector<256x128xbf16>,
    %cst_5 = arith.constant dense<0.000000e+00> : vector<128xf32>
    %5 = vector.multi_reduction <add>, %2, %cst_5 [0] : vector<256x128xf32> to vector<128xf32>
    %6 = vector.shape_cast %5 : vector<128xf32> to vector<1x128xf32>
    %7 = arith.mulf %2, %2 : vector<256x128xf32>
    %cst_6 = arith.constant dense<0.000000e+00> : vector<128xf32>
    %8 = vector.multi_reduction <add>, %7, %cst_6 [0] : vector<256x128xf32> to vector<128xf32>
    %9 = vector.shape_cast %8 : vector<128xf32> to vector<1x128xf32>
    %cst_7 = arith.constant 0.000000e+00 : f32
    %10 = vector.broadcast %cst_7 : f32 to vector<6x128xf32>
    %11 = tpu.concatenate %6, %9, %10 in 0 : vector<1x128xf32>, vector<1x128xf32>, vector<6x128xf32> -> vector<8x128xf32>
    %12 = vector.shape_cast %11 : vector<8x128xf32> to vector<1x8x128xf32>
    %c0_8 = arith.constant 0 : index
    %c0_9 = arith.constant 0 : index
    %c0_10 = arith.constant 0 : index
    %13 = vector.load %arg4[%c0_8, %c0_9, %c0_10] : memref<1x8x128xf32, #tpu.memory_space<vmem>>, vector<1x8x128xf32>
    tpu.vector_store %arg4[%c0_8, %c0_9, %c0_10], %12 {strides = array<i32>} : memref<1x8x128xf32, #tpu.memory_space<vmem>>, vector<1x8x128xf32>,
    return
  }
  func.func @transform_0(%arg0: i32) -> (i32, i32) {
    %c0_i32 = arith.constant 0 : i32
    %c0_i32_0 = arith.constant 0 : i32
    return %arg0, %c0_i32 : i32, i32
  }
  func.func @transform_1(%arg0: i32) -> (i32, i32) {
    %c0_i32 = arith.constant 0 : i32
    %c0_i32_0 = arith.constant 0 : i32
    %c0_i32_1 = arith.constant 0 : i32
    return %c0_i32, %c0_i32_0 : i32, i32
  }
  func.func @transform_2(%arg0: i32) -> (i32, i32) {
    %c0_i32 = arith.constant 0 : i32
    %c0_i32_0 = arith.constant 0 : i32
    return %arg0, %c0_i32 : i32, i32
  }
  func.func @transform_3(%arg0: i32) -> (i32, i32, i32) {
    %c0_i32 = arith.constant 0 : i32
    %c0_i32_0 = arith.constant 0 : i32
    %c0_i32_1 = arith.constant 0 : i32
    return %arg0, %c0_i32, %c0_i32_0 : i32, i32, i32
  }
}

module attributes {stable_mosaic.version = 11 : i64} {
  func.func @_conv_stats_kernel(%arg0: i32, %arg1: memref<128x512xbf16, #tpu.memory_space<vmem>>, %arg2: memref<512x128xbf16, #tpu.memory_space<vmem>>, %arg3: memref<128x128xbf16, #tpu.memory_space<vmem>>, %arg4: memref<1x8x128xf32, #tpu.memory_space<vmem>>) attributes {dimension_semantics = [#tpu.dimension_semantics<parallel>], iteration_bounds = array<i64: 1>, scalar_prefetch = 0 : i64, scratch_operands = 0 : i64, tpu.core_type = #tpu.core_type<tc>, window_params = [{transform_indices = @transform_0, window_bounds = array<i64: 128, 512>}, {pipeline_mode = #tpu.pipeline_mode<synchronous>, transform_indices = @transform_1, window_bounds = array<i64: 512, 128>}, {transform_indices = @transform_2, window_bounds = array<i64: 128, 128>}, {transform_indices = @transform_3, window_bounds = array<i64: 1, 8, 128>}]} {
    %c0 = arith.constant 0 : index
    %c0_0 = arith.constant 0 : index
    %0 = vector.load %arg1[%c0, %c0_0] : memref<128x512xbf16, #tpu.memory_space<vmem>>, vector<128x512xbf16>
    %c0_1 = arith.constant 0 : index
    %c0_2 = arith.constant 0 : index
    %1 = vector.load %arg2[%c0_1, %c0_2] : memref<512x128xbf16, #tpu.memory_space<vmem>>, vector<512x128xbf16>
    %cst = arith.constant dense<0.000000e+00> : vector<128x128xf32>
    %2 = tpu.matmul %0, %1, %cst {dimension_numbers = #tpu.dot_dimension_numbers<[1], [0], [0], [1], [0, 0, 1, 1], [], []>} : vector<128x512xbf16>, vector<512x128xbf16>, vector<128x128xf32> -> vector<128x128xf32>
    %3 = arith.truncf %2 : vector<128x128xf32> to vector<128x128xbf16>
    %c0_3 = arith.constant 0 : index
    %c0_4 = arith.constant 0 : index
    %4 = vector.load %arg3[%c0_3, %c0_4] : memref<128x128xbf16, #tpu.memory_space<vmem>>, vector<128x128xbf16>
    tpu.vector_store %arg3[%c0_3, %c0_4], %3 {strides = array<i32>} : memref<128x128xbf16, #tpu.memory_space<vmem>>, vector<128x128xbf16>,
    %cst_5 = arith.constant dense<0.000000e+00> : vector<128xf32>
    %5 = vector.multi_reduction <add>, %2, %cst_5 [0] : vector<128x128xf32> to vector<128xf32>
    %6 = vector.shape_cast %5 : vector<128xf32> to vector<1x128xf32>
    %7 = arith.mulf %2, %2 : vector<128x128xf32>
    %cst_6 = arith.constant dense<0.000000e+00> : vector<128xf32>
    %8 = vector.multi_reduction <add>, %7, %cst_6 [0] : vector<128x128xf32> to vector<128xf32>
    %9 = vector.shape_cast %8 : vector<128xf32> to vector<1x128xf32>
    %cst_7 = arith.constant 0.000000e+00 : f32
    %10 = vector.broadcast %cst_7 : f32 to vector<6x128xf32>
    %11 = tpu.concatenate %6, %9, %10 in 0 : vector<1x128xf32>, vector<1x128xf32>, vector<6x128xf32> -> vector<8x128xf32>
    %12 = vector.shape_cast %11 : vector<8x128xf32> to vector<1x8x128xf32>
    %c0_8 = arith.constant 0 : index
    %c0_9 = arith.constant 0 : index
    %c0_10 = arith.constant 0 : index
    %13 = vector.load %arg4[%c0_8, %c0_9, %c0_10] : memref<1x8x128xf32, #tpu.memory_space<vmem>>, vector<1x8x128xf32>
    tpu.vector_store %arg4[%c0_8, %c0_9, %c0_10], %12 {strides = array<i32>} : memref<1x8x128xf32, #tpu.memory_space<vmem>>, vector<1x8x128xf32>,
    return
  }
  func.func @transform_0(%arg0: i32) -> (i32, i32) {
    %c0_i32 = arith.constant 0 : i32
    %c0_i32_0 = arith.constant 0 : i32
    return %arg0, %c0_i32 : i32, i32
  }
  func.func @transform_1(%arg0: i32) -> (i32, i32) {
    %c0_i32 = arith.constant 0 : i32
    %c0_i32_0 = arith.constant 0 : i32
    %c0_i32_1 = arith.constant 0 : i32
    return %c0_i32, %c0_i32_0 : i32, i32
  }
  func.func @transform_2(%arg0: i32) -> (i32, i32) {
    %c0_i32 = arith.constant 0 : i32
    %c0_i32_0 = arith.constant 0 : i32
    return %arg0, %c0_i32 : i32, i32
  }
  func.func @transform_3(%arg0: i32) -> (i32, i32, i32) {
    %c0_i32 = arith.constant 0 : i32
    %c0_i32_0 = arith.constant 0 : i32
    %c0_i32_1 = arith.constant 0 : i32
    return %arg0, %c0_i32, %c0_i32_0 : i32, i32, i32
  }
}

module attributes {stable_mosaic.version = 11 : i64} {
  func.func @_conv_stats_kernel(%arg0: i32, %arg1: memref<32x1024xbf16, #tpu.memory_space<vmem>>, %arg2: memref<1024x128xbf16, #tpu.memory_space<vmem>>, %arg3: memref<32x128xbf16, #tpu.memory_space<vmem>>, %arg4: memref<1x8x128xf32, #tpu.memory_space<vmem>>) attributes {dimension_semantics = [#tpu.dimension_semantics<parallel>], iteration_bounds = array<i64: 1>, scalar_prefetch = 0 : i64, scratch_operands = 0 : i64, tpu.core_type = #tpu.core_type<tc>, window_params = [{transform_indices = @transform_0, window_bounds = array<i64: 32, 1024>}, {pipeline_mode = #tpu.pipeline_mode<synchronous>, transform_indices = @transform_1, window_bounds = array<i64: 1024, 128>}, {transform_indices = @transform_2, window_bounds = array<i64: 32, 128>}, {transform_indices = @transform_3, window_bounds = array<i64: 1, 8, 128>}]} {
    %c0 = arith.constant 0 : index
    %c0_0 = arith.constant 0 : index
    %0 = vector.load %arg1[%c0, %c0_0] : memref<32x1024xbf16, #tpu.memory_space<vmem>>, vector<32x1024xbf16>
    %c0_1 = arith.constant 0 : index
    %c0_2 = arith.constant 0 : index
    %1 = vector.load %arg2[%c0_1, %c0_2] : memref<1024x128xbf16, #tpu.memory_space<vmem>>, vector<1024x128xbf16>
    %cst = arith.constant dense<0.000000e+00> : vector<32x128xf32>
    %2 = tpu.matmul %0, %1, %cst {dimension_numbers = #tpu.dot_dimension_numbers<[1], [0], [0], [1], [0, 0, 1, 1], [], []>} : vector<32x1024xbf16>, vector<1024x128xbf16>, vector<32x128xf32> -> vector<32x128xf32>
    %3 = arith.truncf %2 : vector<32x128xf32> to vector<32x128xbf16>
    %c0_3 = arith.constant 0 : index
    %c0_4 = arith.constant 0 : index
    %4 = vector.load %arg3[%c0_3, %c0_4] : memref<32x128xbf16, #tpu.memory_space<vmem>>, vector<32x128xbf16>
    tpu.vector_store %arg3[%c0_3, %c0_4], %3 {strides = array<i32>} : memref<32x128xbf16, #tpu.memory_space<vmem>>, vector<32x128xbf16>,
    %cst_5 = arith.constant dense<0.000000e+00> : vector<128xf32>
    %5 = vector.multi_reduction <add>, %2, %cst_5 [0] : vector<32x128xf32> to vector<128xf32>
    %6 = vector.shape_cast %5 : vector<128xf32> to vector<1x128xf32>
    %7 = arith.mulf %2, %2 : vector<32x128xf32>
    %cst_6 = arith.constant dense<0.000000e+00> : vector<128xf32>
    %8 = vector.multi_reduction <add>, %7, %cst_6 [0] : vector<32x128xf32> to vector<128xf32>
    %9 = vector.shape_cast %8 : vector<128xf32> to vector<1x128xf32>
    %cst_7 = arith.constant 0.000000e+00 : f32
    %10 = vector.broadcast %cst_7 : f32 to vector<6x128xf32>
    %11 = tpu.concatenate %6, %9, %10 in 0 : vector<1x128xf32>, vector<1x128xf32>, vector<6x128xf32> -> vector<8x128xf32>
    %12 = vector.shape_cast %11 : vector<8x128xf32> to vector<1x8x128xf32>
    %c0_8 = arith.constant 0 : index
    %c0_9 = arith.constant 0 : index
    %c0_10 = arith.constant 0 : index
    %13 = vector.load %arg4[%c0_8, %c0_9, %c0_10] : memref<1x8x128xf32, #tpu.memory_space<vmem>>, vector<1x8x128xf32>
    tpu.vector_store %arg4[%c0_8, %c0_9, %c0_10], %12 {strides = array<i32>} : memref<1x8x128xf32, #tpu.memory_space<vmem>>, vector<1x8x128xf32>,
    return
  }
  func.func @transform_0(%arg0: i32) -> (i32, i32) {
    %c0_i32 = arith.constant 0 : i32
    %c0_i32_0 = arith.constant 0 : i32
    return %arg0, %c0_i32 : i32, i32
  }
  func.func @transform_1(%arg0: i32) -> (i32, i32) {
    %c0_i32 = arith.constant 0 : i32
    %c0_i32_0 = arith.constant 0 : i32
    %c0_i32_1 = arith.constant 0 : i32
    return %c0_i32, %c0_i32_0 : i32, i32
  }
  func.func @transform_2(%arg0: i32) -> (i32, i32) {
    %c0_i32 = arith.constant 0 : i32
    %c0_i32_0 = arith.constant 0 : i32
    return %arg0, %c0_i32 : i32, i32
  }
  func.func @transform_3(%arg0: i32) -> (i32, i32, i32) {
    %c0_i32 = arith.constant 0 : i32
    %c0_i32_0 = arith.constant 0 : i32
    %c0_i32_1 = arith.constant 0 : i32
    return %arg0, %c0_i32, %c0_i32_0 : i32, i32, i32
  }
}

</mosaic_0001>

<llo_original>
// kernel: discriminator_forward.4
$region0: #{discriminator_forward.4}
  #allocation0 [shape = 'u32[]', space=smem, size = 0x4, offset = 0x4, fixed_abs, tag = 'smem constant byte address 0x4 - core index']
  #allocation1 [shape = 'u32[144,128]{1,0:T(1,128)}', space=vmem, size = 0x12000, scoped, tag = 'internal scratch']
  %s0 = inlined_call_operand.vmem [shape: bf16[2048,48], index: 0, kind: input, shape index: {}]
  %s1 = inlined_call_operand.vmem [shape: bf16[48,128], index: 1, kind: input, shape index: {}]
  %s2 = inlined_call_operand.vmem [shape: bf16[2048,128], index: 2, kind: output, shape index: {}]
  %s3 = sld [smem:[#allocation0]]
  $region41: #{discriminator_forward.4} parent=0
    _
  %s5 = ssub.s32 1, %s3
  %s6 = scalar_select 0, %s5, %s3
  loop: start=0, step=1, limit=6
  $region2: #{discriminator_forward.4} parent=0 // loop_pre_header
    _
  $region3: #{discriminator_forward.4} parent=0 // loop_header
    %s8 = sphi 0, %s12
    %p9 = scmp.ge.s32.totalorder %s8, 6
    %s18 = sphi 0, %s20
    %s21 = sphi 0, %s18
    %s22 = sphi 0, %s21
    %s38 = sphi 0, %s22
    %s42 = sphi 0, %s42
    %s44 = sphi 0, %s42
    %s45 = sphi 0, %s44
    %s59 = sphi 0, %s45
    %s65 = sphi 0, %s67
    %s68 = sphi 0, %s65
    %s69 = sphi 0, %s68
    %s85 = sphi 0, %s69
  $region4: #{discriminator_forward.4} parent=0 // loop_header_branch
    %11 = sbr.rel (%p9) target = $region8
  $region5: #{discriminator_forward.4} parent=0 // loop_body
    %s13 = ssub.s32 %s8, 1
    %s14 = ssub.s32 %s8, 2
    %s15 = sadd.s32 %s8, 1
    %s16 = ssub.s32 %s8, %s15
    %p17 = scmp.eq.s32.totalorder %s16, 0
    %s19 = sadd.s32 %s18, 1
    %s20 = scalar_select %p17, %s18, %s19
    %p23 = pneg %p17
    %p24 = scmp.eq.s32.totalorder %s8, 3
    %p25 = por %p23, %p24
    %p26 = scmp.ne.s32.totalorder %s18, %s21
    %p27 = scmp.eq.s32.totalorder %s8, 0
    %p28 = por %p26, %p27
    %p29 = scmp.ne.s32.totalorder %s18, %s21
    %p30 = scmp.eq.s32.totalorder %s13, 3
    %p31 = por %p29, %p30
    %p32 = scmp.ne.s32.totalorder %s21, %s22
    %p33 = scmp.eq.s32.totalorder %s13, 0
    %p34 = por %p32, %p33
    %p35 = scmp.ne.s32.totalorder %s21, %s22
    %p36 = scmp.eq.s32.totalorder %s14, 3
    %p37 = por %p35, %p36
    %p39 = scmp.ne.s32.totalorder %s22, %s38
    %p40 = scmp.eq.s32.totalorder %s14, 0
    %p41 = por %p39, %p40
    %s43 = sadd.s32 %s42, 1
    %p46 = scmp.eq.s32.totalorder %s8, 3
    %p47 = scmp.ne.s32.totalorder %s42, %s44
    %p48 = scmp.eq.s32.totalorder %s8, 0
    %p49 = por %p47, %p48
    %p50 = scmp.ne.s32.totalorder %s42, %s44
    %p51 = scmp.eq.s32.totalorder %s13, 3
    %p52 = por %p50, %p51
    %p53 = scmp.ne.s32.totalorder %s44, %s45
    %p54 = scmp.eq.s32.totalorder %s13, 0
    %p55 = por %p53, %p54
    %p56 = scmp.ne.s32.totalorder %s44, %s45
    %p57 = scmp.eq.s32.totalorder %s14, 3
    %p58 = por %p56, %p57
    %p60 = scmp.ne.s32.totalorder %s45, %s59
    %p61 = scmp.eq.s32.totalorder %s14, 0
    %p62 = por %p60, %p61
    %s63 = ssub.s32 %s8, %s15
    %p64 = scmp.eq.s32.totalorder %s63, 0
    %s66 = sadd.s32 %s65, 1
    %s67 = scalar_select %p64, %s65, %s66
    %p70 = pneg %p64
    %p71 = scmp.eq.s32.totalorder %s8, 3
    %p72 = por %p70, %p71
    %p73 = scmp.ne.s32.totalorder %s65, %s68
    %p74 = scmp.eq.s32.totalorder %s8, 0
    %p75 = por %p73, %p74
    %p76 = scmp.ne.s32.totalorder %s65, %s68
    %p77 = scmp.eq.s32.totalorder %s13, 3
    %p78 = por %p76, %p77
    %p79 = scmp.ne.s32.totalorder %s68, %s69
    %p80 = scmp.eq.s32.totalorder %s13, 0
    %p81 = por %p79, %p80
    %p82 = scmp.ne.s32.totalorder %s68, %s69
    %p83 = scmp.eq.s32.totalorder %s14, 3
    %p84 = por %p82, %p83
    %p86 = scmp.ne.s32.totalorder %s69, %s85
    %p87 = scmp.eq.s32.totalorder %s14, 0
    %p88 = por %p86, %p87
    %p89 = scmp.le.s32.totalorder 1, %s8
    %p90 = scmp.lt.s32.totalorder %s8, 5
    %p91 = pnand %p89, %p90
    %p92 = pneg %p91
    // Predicated region
    $region9: #{discriminator_forward.4} parent=5 // pred_check
      _
    $region10: #{discriminator_forward.4} parent=5 // pred_check_branch
      %94 = sbr.rel (%p91) target = $region12
    $region11: #{discriminator_forward.4} parent=5 // pred_region
      %s95 = ssub.s32 %s8, 1
      // Predicated region
      $region13: #{discriminator_forward.4} parent=11 // pred_check
        %p96 = pneg %p55
      $region14: #{discriminator_forward.4} parent=11 // pred_check_branch
        %98 = sbr.rel (%p96) target = $region16
      $region15: #{discriminator_forward.4} parent=11 // pred_region
        _
      $region16: #{discriminator_forward.4} parent=11 // pred_fallthru
        _
    $region12: #{discriminator_forward.4} parent=5 // pred_fallthru
      _
    %p99 = scmp.lt.s32.totalorder %s8, 4
    // Predicated region
    $region17: #{discriminator_forward.4} parent=5 // pred_check
      %p100 = pneg %p99
    $region18: #{discriminator_forward.4} parent=5 // pred_check_branch
      %102 = sbr.rel (%p100) target = $region20
    $region19: #{discriminator_forward.4} parent=5 // pred_region
      // Predicated region
      $region21: #{discriminator_forward.4} parent=19 // pred_check
        %p103 = pneg %p28
      $region22: #{discriminator_forward.4} parent=19 // pred_check_branch
        %105 = sbr.rel (%p103) target = $region24
      $region23: #{discriminator_forward.4} parent=19 // pred_region
        %s106 = smul.u32 64, %s8
        %p107 = scmp.lt.s32.totalorder %s106, 255
        %s108 = scalar_select %p107, %s106, 255
        %s109 = smul.addr %s108, 4
        %s110 = scalar_lea.vmem %s0, %s109
        %s111 = smul.u32 64, %s8
      $region24: #{discriminator_forward.4} parent=19 // pred_fallthru
        _
    $region20: #{discriminator_forward.4} parent=5 // pred_fallthru
      _
    %p112 = scmp.le.s32.totalorder 1, %s8
    %p113 = scmp.lt.s32.totalorder %s8, 5
    %p114 = pnand %p112, %p113
    %p115 = pneg %p114
    // Predicated region
    $region25: #{discriminator_forward.4} parent=5 // pred_check
      _
    $region26: #{discriminator_forward.4} parent=5 // pred_check_branch
      %117 = sbr.rel (%p114) target = $region28
    $region27: #{discriminator_forward.4} parent=5 // pred_region
      %s118 = ssub.s32 %s8, 1
      %s119 = smul.u32 64, %s13
      %p120 = scmp.lt.s32.totalorder %s119, 255
      %s121 = scalar_select %p120, %s119, 255
      %s122 = smul.addr %s121, 4
      %s123 = scalar_lea.vmem %s0, %s122
      %p124 = pneg %p34
      %p125 = pneg %p31
      %p126 = pneg %p55
      %p127 = pneg %p52
      %p128 = pneg %p81
      %p129 = pneg %p78
      %s130 = smul.u32 64, %s13
      %p131 = scmp.lt.s32.totalorder %s130, 255
      %s132 = scalar_select %p131, %s130, 255
      %s133 = smul.addr %s132, 4
      %s134 = scalar_lea.vmem %s2, %s133
      %s135 = smul.u32 64, %s13
      %p136 = scmp.lt.s32.totalorder %s135, 255
      %s137 = scalar_select %p136, %s135, 255
      %s138 = smul.addr %s137, 4
      %s139 = scalar_lea.vmem %s0, %s138
      %s140 = smul.u32 64, %s13
      %s141 = smul.u32 64, %s13
      %p142 = scmp.lt.s32.totalorder %s141, 255
      %s143 = scalar_select %p142, %s141, 255
      %s144 = smul.addr %s143, 4
      %s145 = scalar_lea.vmem %s2, %s144
      %s146 = smul.u32 64, %s13
      %v148 = vld [vmem:[%s139] sm:$0xf]
      %v149 = vld [vmem:[%s139 + $0x4] sm:$0xf]
      %v150 = vld [vmem:[%s139 + $0x8] sm:$0xf]
      %v151 = vld [vmem:[%s139 + $0xc] sm:$0xf]
      %v152 = vld [vmem:[%s139 + $0x10] sm:$0xf]
      %v153 = vld [vmem:[%s139 + $0x14] sm:$0xf]
      %v154 = vld [vmem:[%s139 + $0x18] sm:$0xf]
      %v155 = vld [vmem:[%s139 + $0x1c] sm:$0xf]
      %v156 = vld [vmem:[%s139 + $0x20] sm:$0xf]
      %v157 = vld [vmem:[%s139 + $0x24] sm:$0xf]
      %v158 = vld [vmem:[%s139 + $0x28] sm:$0xf]
      %v159 = vld [vmem:[%s139 + $0x2c] sm:$0xf]
      %v160 = vld [vmem:[%s139 + $0x30] sm:$0xf]
      %v161 = vld [vmem:[%s139 + $0x34] sm:$0xf]
      %v162 = vld [vmem:[%s139 + $0x38] sm:$0xf]
      %v163 = vld [vmem:[%s139 + $0x3c] sm:$0xf]
      %v164 = vld [vmem:[%s139 + $0x40] sm:$0xf]
      %v165 = vld [vmem:[%s139 + $0x44] sm:$0xf]
      %v166 = vld [vmem:[%s139 + $0x48] sm:$0xf]
      %v167 = vld [vmem:[%s139 + $0x4c] sm:$0xf]
      %v168 = vld [vmem:[%s139 + $0x50] sm:$0xf]
      %v169 = vld [vmem:[%s139 + $0x54] sm:$0xf]
      %v170 = vld [vmem:[%s139 + $0x58] sm:$0xf]
      %v171 = vld [vmem:[%s139 + $0x5c] sm:$0xf]
      %v172 = vld [vmem:[%s139 + $0x60] sm:$0xf]
      %v173 = vld [vmem:[%s139 + $0x64] sm:$0xf]
      %v174 = vld [vmem:[%s139 + $0x68] sm:$0xf]
      %v175 = vld [vmem:[%s139 + $0x6c] sm:$0xf]
      %v176 = vld [vmem:[%s139 + $0x70] sm:$0xf]
      %v177 = vld [vmem:[%s139 + $0x74] sm:$0xf]
      %v178 = vld [vmem:[%s139 + $0x78] sm:$0xf]
      %v179 = vld [vmem:[%s139 + $0x7c] sm:$0xf]
      %v180 = vld [vmem:[%s139 + $0x80] sm:$0xf]
      %v181 = vld [vmem:[%s139 + $0x84] sm:$0xf]
      %v182 = vld [vmem:[%s139 + $0x88] sm:$0xf]
      %v183 = vld [vmem:[%s139 + $0x8c] sm:$0xf]
      %v184 = vld [vmem:[%s139 + $0x90] sm:$0xf]
      %v185 = vld [vmem:[%s139 + $0x94] sm:$0xf]
      %v186 = vld [vmem:[%s139 + $0x98] sm:$0xf]
      %v187 = vld [vmem:[%s139 + $0x9c] sm:$0xf]
      %v188 = vld [vmem:[%s139 + $0xa0] sm:$0xf]
      %v189 = vld [vmem:[%s139 + $0xa4] sm:$0xf]
      %v190 = vld [vmem:[%s139 + $0xa8] sm:$0xf]
      %v191 = vld [vmem:[%s139 + $0xac] sm:$0xf]
      %v192 = vld [vmem:[%s139 + $0xb0] sm:$0xf]
      %v193 = vld [vmem:[%s139 + $0xb4] sm:$0xf]
      %v194 = vld [vmem:[%s139 + $0xb8] sm:$0xf]
      %v195 = vld [vmem:[%s139 + $0xbc] sm:$0xf]
      %v196 = vld [vmem:[%s139 + $0xc0] sm:$0xf]
      %v197 = vld [vmem:[%s139 + $0xc4] sm:$0xf]
      %v198 = vld [vmem:[%s139 + $0xc8] sm:$0xf]
      %v199 = vld [vmem:[%s139 + $0xcc] sm:$0xf]
      %v200 = vld [vmem:[%s139 + $0xd0] sm:$0xf]
      %v201 = vld [vmem:[%s139 + $0xd4] sm:$0xf]
      %v202 = vld [vmem:[%s139 + $0xd8] sm:$0xf]
      %v203 = vld [vmem:[%s139 + $0xdc] sm:$0xf]
      %v204 = vld [vmem:[%s139 + $0xe0] sm:$0xf]
      %v205 = vld [vmem:[%s139 + $0xe4] sm:$0xf]
      %v206 = vld [vmem:[%s139 + $0xe8] sm:$0xf]
      %v207 = vld [vmem:[%s139 + $0xec] sm:$0xf]
      %v208 = vld [vmem:[%s139 + $0xf0] sm:$0xf]
      %v209 = vld [vmem:[%s139 + $0xf4] sm:$0xf]
      %v210 = vld [vmem:[%s139 + $0xf8] sm:$0xf]
      %v211 = vld [vmem:[%s139 + $0xfc] sm:$0xf]
      %v212 = vld [vmem:[%s1] sm:$0xf]
      %v213 = vld [vmem:[%s1 + $0x4] sm:$0xf]
      %v214 = vld [vmem:[%s1 + $0x8] sm:$0xf]
      %v215 = vld [vmem:[%s1 + $0xc] sm:$0xf]
      %v216 = vld [vmem:[%s1 + $0x10] sm:$0xf]
      %v217 = vld [vmem:[%s1 + $0x14] sm:$0xf]
      %v282 = vunpack.c.l.b16 %v148
      %v283 = vunpack.c.l.b16 %v149
      %v284 = vunpack.c.l.b16 %v150
      %v285 = vunpack.c.l.b16 %v151
      %v286 = vunpack.c.l.b16 %v152
      %v287 = vunpack.c.l.b16 %v153
      %v288 = vunpack.c.l.b16 %v154
      %v289 = vunpack.c.l.b16 %v155
      %v290 = vunpack.c.l.b16 %v156
      %v291 = vunpack.c.l.b16 %v157
      %v292 = vunpack.c.l.b16 %v158
      %v293 = vunpack.c.l.b16 %v159
      %v294 = vunpack.c.l.b16 %v160
      %v295 = vunpack.c.l.b16 %v161
      %v296 = vunpack.c.l.b16 %v162
      %v297 = vunpack.c.l.b16 %v163
      %v298 = vunpack.c.l.b16 %v164
      %v299 = vunpack.c.l.b16 %v165
      %v300 = vunpack.c.l.b16 %v166
      %v301 = vunpack.c.l.b16 %v167
      %v302 = vunpack.c.l.b16 %v168
      %v303 = vunpack.c.l.b16 %v169
      %v304 = vunpack.c.l.b16 %v170
      %v305 = vunpack.c.l.b16 %v171
      %v306 = vunpack.c.l.b16 %v172
      %v307 = vunpack.c.l.b16 %v173
      %v308 = vunpack.c.l.b16 %v174
      %v309 = vunpack.c.l.b16 %v175
      %v310 = vunpack.c.l.b16 %v176
      %v311 = vunpack.c.l.b16 %v177
      %v312 = vunpack.c.l.b16 %v178
      %v313 = vunpack.c.l.b16 %v179
      %v314 = vunpack.c.l.b16 %v180
      %v315 = vunpack.c.l.b16 %v181
      %v316 = vunpack.c.l.b16 %v182
      %v317 = vunpack.c.l.b16 %v183
      %v318 = vunpack.c.l.b16 %v184
      %v319 = vunpack.c.l.b16 %v185
      %v320 = vunpack.c.l.b16 %v186
      %v321 = vunpack.c.l.b16 %v187
      %v322 = vunpack.c.l.b16 %v188
      %v323 = vunpack.c.l.b16 %v189
      %v324 = vunpack.c.l.b16 %v190
      %v325 = vunpack.c.l.b16 %v191
      %v326 = vunpack.c.l.b16 %v192
      %v327 = vunpack.c.l.b16 %v193
      %v328 = vunpack.c.l.b16 %v194
      %v329 = vunpack.c.l.b16 %v195
      %v330 = vunpack.c.l.b16 %v196
      %v331 = vunpack.c.l.b16 %v197
      %v332 = vunpack.c.l.b16 %v198
      %v333 = vunpack.c.l.b16 %v199
      %v334 = vunpack.c.l.b16 %v200
      %v335 = vunpack.c.l.b16 %v201
      %v336 = vunpack.c.l.b16 %v202
      %v337 = vunpack.c.l.b16 %v203
      %v338 = vunpack.c.l.b16 %v204
      %v339 = vunpack.c.l.b16 %v205
      %v340 = vunpack.c.l.b16 %v206
      %v341 = vunpack.c.l.b16 %v207
      %v342 = vunpack.c.l.b16 %v208
      %v343 = vunpack.c.l.b16 %v209
      %v344 = vunpack.c.l.b16 %v210
      %v345 = vunpack.c.l.b16 %v211
      %v346 = vpack.c.b16 %v283, %v282
      %v347 = vpack.c.b16 %v285, %v284
      %v348 = vpack.c.b16 %v287, %v286
      %v349 = vpack.c.b16 %v289, %v288
      %v350 = vpack.c.b16 %v291, %v290
      %v351 = vpack.c.b16 %v293, %v292
      %v352 = vpack.c.b16 %v295, %v294
      %v353 = vpack.c.b16 %v297, %v296
      %v354 = vpack.c.b16 %v299, %v298
      %v355 = vpack.c.b16 %v301, %v300
      %v356 = vpack.c.b16 %v303, %v302
      %v357 = vpack.c.b16 %v305, %v304
      %v358 = vpack.c.b16 %v307, %v306
      %v359 = vpack.c.b16 %v309, %v308
      %v360 = vpack.c.b16 %v311, %v310
      %v361 = vpack.c.b16 %v313, %v312
      %v362 = vpack.c.b16 %v315, %v314
      %v363 = vpack.c.b16 %v317, %v316
      %v364 = vpack.c.b16 %v319, %v318
      %v365 = vpack.c.b16 %v321, %v320
      %v366 = vpack.c.b16 %v323, %v322
      %v367 = vpack.c.b16 %v325, %v324
      %v368 = vpack.c.b16 %v327, %v326
      %v369 = vpack.c.b16 %v329, %v328
      %v370 = vpack.c.b16 %v331, %v330
      %v371 = vpack.c.b16 %v333, %v332
      %v372 = vpack.c.b16 %v335, %v334
      %v373 = vpack.c.b16 %v337, %v336
      %v374 = vpack.c.b16 %v339, %v338
      %v375 = vpack.c.b16 %v341, %v340
      %v376 = vpack.c.b16 %v343, %v342
      %v377 = vpack.c.b16 %v345, %v344
      %v384 = vunpack.c.l.b16 %v212
      %v385 = vunpack.c.l.b16 %v213
      %v386 = vunpack.c.l.b16 %v214
      %v387 = vunpack.c.l.b16 %v215
      %v388 = vunpack.c.l.b16 %v216
      %v389 = vunpack.c.l.b16 %v217
      %v390 = vpack.c.b16 %v385, %v384
      %v391 = vpack.c.b16 %v387, %v386
      %v392 = vpack.c.b16 %v389, %v388
      %vm396 = vcmask 392192
      %v398 = vsel %vm396, %v346, 0
      %v401 = vsel %vm396, %v347, 0
      %v404 = vsel %vm396, %v348, 0
      %v407 = vsel %vm396, %v349, 0
      %v410 = vsel %vm396, %v350, 0
      %v413 = vsel %vm396, %v351, 0
      %v416 = vsel %vm396, %v352, 0
      %v419 = vsel %vm396, %v353, 0
      %v422 = vsel %vm396, %v354, 0
      %v425 = vsel %vm396, %v355, 0
      %v428 = vsel %vm396, %v356, 0
      %v431 = vsel %vm396, %v357, 0
      %v434 = vsel %vm396, %v358, 0
      %v437 = vsel %vm396, %v359, 0
      %v440 = vsel %vm396, %v360, 0
      %v443 = vsel %vm396, %v361, 0
      %v446 = vsel %vm396, %v362, 0
      %v449 = vsel %vm396, %v363, 0
      %v452 = vsel %vm396, %v364, 0
      %v455 = vsel %vm396, %v365, 0
      %v458 = vsel %vm396, %v366, 0
      %v461 = vsel %vm396, %v367, 0
      %v464 = vsel %vm396, %v368, 0
      %v467 = vsel %vm396, %v369, 0
      %v470 = vsel %vm396, %v370, 0
      %v473 = vsel %vm396, %v371, 0
      %v476 = vsel %vm396, %v372, 0
      %v479 = vsel %vm396, %v373, 0
      %v482 = vsel %vm396, %v374, 0
      %v485 = vsel %vm396, %v375, 0
      %v488 = vsel %vm396, %v376, 0
      %v491 = vsel %vm396, %v377, 0
      %493 = vmatprep.subr.bf16.mxu0 0
      %494 = vmatpush1.bf16.msra.mxu0 0
      %495 = vmatprep.subr.bf16.mxu0 0
      %496 = vmatpush1.bf16.msra.mxu0 0
      %497 = vmatprep.subr.bf16.mxu0 0
      %498 = vmatpush1.bf16.msra.mxu0 0
      %499 = vmatprep.subr.bf16.mxu0 0
      %500 = vmatpush1.bf16.msra.mxu0 0
      %501 = vmatprep.subr.bf16.mxu0 0
      %502 = vmatpush1.bf16.msra.mxu0 0
      %503 = vmatprep.subr.bf16.mxu0 0
      %504 = vmatpush1.bf16.msra.mxu0 %v392
      %505 = vmatprep.subr.bf16.mxu0 0
      %506 = vmatpush1.bf16.msra.mxu0 %v391
      %507 = vmatprep.subr.bf16.mxu0 0
      %508 = vmatpush1.bf16.msra.mxu0 %v390
      %509 = vmatprep.subr.bf16.mxu0 0
      %510 = vmatpush2.bf16.msra.mxu0 0
      %511 = vmatprep.subr.bf16.mxu0 0
      %512 = vmatpush2.bf16.msra.mxu0 0
      %513 = vmatprep.subr.bf16.mxu0 0
      %514 = vmatpush2.bf16.msra.mxu0 0
      %515 = vmatprep.subr.bf16.mxu0 0
      %516 = vmatpush2.bf16.msra.mxu0 0
      %517 = vmatprep.subr.bf16.mxu0 0
      %518 = vmatpush2.bf16.msra.mxu0 0
      %519 = vmatprep.subr.bf16.mxu0 0
      %520 = vmatpush2.bf16.msra.mxu0 0
      %521 = vmatprep.subr.bf16.mxu0 0
      %522 = vmatpush2.bf16.msra.mxu0 0
      %523 = vmatprep.subr.bf16.mxu0 0
      %524 = vmatpush2.bf16.msra.mxu0 0
      %525 = vmatprep.mubr.bf16.mxu0 0
      %526 = vmatmul.mubr.bf16.gmra.mxu0 %v398
      %v527 = vpop.f32.mrf.mxu0
      %v528 = vadd.f32 0.0, %v527
      %v529 = vpop.f32.mrf.mxu0
      %v530 = vpop.f32.mrf.mxu0
      %v531 = vadd.f32 0.0, %v530
      %v532 = vpop.f32.mrf.mxu0
      %533 = vmatprep.mubr.bf16.mxu0 0
      %534 = vmatmul.mubr.bf16.gmra.mxu0 %v401
      %v535 = vpop.f32.mrf.mxu0
      %v536 = vadd.f32 0.0, %v535
      %v537 = vpop.f32.mrf.mxu0
      %v538 = vpop.f32.mrf.mxu0
      %v539 = vadd.f32 0.0, %v538
      %v540 = vpop.f32.mrf.mxu0
      %541 = vmatprep.mubr.bf16.mxu0 0
      %542 = vmatmul.mubr.bf16.gmra.mxu0 %v404
      %v543 = vpop.f32.mrf.mxu0
      %v544 = vadd.f32 0.0, %v543
      %v545 = vpop.f32.mrf.mxu0
      %v546 = vpop.f32.mrf.mxu0
      %v547 = vadd.f32 0.0, %v546
      %v548 = vpop.f32.mrf.mxu0
      %549 = vmatprep.mubr.bf16.mxu0 0
      %550 = vmatmul.mubr.bf16.gmra.mxu0 %v407
      %v551 = vpop.f32.mrf.mxu0
      %v552 = vadd.f32 0.0, %v551
      %v553 = vpop.f32.mrf.mxu0
      %v554 = vpop.f32.mrf.mxu0
      %v555 = vadd.f32 0.0, %v554
      %v556 = vpop.f32.mrf.mxu0
      %557 = vmatprep.mubr.bf16.mxu0 0
      %558 = vmatmul.mubr.bf16.gmra.mxu0 %v410
      %v559 = vpop.f32.mrf.mxu0
      %v560 = vadd.f32 0.0, %v559
      %v561 = vpop.f32.mrf.mxu0
      %v562 = vpop.f32.mrf.mxu0
      %v563 = vadd.f32 0.0, %v562
      %v564 = vpop.f32.mrf.mxu0
      %565 = vmatprep.mubr.bf16.mxu0 0
      %566 = vmatmul.mubr.bf16.gmra.mxu0 %v413
      %v567 = vpop.f32.mrf.mxu0
      %v568 = vadd.f32 0.0, %v567
      %v569 = vpop.f32.mrf.mxu0
      %v570 = vpop.f32.mrf.mxu0
      %v571 = vadd.f32 0.0, %v570
      %v572 = vpop.f32.mrf.mxu0
      %573 = vmatprep.mubr.bf16.mxu0 0
      %574 = vmatmul.mubr.bf16.gmra.mxu0 %v416
      %v575 = vpop.f32.mrf.mxu0
      %v576 = vadd.f32 0.0, %v575
      %v577 = vpop.f32.mrf.mxu0
      %v578 = vpop.f32.mrf.mxu0
      %v579 = vadd.f32 0.0, %v578
      %v580 = vpop.f32.mrf.mxu0
      %581 = vmatprep.mubr.bf16.mxu0 0
      %582 = vmatmul.mubr.bf16.gmra.mxu0 %v419
      %v583 = vpop.f32.mrf.mxu0
      %v584 = vadd.f32 0.0, %v583
      %v585 = vpop.f32.mrf.mxu0
      %v586 = vpop.f32.mrf.mxu0
      %v587 = vadd.f32 0.0, %v586
      %v588 = vpop.f32.mrf.mxu0
      %589 = vmatprep.mubr.bf16.mxu0 0
      %590 = vmatmul.mubr.bf16.gmra.mxu0 %v422
      %v591 = vpop.f32.mrf.mxu0
      %v592 = vadd.f32 0.0, %v591
      %v593 = vpop.f32.mrf.mxu0
      %v594 = vpop.f32.mrf.mxu0
      %v595 = vadd.f32 0.0, %v594
      %v596 = vpop.f32.mrf.mxu0
      %597 = vmatprep.mubr.bf16.mxu0 0
      %598 = vmatmul.mubr.bf16.gmra.mxu0 %v425
      %v599 = vpop.f32.mrf.mxu0
      %v600 = vadd.f32 0.0, %v599
      %v601 = vpop.f32.mrf.mxu0
      %v602 = vpop.f32.mrf.mxu0
      %v603 = vadd.f32 0.0, %v602
      %v604 = vpop.f32.mrf.mxu0
      %605 = vmatprep.mubr.bf16.mxu0 0
      %606 = vmatmul.mubr.bf16.gmra.mxu0 %v428
      %v607 = vpop.f32.mrf.mxu0
      %v608 = vadd.f32 0.0, %v607
      %v609 = vpop.f32.mrf.mxu0
      %v610 = vpop.f32.mrf.mxu0
      %v611 = vadd.f32 0.0, %v610
      %v612 = vpop.f32.mrf.mxu0
      %613 = vmatprep.mubr.bf16.mxu0 0
      %614 = vmatmul.mubr.bf16.gmra.mxu0 %v431
      %v615 = vpop.f32.mrf.mxu0
      %v616 = vadd.f32 0.0, %v615
      %v617 = vpop.f32.mrf.mxu0
      %v618 = vpop.f32.mrf.mxu0
      %v619 = vadd.f32 0.0, %v618
      %v620 = vpop.f32.mrf.mxu0
      %621 = vmatprep.mubr.bf16.mxu0 0
      %622 = vmatmul.mubr.bf16.gmra.mxu0 %v434
      %v623 = vpop.f32.mrf.mxu0
      %v624 = vadd.f32 0.0, %v623
      %v625 = vpop.f32.mrf.mxu0
      %v626 = vpop.f32.mrf.mxu0
      %v627 = vadd.f32 0.0, %v626
      %v628 = vpop.f32.mrf.mxu0
      %629 = vmatprep.mubr.bf16.mxu0 0
      %630 = vmatmul.mubr.bf16.gmra.mxu0 %v437
      %v631 = vpop.f32.mrf.mxu0
      %v632 = vadd.f32 0.0, %v631
      %v633 = vpop.f32.mrf.mxu0
      %v634 = vpop.f32.mrf.mxu0
      %v635 = vadd.f32 0.0, %v634
      %v636 = vpop.f32.mrf.mxu0
      %637 = vmatprep.mubr.bf16.mxu0 0
      %638 = vmatmul.mubr.bf16.gmra.mxu0 %v440
      %v639 = vpop.f32.mrf.mxu0
      %v640 = vadd.f32 0.0, %v639
      %v641 = vpop.f32.mrf.mxu0
      %v642 = vpop.f32.mrf.mxu0
      %v643 = vadd.f32 0.0, %v642
      %v644 = vpop.f32.mrf.mxu0
      %645 = vmatprep.mubr.bf16.mxu0 0
      %646 = vmatmul.mubr.bf16.gmra.mxu0 %v443
      %v647 = vpop.f32.mrf.mxu0
      %v648 = vadd.f32 0.0, %v647
      %v649 = vpop.f32.mrf.mxu0
      %v650 = vpop.f32.mrf.mxu0
      %v651 = vadd.f32 0.0, %v650
      %v652 = vpop.f32.mrf.mxu0
      %653 = vmatprep.mubr.bf16.mxu0 0
      %654 = vmatmul.mubr.bf16.gmra.mxu0 %v446
      %v655 = vpop.f32.mrf.mxu0
      %v656 = vadd.f32 0.0, %v655
      %v657 = vpop.f32.mrf.mxu0
      %v658 = vpop.f32.mrf.mxu0
      %v659 = vadd.f32 0.0, %v658
      %v660 = vpop.f32.mrf.mxu0
      %661 = vmatprep.mubr.bf16.mxu0 0
      %662 = vmatmul.mubr.bf16.gmra.mxu0 %v449
      %v663 = vpop.f32.mrf.mxu0
      %v664 = vadd.f32 0.0, %v663
      %v665 = vpop.f32.mrf.mxu0
      %v666 = vpop.f32.mrf.mxu0
      %v667 = vadd.f32 0.0, %v666
      %v668 = vpop.f32.mrf.mxu0
      %669 = vmatprep.mubr.bf16.mxu0 0
      %670 = vmatmul.mubr.bf16.gmra.mxu0 %v452
      %v671 = vpop.f32.mrf.mxu0
      %v672 = vadd.f32 0.0, %v671
      %v673 = vpop.f32.mrf.mxu0
      %v674 = vpop.f32.mrf.mxu0
      %v675 = vadd.f32 0.0, %v674
      %v676 = vpop.f32.mrf.mxu0
      %677 = vmatprep.mubr.bf16.mxu0 0
      %678 = vmatmul.mubr.bf16.gmra.mxu0 %v455
      %v679 = vpop.f32.mrf.mxu0
      %v680 = vadd.f32 0.0, %v679
      %v681 = vpop.f32.mrf.mxu0
      %v682 = vpop.f32.mrf.mxu0
      %v683 = vadd.f32 0.0, %v682
      %v684 = vpop.f32.mrf.mxu0
      %685 = vmatprep.mubr.bf16.mxu0 0
      %686 = vmatmul.mubr.bf16.gmra.mxu0 %v458
      %v687 = vpop.f32.mrf.mxu0
      %v688 = vadd.f32 0.0, %v687
      %v689 = vpop.f32.mrf.mxu0
      %v690 = vpop.f32.mrf.mxu0
      %v691 = vadd.f32 0.0, %v690
      %v692 = vpop.f32.mrf.mxu0
      %693 = vmatprep.mubr.bf16.mxu0 0
      %694 = vmatmul.mubr.bf16.gmra.mxu0 %v461
      %v695 = vpop.f32.mrf.mxu0
      %v696 = vadd.f32 0.0, %v695
      %v697 = vpop.f32.mrf.mxu0
      %v698 = vpop.f32.mrf.mxu0
      %v699 = vadd.f32 0.0, %v698
      %v700 = vpop.f32.mrf.mxu0
      %701 = vmatprep.mubr.bf16.mxu0 0
      %702 = vmatmul.mubr.bf16.gmra.mxu0 %v464
      %v703 = vpop.f32.mrf.mxu0
      %v704 = vadd.f32 0.0, %v703
      %v705 = vpop.f32.mrf.mxu0
      %v706 = vpop.f32.mrf.mxu0
      %v707 = vadd.f32 0.0, %v706
      %v708 = vpop.f32.mrf.mxu0
      %709 = vmatprep.mubr.bf16.mxu0 0
      %710 = vmatmul.mubr.bf16.gmra.mxu0 %v467
      %v711 = vpop.f32.mrf.mxu0
      %v712 = vadd.f32 0.0, %v711
      %v713 = vpop.f32.mrf.mxu0
      %v714 = vpop.f32.mrf.mxu0
      %v715 = vadd.f32 0.0, %v714
      %v716 = vpop.f32.mrf.mxu0
      %717 = vmatprep.mubr.bf16.mxu0 0
      %718 = vmatmul.mubr.bf16.gmra.mxu0 %v470
      %v719 = vpop.f32.mrf.mxu0
      %v720 = vadd.f32 0.0, %v719
      %v721 = vpop.f32.mrf.mxu0
      %v722 = vpop.f32.mrf.mxu0
      %v723 = vadd.f32 0.0, %v722
      %v724 = vpop.f32.mrf.mxu0
      %725 = vmatprep.mubr.bf16.mxu0 0
      %726 = vmatmul.mubr.bf16.gmra.mxu0 %v473
      %v727 = vpop.f32.mrf.mxu0
      %v728 = vadd.f32 0.0, %v727
      %v729 = vpop.f32.mrf.mxu0
      %v730 = vpop.f32.mrf.mxu0
      %v731 = vadd.f32 0.0, %v730
      %v732 = vpop.f32.mrf.mxu0
      %733 = vmatprep.mubr.bf16.mxu0 0
      %734 = vmatmul.mubr.bf16.gmra.mxu0 %v476
      %v735 = vpop.f32.mrf.mxu0
      %v736 = vadd.f32 0.0, %v735
      %v737 = vpop.f32.mrf.mxu0
      %v738 = vpop.f32.mrf.mxu0
      %v739 = vadd.f32 0.0, %v738
      %v740 = vpop.f32.mrf.mxu0
      %741 = vmatprep.mubr.bf16.mxu0 0
      %742 = vmatmul.mubr.bf16.gmra.mxu0 %v479
      %v743 = vpop.f32.mrf.mxu0
      %v744 = vadd.f32 0.0, %v743
      %v745 = vpop.f32.mrf.mxu0
      %v746 = vpop.f32.mrf.mxu0
      %v747 = vadd.f32 0.0, %v746
      %v748 = vpop.f32.mrf.mxu0
      %749 = vmatprep.mubr.bf16.mxu0 0
      %750 = vmatmul.mubr.bf16.gmra.mxu0 %v482
      %v751 = vpop.f32.mrf.mxu0
      %v752 = vadd.f32 0.0, %v751
      %v753 = vpop.f32.mrf.mxu0
      %v754 = vpop.f32.mrf.mxu0
      %v755 = vadd.f32 0.0, %v754
      %v756 = vpop.f32.mrf.mxu0
      %757 = vmatprep.mubr.bf16.mxu0 0
      %758 = vmatmul.mubr.bf16.gmra.mxu0 %v485
      %v759 = vpop.f32.mrf.mxu0
      %v760 = vadd.f32 0.0, %v759
      %v761 = vpop.f32.mrf.mxu0
      %v762 = vpop.f32.mrf.mxu0
      %v763 = vadd.f32 0.0, %v762
      %v764 = vpop.f32.mrf.mxu0
      %765 = vmatprep.mubr.bf16.mxu0 0
      %766 = vmatmul.mubr.bf16.gmra.mxu0 %v488
      %v767 = vpop.f32.mrf.mxu0
      %v768 = vadd.f32 0.0, %v767
      %v769 = vpop.f32.mrf.mxu0
      %v770 = vpop.f32.mrf.mxu0
      %v771 = vadd.f32 0.0, %v770
      %v772 = vpop.f32.mrf.mxu0
      %773 = vmatprep.mubr.bf16.mxu0 0
      %774 = vmatmul.mubr.bf16.gmra.mxu0 %v491
      %v775 = vpop.f32.mrf.mxu0
      %v776 = vadd.f32 0.0, %v775
      %v777 = vpop.f32.mrf.mxu0
      %v778 = vpop.f32.mrf.mxu0
      %v779 = vadd.f32 0.0, %v778
      %v780 = vpop.f32.mrf.mxu0
      %781 = vdwg.mxu0
      %v782 = vmul.f32 %v528, 0.2
      %v783 = vmul.f32 %v531, 0.2
      %v784 = vmul.f32 %v536, 0.2
      %v785 = vmul.f32 %v539, 0.2
      %v786 = vmul.f32 %v544, 0.2
      %v787 = vmul.f32 %v547, 0.2
      %v788 = vmul.f32 %v552, 0.2
      %v789 = vmul.f32 %v555, 0.2
      %v790 = vmul.f32 %v560, 0.2
      %v791 = vmul.f32 %v563, 0.2
      %v792 = vmul.f32 %v568, 0.2
      %v793 = vmul.f32 %v571, 0.2
      %v794 = vmul.f32 %v576, 0.2
      %v795 = vmul.f32 %v579, 0.2
      %v796 = vmul.f32 %v584, 0.2
      %v797 = vmul.f32 %v587, 0.2
      %v798 = vmul.f32 %v592, 0.2
      %v799 = vmul.f32 %v595, 0.2
      %v800 = vmul.f32 %v600, 0.2
      %v801 = vmul.f32 %v603, 0.2
      %v802 = vmul.f32 %v608, 0.2
      %v803 = vmul.f32 %v611, 0.2
      %v804 = vmul.f32 %v616, 0.2
      %v805 = vmul.f32 %v619, 0.2
      %v806 = vmul.f32 %v624, 0.2
      %v807 = vmul.f32 %v627, 0.2
      %v808 = vmul.f32 %v632, 0.2
      %v809 = vmul.f32 %v635, 0.2
      %v810 = vmul.f32 %v640, 0.2
      %v811 = vmul.f32 %v643, 0.2
      %v812 = vmul.f32 %v648, 0.2
      %v813 = vmul.f32 %v651, 0.2
      %v814 = vmul.f32 %v656, 0.2
      %v815 = vmul.f32 %v659, 0.2
      %v816 = vmul.f32 %v664, 0.2
      %v817 = vmul.f32 %v667, 0.2
      %v818 = vmul.f32 %v672, 0.2
      %v819 = vmul.f32 %v675, 0.2
      %v820 = vmul.f32 %v680, 0.2
      %v821 = vmul.f32 %v683, 0.2
      %v822 = vmul.f32 %v688, 0.2
      %v823 = vmul.f32 %v691, 0.2
      %v824 = vmul.f32 %v696, 0.2
      %v825 = vmul.f32 %v699, 0.2
      %v826 = vmul.f32 %v704, 0.2
      %v827 = vmul.f32 %v707, 0.2
      %v828 = vmul.f32 %v712, 0.2
      %v829 = vmul.f32 %v715, 0.2
      %v830 = vmul.f32 %v720, 0.2
      %v831 = vmul.f32 %v723, 0.2
      %v832 = vmul.f32 %v728, 0.2
      %v833 = vmul.f32 %v731, 0.2
      %v834 = vmul.f32 %v736, 0.2
      %v835 = vmul.f32 %v739, 0.2
      %v836 = vmul.f32 %v744, 0.2
      %v837 = vmul.f32 %v747, 0.2
      %v838 = vmul.f32 %v752, 0.2
      %v839 = vmul.f32 %v755, 0.2
      %v840 = vmul.f32 %v760, 0.2
      %v841 = vmul.f32 %v763, 0.2
      %v842 = vmul.f32 %v768, 0.2
      %v843 = vmul.f32 %v771, 0.2
      %v844 = vmul.f32 %v776, 0.2
      %v845 = vmul.f32 %v779, 0.2
      %v846 = vmax.f32 %v528, %v782
      %v847 = vmax.f32 %v531, %v783
      %v848 = vmax.f32 %v536, %v784
      %v849 = vmax.f32 %v539, %v785
      %v850 = vmax.f32 %v544, %v786
      %v851 = vmax.f32 %v547, %v787
      %v852 = vmax.f32 %v552, %v788
      %v853 = vmax.f32 %v555, %v789
      %v854 = vmax.f32 %v560, %v790
      %v855 = vmax.f32 %v563, %v791
      %v856 = vmax.f32 %v568, %v792
      %v857 = vmax.f32 %v571, %v793
      %v858 = vmax.f32 %v576, %v794
      %v859 = vmax.f32 %v579, %v795
      %v860 = vmax.f32 %v584, %v796
      %v861 = vmax.f32 %v587, %v797
      %v862 = vmax.f32 %v592, %v798
      %v863 = vmax.f32 %v595, %v799
      %v864 = vmax.f32 %v600, %v800
      %v865 = vmax.f32 %v603, %v801
      %v866 = vmax.f32 %v608, %v802
      %v867 = vmax.f32 %v611, %v803
      %v868 = vmax.f32 %v616, %v804
      %v869 = vmax.f32 %v619, %v805
      %v870 = vmax.f32 %v624, %v806
      %v871 = vmax.f32 %v627, %v807
      %v872 = vmax.f32 %v632, %v808
      %v873 = vmax.f32 %v635, %v809
      %v874 = vmax.f32 %v640, %v810
      %v875 = vmax.f32 %v643, %v811
      %v876 = vmax.f32 %v648, %v812
      %v877 = vmax.f32 %v651, %v813
      %v878 = vmax.f32 %v656, %v814
      %v879 = vmax.f32 %v659, %v815
      %v880 = vmax.f32 %v664, %v816
      %v881 = vmax.f32 %v667, %v817
      %v882 = vmax.f32 %v672, %v818
      %v883 = vmax.f32 %v675, %v819
      %v884 = vmax.f32 %v680, %v820
      %v885 = vmax.f32 %v683, %v821
      %v886 = vmax.f32 %v688, %v822
      %v887 = vmax.f32 %v691, %v823
      %v888 = vmax.f32 %v696, %v824
      %v889 = vmax.f32 %v699, %v825
      %v890 = vmax.f32 %v704, %v826
      %v891 = vmax.f32 %v707, %v827
      %v892 = vmax.f32 %v712, %v828
      %v893 = vmax.f32 %v715, %v829
      %v894 = vmax.f32 %v720, %v830
      %v895 = vmax.f32 %v723, %v831
      %v896 = vmax.f32 %v728, %v832
      %v897 = vmax.f32 %v731, %v833
      %v898 = vmax.f32 %v736, %v834
      %v899 = vmax.f32 %v739, %v835
      %v900 = vmax.f32 %v744, %v836
      %v901 = vmax.f32 %v747, %v837
      %v902 = vmax.f32 %v752, %v838
      %v903 = vmax.f32 %v755, %v839
      %v904 = vmax.f32 %v760, %v840
      %v905 = vmax.f32 %v763, %v841
      %v906 = vmax.f32 %v768, %v842
      %v907 = vmax.f32 %v771, %v843
      %v908 = vmax.f32 %v776, %v844
      %v909 = vmax.f32 %v779, %v845
      %v910 = vpack.c.bf16 %v847, %v846
      %v911 = vpack.c.bf16 %v849, %v848
      %v912 = vpack.c.bf16 %v851, %v850
      %v913 = vpack.c.bf16 %v853, %v852
      %v914 = vpack.c.bf16 %v855, %v854
      %v915 = vpack.c.bf16 %v857, %v856
      %v916 = vpack.c.bf16 %v859, %v858
      %v917 = vpack.c.bf16 %v861, %v860
      %v918 = vpack.c.bf16 %v863, %v862
      %v919 = vpack.c.bf16 %v865, %v864
      %v920 = vpack.c.bf16 %v867, %v866
      %v921 = vpack.c.bf16 %v869, %v868
      %v922 = vpack.c.bf16 %v871, %v870
      %v923 = vpack.c.bf16 %v873, %v872
      %v924 = vpack.c.bf16 %v875, %v874
      %v925 = vpack.c.bf16 %v877, %v876
      %v926 = vpack.c.bf16 %v879, %v878
      %v927 = vpack.c.bf16 %v881, %v880
      %v928 = vpack.c.bf16 %v883, %v882
      %v929 = vpack.c.bf16 %v885, %v884
      %v930 = vpack.c.bf16 %v887, %v886
      %v931 = vpack.c.bf16 %v889, %v888
      %v932 = vpack.c.bf16 %v891, %v890
      %v933 = vpack.c.bf16 %v893, %v892
      %v934 = vpack.c.bf16 %v895, %v894
      %v935 = vpack.c.bf16 %v897, %v896
      %v936 = vpack.c.bf16 %v899, %v898
      %v937 = vpack.c.bf16 %v901, %v900
      %v938 = vpack.c.bf16 %v903, %v902
      %v939 = vpack.c.bf16 %v905, %v904
      %v940 = vpack.c.bf16 %v907, %v906
      %v941 = vpack.c.bf16 %v909, %v908
      %v974 = vunpack.c.l.b16 %v910
      %v975 = vunpack.c.h.b16 %v910
      %v976 = vunpack.c.l.b16 %v911
      %v977 = vunpack.c.h.b16 %v911
      %v978 = vunpack.c.l.b16 %v912
      %v979 = vunpack.c.h.b16 %v912
      %v980 = vunpack.c.l.b16 %v913
      %v981 = vunpack.c.h.b16 %v913
      %v982 = vunpack.c.l.b16 %v914
      %v983 = vunpack.c.h.b16 %v914
      %v984 = vunpack.c.l.b16 %v915
      %v985 = vunpack.c.h.b16 %v915
      %v986 = vunpack.c.l.b16 %v916
      %v987 = vunpack.c.h.b16 %v916
      %v988 = vunpack.c.l.b16 %v917
      %v989 = vunpack.c.h.b16 %v917
      %v990 = vunpack.c.l.b16 %v918
      %v991 = vunpack.c.h.b16 %v918
      %v992 = vunpack.c.l.b16 %v919
      %v993 = vunpack.c.h.b16 %v919
      %v994 = vunpack.c.l.b16 %v920
      %v995 = vunpack.c.h.b16 %v920
      %v996 = vunpack.c.l.b16 %v921
      %v997 = vunpack.c.h.b16 %v921
      %v998 = vunpack.c.l.b16 %v922
      %v999 = vunpack.c.h.b16 %v922
      %v1000 = vunpack.c.l.b16 %v923
      %v1001 = vunpack.c.h.b16 %v923
      %v1002 = vunpack.c.l.b16 %v924
      %v1003 = vunpack.c.h.b16 %v924
      %v1004 = vunpack.c.l.b16 %v925
      %v1005 = vunpack.c.h.b16 %v925
      %v1006 = vunpack.c.l.b16 %v926
      %v1007 = vunpack.c.h.b16 %v926
      %v1008 = vunpack.c.l.b16 %v927
      %v1009 = vunpack.c.h.b16 %v927
      %v1010 = vunpack.c.l.b16 %v928
      %v1011 = vunpack.c.h.b16 %v928
      %v1012 = vunpack.c.l.b16 %v929
      %v1013 = vunpack.c.h.b16 %v929
      %v1014 = vunpack.c.l.b16 %v930
      %v1015 = vunpack.c.h.b16 %v930
      %v1016 = vunpack.c.l.b16 %v931
      %v1017 = vunpack.c.h.b16 %v931
      %v1018 = vunpack.c.l.b16 %v932
      %v1019 = vunpack.c.h.b16 %v932
      %v1020 = vunpack.c.l.b16 %v933
      %v1021 = vunpack.c.h.b16 %v933
      %v1022 = vunpack.c.l.b16 %v934
      %v1023 = vunpack.c.h.b16 %v934
      %v1024 = vunpack.c.l.b16 %v935
      %v1025 = vunpack.c.h.b16 %v935
      %v1026 = vunpack.c.l.b16 %v936
      %v1027 = vunpack.c.h.b16 %v936
      %v1028 = vunpack.c.l.b16 %v937
      %v1029 = vunpack.c.h.b16 %v937
      %v1030 = vunpack.c.l.b16 %v938
      %v1031 = vunpack.c.h.b16 %v938
      %v1032 = vunpack.c.l.b16 %v939
      %v1033 = vunpack.c.h.b16 %v939
      %v1034 = vunpack.c.l.b16 %v940
      %v1035 = vunpack.c.h.b16 %v940
      %v1036 = vunpack.c.l.b16 %v941
      %v1037 = vunpack.c.h.b16 %v941
      %v1038 = vpack.c.b16 %v974, %v974
      %v1039 = vpack.c.b16 %v975, %v975
      %v1040 = vpack.c.b16 %v976, %v976
      %v1041 = vpack.c.b16 %v977, %v977
      %v1042 = vpack.c.b16 %v978, %v978
      %v1043 = vpack.c.b16 %v979, %v979
      %v1044 = vpack.c.b16 %v980, %v980
      %v1045 = vpack.c.b16 %v981, %v981
      %v1046 = vpack.c.b16 %v982, %v982
      %v1047 = vpack.c.b16 %v983, %v983
      %v1048 = vpack.c.b16 %v984, %v984
      %v1049 = vpack.c.b16 %v985, %v985
      %v1050 = vpack.c.b16 %v986, %v986
      %v1051 = vpack.c.b16 %v987, %v987
      %v1052 = vpack.c.b16 %v988, %v988
      %v1053 = vpack.c.b16 %v989, %v989
      %v1054 = vpack.c.b16 %v990, %v990
      %v1055 = vpack.c.b16 %v991, %v991
      %v1056 = vpack.c.b16 %v992, %v992
      %v1057 = vpack.c.b16 %v993, %v993
      %v1058 = vpack.c.b16 %v994, %v994
      %v1059 = vpack.c.b16 %v995, %v995
      %v1060 = vpack.c.b16 %v996, %v996
      %v1061 = vpack.c.b16 %v997, %v997
      %v1062 = vpack.c.b16 %v998, %v998
      %v1063 = vpack.c.b16 %v999, %v999
      %v1064 = vpack.c.b16 %v1000, %v1000
      %v1065 = vpack.c.b16 %v1001, %v1001
      %v1066 = vpack.c.b16 %v1002, %v1002
      %v1067 = vpack.c.b16 %v1003, %v1003
      %v1068 = vpack.c.b16 %v1004, %v1004
      %v1069 = vpack.c.b16 %v1005, %v1005
      %v1070 = vpack.c.b16 %v1006, %v1006
      %v1071 = vpack.c.b16 %v1007, %v1007
      %v1072 = vpack.c.b16 %v1008, %v1008
      %v1073 = vpack.c.b16 %v1009, %v1009
      %v1074 = vpack.c.b16 %v1010, %v1010
      %v1075 = vpack.c.b16 %v1011, %v1011
      %v1076 = vpack.c.b16 %v1012, %v1012
      %v1077 = vpack.c.b16 %v1013, %v1013
      %v1078 = vpack.c.b16 %v1014, %v1014
      %v1079 = vpack.c.b16 %v1015, %v1015
      %v1080 = vpack.c.b16 %v1016, %v1016
      %v1081 = vpack.c.b16 %v1017, %v1017
      %v1082 = vpack.c.b16 %v1018, %v1018
      %v1083 = vpack.c.b16 %v1019, %v1019
      %v1084 = vpack.c.b16 %v1020, %v1020
      %v1085 = vpack.c.b16 %v1021, %v1021
      %v1086 = vpack.c.b16 %v1022, %v1022
      %v1087 = vpack.c.b16 %v1023, %v1023
      %v1088 = vpack.c.b16 %v1024, %v1024
      %v1089 = vpack.c.b16 %v1025, %v1025
      %v1090 = vpack.c.b16 %v1026, %v1026
      %v1091 = vpack.c.b16 %v1027, %v1027
      %v1092 = vpack.c.b16 %v1028, %v1028
      %v1093 = vpack.c.b16 %v1029, %v1029
      %v1094 = vpack.c.b16 %v1030, %v1030
      %v1095 = vpack.c.b16 %v1031, %v1031
      %v1096 = vpack.c.b16 %v1032, %v1032
      %v1097 = vpack.c.b16 %v1033, %v1033
      %v1098 = vpack.c.b16 %v1034, %v1034
      %v1099 = vpack.c.b16 %v1035, %v1035
      %v1100 = vpack.c.b16 %v1036, %v1036
      %v1101 = vpack.c.b16 %v1037, %v1037
      %1166 = vst [vmem:[%s145] sm:$0xf] %v1038
      %1167 = vst [vmem:[%s145 + $0x4] sm:$0xf] %v1039
      %1168 = vst [vmem:[%s145 + $0x8] sm:$0xf] %v1040
      %1169 = vst [vmem:[%s145 + $0xc] sm:$0xf] %v1041
      %1170 = vst [vmem:[%s145 + $0x10] sm:$0xf] %v1042
      %1171 = vst [vmem:[%s145 + $0x14] sm:$0xf] %v1043
      %1172 = vst [vmem:[%s145 + $0x18] sm:$0xf] %v1044
      %1173 = vst [vmem:[%s145 + $0x1c] sm:$0xf] %v1045
      %1174 = vst [vmem:[%s145 + $0x20] sm:$0xf] %v1046
      %1175 = vst [vmem:[%s145 + $0x24] sm:$0xf] %v1047
      %1176 = vst [vmem:[%s145 + $0x28] sm:$0xf] %v1048
      %1177 = vst [vmem:[%s145 + $0x2c] sm:$0xf] %v1049
      %1178 = vst [vmem:[%s145 + $0x30] sm:$0xf] %v1050
      %1179 = vst [vmem:[%s145 + $0x34] sm:$0xf] %v1051
      %1180 = vst [vmem:[%s145 + $0x38] sm:$0xf] %v1052
      %1181 = vst [vmem:[%s145 + $0x3c] sm:$0xf] %v1053
      %1182 = vst [vmem:[%s145 + $0x40] sm:$0xf] %v1054
      %1183 = vst [vmem:[%s145 + $0x44] sm:$0xf] %v1055
      %1184 = vst [vmem:[%s145 + $0x48] sm:$0xf] %v1056
      %1185 = vst [vmem:[%s145 + $0x4c] sm:$0xf] %v1057
      %1186 = vst [vmem:[%s145 + $0x50] sm:$0xf] %v1058
      %1187 = vst [vmem:[%s145 + $0x54] sm:$0xf] %v1059
      %1188 = vst [vmem:[%s145 + $0x58] sm:$0xf] %v1060
      %1189 = vst [vmem:[%s145 + $0x5c] sm:$0xf] %v1061
      %1190 = vst [vmem:[%s145 + $0x60] sm:$0xf] %v1062
      %1191 = vst [vmem:[%s145 + $0x64] sm:$0xf] %v1063
      %1192 = vst [vmem:[%s145 + $0x68] sm:$0xf] %v1064
      %1193 = vst [vmem:[%s145 + $0x6c] sm:$0xf] %v1065
      %1194 = vst [vmem:[%s145 + $0x70] sm:$0xf] %v1066
      %1195 = vst [vmem:[%s145 + $0x74] sm:$0xf] %v1067
      %1196 = vst [vmem:[%s145 + $0x78] sm:$0xf] %v1068
      %1197 = vst [vmem:[%s145 + $0x7c] sm:$0xf] %v1069
      %1198 = vst [vmem:[%s145 + $0x80] sm:$0xf] %v1070
      %1199 = vst [vmem:[%s145 + $0x84] sm:$0xf] %v1071
      %1200 = vst [vmem:[%s145 + $0x88] sm:$0xf] %v1072
      %1201 = vst [vmem:[%s145 + $0x8c] sm:$0xf] %v1073
      %1202 = vst [vmem:[%s145 + $0x90] sm:$0xf] %v1074
      %1203 = vst [vmem:[%s145 + $0x94] sm:$0xf] %v1075
      %1204 = vst [vmem:[%s145 + $0x98] sm:$0xf] %v1076
      %1205 = vst [vmem:[%s145 + $0x9c] sm:$0xf] %v1077
      %1206 = vst [vmem:[%s145 + $0xa0] sm:$0xf] %v1078
      %1207 = vst [vmem:[%s145 + $0xa4] sm:$0xf] %v1079
      %1208 = vst [vmem:[%s145 + $0xa8] sm:$0xf] %v1080
      %1209 = vst [vmem:[%s145 + $0xac] sm:$0xf] %v1081
      %1210 = vst [vmem:[%s145 + $0xb0] sm:$0xf] %v1082
      %1211 = vst [vmem:[%s145 + $0xb4] sm:$0xf] %v1083
      %1212 = vst [vmem:[%s145 + $0xb8] sm:$0xf] %v1084
      %1213 = vst [vmem:[%s145 + $0xbc] sm:$0xf] %v1085
      %1214 = vst [vmem:[%s145 + $0xc0] sm:$0xf] %v1086
      %1215 = vst [vmem:[%s145 + $0xc4] sm:$0xf] %v1087
      %1216 = vst [vmem:[%s145 + $0xc8] sm:$0xf] %v1088
      %1217 = vst [vmem:[%s145 + $0xcc] sm:$0xf] %v1089
      %1218 = vst [vmem:[%s145 + $0xd0] sm:$0xf] %v1090
      %1219 = vst [vmem:[%s145 + $0xd4] sm:$0xf] %v1091
      %1220 = vst [vmem:[%s145 + $0xd8] sm:$0xf] %v1092
      %1221 = vst [vmem:[%s145 + $0xdc] sm:$0xf] %v1093
      %1222 = vst [vmem:[%s145 + $0xe0] sm:$0xf] %v1094
      %1223 = vst [vmem:[%s145 + $0xe4] sm:$0xf] %v1095
      %1224 = vst [vmem:[%s145 + $0xe8] sm:$0xf] %v1096
      %1225 = vst [vmem:[%s145 + $0xec] sm:$0xf] %v1097
      %1226 = vst [vmem:[%s145 + $0xf0] sm:$0xf] %v1098
      %1227 = vst [vmem:[%s145 + $0xf4] sm:$0xf] %v1099
      %1228 = vst [vmem:[%s145 + $0xf8] sm:$0xf] %v1100
      %1229 = vst [vmem:[%s145 + $0xfc] sm:$0xf] %v1101
      %s1230 = smul.u32 64, %s13
      %p1231 = scmp.lt.s32.totalorder %s1230, 255
      %s1232 = scalar_select %p1231, %s1230, 255
      %s1233 = smul.addr %s1232, 4
      %s1234 = scalar_lea.vmem %s2, %s1233
      // Predicated region
      $region29: #{discriminator_forward.4} parent=27 // pred_check
        %p1235 = pneg %p78
      $region30: #{discriminator_forward.4} parent=27 // pred_check_branch
        %1237 = sbr.rel (%p1235) target = $region32
      $region31: #{discriminator_forward.4} parent=27 // pred_region
        %s1238 = smul.u32 64, %s13
      $region32: #{discriminator_forward.4} parent=27 // pred_fallthru
        _
    $region28: #{discriminator_forward.4} parent=5 // pred_fallthru
      _
    %p1239 = scmp.le.s32.totalorder 2, %s8
    // Predicated region
    $region33: #{discriminator_forward.4} parent=5 // pred_check
      %p1240 = pneg %p1239
    $region34: #{discriminator_forward.4} parent=5 // pred_check_branch
      %1242 = sbr.rel (%p1240) target = $region36
    $region35: #{discriminator_forward.4} parent=5 // pred_region
      %s1243 = ssub.s32 %s8, 2
      // Predicated region
      $region37: #{discriminator_forward.4} parent=35 // pred_check
        %p1244 = pneg %p84
      $region38: #{discriminator_forward.4} parent=35 // pred_check_branch
        %1246 = sbr.rel (%p1244) target = $region40
      $region39: #{discriminator_forward.4} parent=35 // pred_region
        %s1247 = smul.u32 64, %s14
        %p1248 = scmp.lt.s32.totalorder %s1247, 255
        %s1249 = scalar_select %p1248, %s1247, 255
        %s1250 = smul.addr %s1249, 4
        %s1251 = scalar_lea.vmem %s2, %s1250
      $region40: #{discriminator_forward.4} parent=35 // pred_fallthru
        _
    $region36: #{discriminator_forward.4} parent=5 // pred_fallthru
      _
  $region6: #{discriminator_forward.4} parent=0 // loop_footer
    %s12 = sadd.s32 1, %s8
  $region7: #{discriminator_forward.4} parent=0 // loop_footer_branch
    %7 = sbr.rel target = $region3
  $region8: #{discriminator_forward.4} parent=0 // loop_exit
    _

// kernel: discriminator_forward.5
$region0: #{discriminator_forward.5}
  #allocation0 [shape = 'u32[]', space=smem, size = 0x4, offset = 0x4, fixed_abs, tag = 'smem constant byte address 0x4 - core index']
  #allocation1 [shape = 'u32[144,128]{1,0:T(1,128)}', space=vmem, size = 0x12000, scoped, tag = 'internal scratch']
  %s0 = inlined_call_operand.vmem [shape: bf16[512,256], index: 0, kind: input, shape index: {}]
  %s1 = inlined_call_operand.vmem [shape: bf16[256,128], index: 1, kind: input, shape index: {}]
  %s2 = inlined_call_operand.vmem [shape: bf16[512,128], index: 2, kind: output, shape index: {0}]
  %s3 = inlined_call_operand.vmem [shape: f32[2,8,128], index: 3, kind: output, shape index: {1}]
  %4 = xla_tuple %s2, %s3
  %s5 = sld [smem:[#allocation0]]
  $region49: #{discriminator_forward.5} parent=0
    _
  %s7 = ssub.s32 1, %s5
  %s8 = scalar_select 0, %s7, %s5
  loop: start=0, step=1, limit=4
  $region2: #{discriminator_forward.5} parent=0 // loop_pre_header
    _
  $region3: #{discriminator_forward.5} parent=0 // loop_header
    %s10 = sphi 0, %s14
    %p11 = scmp.ge.s32.totalorder %s10, 4
    %s20 = sphi 0, %s22
    %s23 = sphi 0, %s20
    %s24 = sphi 0, %s23
    %s40 = sphi 0, %s24
    %s44 = sphi 0, %s44
    %s46 = sphi 0, %s44
    %s47 = sphi 0, %s46
    %s61 = sphi 0, %s47
    %s67 = sphi 0, %s69
    %s70 = sphi 0, %s67
    %s71 = sphi 0, %s70
    %s87 = sphi 0, %s71
    %s93 = sphi 0, %s95
    %s96 = sphi 0, %s93
    %s97 = sphi 0, %s96
    %s113 = sphi 0, %s97
  $region4: #{discriminator_forward.5} parent=0 // loop_header_branch
    %13 = sbr.rel (%p11) target = $region8
  $region5: #{discriminator_forward.5} parent=0 // loop_body
    %s15 = ssub.s32 %s10, 1
    %s16 = ssub.s32 %s10, 2
    %s17 = sadd.s32 %s10, 1
    %s18 = ssub.s32 %s10, %s17
    %p19 = scmp.eq.s32.totalorder %s18, 0
    %s21 = sadd.s32 %s20, 1
    %s22 = scalar_select %p19, %s20, %s21
    %p25 = pneg %p19
    %p26 = scmp.eq.s32.totalorder %s10, 1
    %p27 = por %p25, %p26
    %p28 = scmp.ne.s32.totalorder %s20, %s23
    %p29 = scmp.eq.s32.totalorder %s10, 0
    %p30 = por %p28, %p29
    %p31 = scmp.ne.s32.totalorder %s20, %s23
    %p32 = scmp.eq.s32.totalorder %s15, 1
    %p33 = por %p31, %p32
    %p34 = scmp.ne.s32.totalorder %s23, %s24
    %p35 = scmp.eq.s32.totalorder %s15, 0
    %p36 = por %p34, %p35
    %p37 = scmp.ne.s32.totalorder %s23, %s24
    %p38 = scmp.eq.s32.totalorder %s16, 1
    %p39 = por %p37, %p38
    %p41 = scmp.ne.s32.totalorder %s24, %s40
    %p42 = scmp.eq.s32.totalorder %s16, 0
    %p43 = por %p41, %p42
    %s45 = sadd.s32 %s44, 1
    %p48 = scmp.eq.s32.totalorder %s10, 1
    %p49 = scmp.ne.s32.totalorder %s44, %s46
    %p50 = scmp.eq.s32.totalorder %s10, 0
    %p51 = por %p49, %p50
    %p52 = scmp.ne.s32.totalorder %s44, %s46
    %p53 = scmp.eq.s32.totalorder %s15, 1
    %p54 = por %p52, %p53
    %p55 = scmp.ne.s32.totalorder %s46, %s47
    %p56 = scmp.eq.s32.totalorder %s15, 0
    %p57 = por %p55, %p56
    %p58 = scmp.ne.s32.totalorder %s46, %s47
    %p59 = scmp.eq.s32.totalorder %s16, 1
    %p60 = por %p58, %p59
    %p62 = scmp.ne.s32.totalorder %s47, %s61
    %p63 = scmp.eq.s32.totalorder %s16, 0
    %p64 = por %p62, %p63
    %s65 = ssub.s32 %s10, %s17
    %p66 = scmp.eq.s32.totalorder %s65, 0
    %s68 = sadd.s32 %s67, 1
    %s69 = scalar_select %p66, %s67, %s68
    %p72 = pneg %p66
    %p73 = scmp.eq.s32.totalorder %s10, 1
    %p74 = por %p72, %p73
    %p75 = scmp.ne.s32.totalorder %s67, %s70
    %p76 = scmp.eq.s32.totalorder %s10, 0
    %p77 = por %p75, %p76
    %p78 = scmp.ne.s32.totalorder %s67, %s70
    %p79 = scmp.eq.s32.totalorder %s15, 1
    %p80 = por %p78, %p79
    %p81 = scmp.ne.s32.totalorder %s70, %s71
    %p82 = scmp.eq.s32.totalorder %s15, 0
    %p83 = por %p81, %p82
    %p84 = scmp.ne.s32.totalorder %s70, %s71
    %p85 = scmp.eq.s32.totalorder %s16, 1
    %p86 = por %p84, %p85
    %p88 = scmp.ne.s32.totalorder %s71, %s87
    %p89 = scmp.eq.s32.totalorder %s16, 0
    %p90 = por %p88, %p89
    %s91 = ssub.s32 %s10, %s17
    %p92 = scmp.eq.s32.totalorder %s91, 0
    %s94 = sadd.s32 %s93, 1
    %s95 = scalar_select %p92, %s93, %s94
    %p98 = pneg %p92
    %p99 = scmp.eq.s32.totalorder %s10, 1
    %p100 = por %p98, %p99
    %p101 = scmp.ne.s32.totalorder %s93, %s96
    %p102 = scmp.eq.s32.totalorder %s10, 0
    %p103 = por %p101, %p102
    %p104 = scmp.ne.s32.totalorder %s93, %s96
    %p105 = scmp.eq.s32.totalorder %s15, 1
    %p106 = por %p104, %p105
    %p107 = scmp.ne.s32.totalorder %s96, %s97
    %p108 = scmp.eq.s32.totalorder %s15, 0
    %p109 = por %p107, %p108
    %p110 = scmp.ne.s32.totalorder %s96, %s97
    %p111 = scmp.eq.s32.totalorder %s16, 1
    %p112 = por %p110, %p111
    %p114 = scmp.ne.s32.totalorder %s97, %s113
    %p115 = scmp.eq.s32.totalorder %s16, 0
    %p116 = por %p114, %p115
    %p117 = scmp.le.s32.totalorder 1, %s10
    %p118 = scmp.lt.s32.totalorder %s10, 3
    %p119 = pnand %p117, %p118
    %p120 = pneg %p119
    // Predicated region
    $region9: #{discriminator_forward.5} parent=5 // pred_check
      _
    $region10: #{discriminator_forward.5} parent=5 // pred_check_branch
      %122 = sbr.rel (%p119) target = $region12
    $region11: #{discriminator_forward.5} parent=5 // pred_region
      %s123 = ssub.s32 %s10, 1
      // Predicated region
      $region13: #{discriminator_forward.5} parent=11 // pred_check
        %p124 = pneg %p57
      $region14: #{discriminator_forward.5} parent=11 // pred_check_branch
        %126 = sbr.rel (%p124) target = $region16
      $region15: #{discriminator_forward.5} parent=11 // pred_region
        _
      $region16: #{discriminator_forward.5} parent=11 // pred_fallthru
        _
    $region12: #{discriminator_forward.5} parent=5 // pred_fallthru
      _
    %p127 = scmp.lt.s32.totalorder %s10, 2
    // Predicated region
    $region17: #{discriminator_forward.5} parent=5 // pred_check
      %p128 = pneg %p127
    $region18: #{discriminator_forward.5} parent=5 // pred_check_branch
      %130 = sbr.rel (%p128) target = $region20
    $region19: #{discriminator_forward.5} parent=5 // pred_region
      // Predicated region
      $region21: #{discriminator_forward.5} parent=19 // pred_check
        %p131 = pneg %p30
      $region22: #{discriminator_forward.5} parent=19 // pred_check_branch
        %133 = sbr.rel (%p131) target = $region24
      $region23: #{discriminator_forward.5} parent=19 // pred_region
        %s134 = smul.u32 32, %s10
        %p135 = scmp.lt.s32.totalorder %s134, 63
        %s136 = scalar_select %p135, %s134, 63
        %s137 = smul.addr %s136, 2
        %s138 = smul.addr %s137, 4
        %s139 = scalar_lea.vmem %s0, %s138
        %s140 = smul.u32 32, %s10
      $region24: #{discriminator_forward.5} parent=19 // pred_fallthru
        _
    $region20: #{discriminator_forward.5} parent=5 // pred_fallthru
      _
    %p141 = scmp.le.s32.totalorder 1, %s10
    %p142 = scmp.lt.s32.totalorder %s10, 3
    %p143 = pnand %p141, %p142
    %p144 = pneg %p143
    // Predicated region
    $region25: #{discriminator_forward.5} parent=5 // pred_check
      _
    $region26: #{discriminator_forward.5} parent=5 // pred_check_branch
      %146 = sbr.rel (%p143) target = $region28
    $region27: #{discriminator_forward.5} parent=5 // pred_region
      %s147 = ssub.s32 %s10, 1
      %s148 = smul.u32 32, %s15
      %p149 = scmp.lt.s32.totalorder %s148, 63
      %s150 = scalar_select %p149, %s148, 63
      %s151 = smul.addr %s150, 2
      %s152 = smul.addr %s151, 4
      %s153 = scalar_lea.vmem %s0, %s152
      %p154 = pneg %p36
      %p155 = pneg %p33
      %p156 = pneg %p57
      %p157 = pneg %p54
      %p158 = pneg %p83
      %p159 = pneg %p80
      %s160 = smul.u32 32, %s15
      %p161 = scmp.lt.s32.totalorder %s160, 63
      %s162 = scalar_select %p161, %s160, 63
      %s163 = smul.addr %s162, 4
      %s164 = scalar_lea.vmem %s2, %s163
      %p165 = pneg %p109
      %p166 = pneg %p106
      %p167 = scmp.lt.s32.totalorder %s15, 1
      %s168 = scalar_select %p167, %s15, 1
      %s169 = smul.addr %s168, 8
      %s170 = scalar_lea.vmem %s3, %s169
      %s171 = smul.u32 32, %s15
      %p172 = scmp.lt.s32.totalorder %s171, 63
      %s173 = scalar_select %p172, %s171, 63
      %s174 = smul.addr %s173, 2
      %s175 = smul.addr %s174, 4
      %s176 = scalar_lea.vmem %s0, %s175
      %s177 = smul.u32 32, %s15
      %s178 = smul.u32 32, %s15
      %p179 = scmp.lt.s32.totalorder %s178, 63
      %s180 = scalar_select %p179, %s178, 63
      %s181 = smul.addr %s180, 4
      %s182 = scalar_lea.vmem %s2, %s181
      %s183 = smul.u32 32, %s15
      %p184 = scmp.lt.s32.totalorder %s15, 1
      %s185 = scalar_select %p184, %s15, 1
      %s186 = smul.addr %s185, 8
      %s187 = scalar_lea.vmem %s3, %s186
      %v189 = vld [vmem:[%s176] sm:$0xff]
      %v190 = vld [vmem:[%s176 + $0x8] sm:$0xff]
      %v191 = vld [vmem:[%s176 + $0x10] sm:$0xff]
      %v192 = vld [vmem:[%s176 + $0x18] sm:$0xff]
      %v193 = vld [vmem:[%s176 + $0x20] sm:$0xff]
      %v194 = vld [vmem:[%s176 + $0x28] sm:$0xff]
      %v195 = vld [vmem:[%s176 + $0x30] sm:$0xff]
      %v196 = vld [vmem:[%s176 + $0x38] sm:$0xff]
      %v197 = vld [vmem:[%s176 + $0x40] sm:$0xff]
      %v198 = vld [vmem:[%s176 + $0x48] sm:$0xff]
      %v199 = vld [vmem:[%s176 + $0x50] sm:$0xff]
      %v200 = vld [vmem:[%s176 + $0x58] sm:$0xff]
      %v201 = vld [vmem:[%s176 + $0x60] sm:$0xff]
      %v202 = vld [vmem:[%s176 + $0x68] sm:$0xff]
      %v203 = vld [vmem:[%s176 + $0x70] sm:$0xff]
      %v204 = vld [vmem:[%s176 + $0x78] sm:$0xff]
      %v205 = vld [vmem:[%s176 + $0x80] sm:$0xff]
      %v206 = vld [vmem:[%s176 + $0x88] sm:$0xff]
      %v207 = vld [vmem:[%s176 + $0x90] sm:$0xff]
      %v208 = vld [vmem:[%s176 + $0x98] sm:$0xff]
      %v209 = vld [vmem:[%s176 + $0xa0] sm:$0xff]
      %v210 = vld [vmem:[%s176 + $0xa8] sm:$0xff]
      %v211 = vld [vmem:[%s176 + $0xb0] sm:$0xff]
      %v212 = vld [vmem:[%s176 + $0xb8] sm:$0xff]
      %v213 = vld [vmem:[%s176 + $0xc0] sm:$0xff]
      %v214 = vld [vmem:[%s176 + $0xc8] sm:$0xff]
      %v215 = vld [vmem:[%s176 + $0xd0] sm:$0xff]
      %v216 = vld [vmem:[%s176 + $0xd8] sm:$0xff]
      %v217 = vld [vmem:[%s176 + $0xe0] sm:$0xff]
      %v218 = vld [vmem:[%s176 + $0xe8] sm:$0xff]
      %v219 = vld [vmem:[%s176 + $0xf0] sm:$0xff]
      %v220 = vld [vmem:[%s176 + $0xf8] sm:$0xff]
      %v221 = vld [vmem:[%s1] sm:$0xf]
      %v222 = vld [vmem:[%s1 + $0x4] sm:$0xf]
      %v223 = vld [vmem:[%s1 + $0x8] sm:$0xf]
      %v224 = vld [vmem:[%s1 + $0xc] sm:$0xf]
      %v225 = vld [vmem:[%s1 + $0x10] sm:$0xf]
      %v226 = vld [vmem:[%s1 + $0x14] sm:$0xf]
      %v227 = vld [vmem:[%s1 + $0x18] sm:$0xf]
      %v228 = vld [vmem:[%s1 + $0x1c] sm:$0xf]
      %v229 = vld [vmem:[%s1 + $0x20] sm:$0xf]
      %v230 = vld [vmem:[%s1 + $0x24] sm:$0xf]
      %v231 = vld [vmem:[%s1 + $0x28] sm:$0xf]
      %v232 = vld [vmem:[%s1 + $0x2c] sm:$0xf]
      %v233 = vld [vmem:[%s1 + $0x30] sm:$0xf]
      %v234 = vld [vmem:[%s1 + $0x34] sm:$0xf]
      %v235 = vld [vmem:[%s1 + $0x38] sm:$0xf]
      %v236 = vld [vmem:[%s1 + $0x3c] sm:$0xf]
      %v237 = vld [vmem:[%s1 + $0x40] sm:$0xf]
      %v238 = vld [vmem:[%s1 + $0x44] sm:$0xf]
      %v239 = vld [vmem:[%s1 + $0x48] sm:$0xf]
      %v240 = vld [vmem:[%s1 + $0x4c] sm:$0xf]
      %v241 = vld [vmem:[%s1 + $0x50] sm:$0xf]
      %v242 = vld [vmem:[%s1 + $0x54] sm:$0xf]
      %v243 = vld [vmem:[%s1 + $0x58] sm:$0xf]
      %v244 = vld [vmem:[%s1 + $0x5c] sm:$0xf]
      %v245 = vld [vmem:[%s1 + $0x60] sm:$0xf]
      %v246 = vld [vmem:[%s1 + $0x64] sm:$0xf]
      %v247 = vld [vmem:[%s1 + $0x68] sm:$0xf]
      %v248 = vld [vmem:[%s1 + $0x6c] sm:$0xf]
      %v249 = vld [vmem:[%s1 + $0x70] sm:$0xf]
      %v250 = vld [vmem:[%s1 + $0x74] sm:$0xf]
      %v251 = vld [vmem:[%s1 + $0x78] sm:$0xf]
      %v252 = vld [vmem:[%s1 + $0x7c] sm:$0xf]
      %v285 = vunpack.c.l.b16 %v189
      %v286 = vunpack.c.h.b16 %v189
      %v287 = vunpack.c.l.b16 %v190
      %v288 = vunpack.c.h.b16 %v190
      %v289 = vunpack.c.l.b16 %v191
      %v290 = vunpack.c.h.b16 %v191
      %v291 = vunpack.c.l.b16 %v192
      %v292 = vunpack.c.h.b16 %v192
      %v293 = vunpack.c.l.b16 %v193
      %v294 = vunpack.c.h.b16 %v193
      %v295 = vunpack.c.l.b16 %v194
      %v296 = vunpack.c.h.b16 %v194
      %v297 = vunpack.c.l.b16 %v195
      %v298 = vunpack.c.h.b16 %v195
      %v299 = vunpack.c.l.b16 %v196
      %v300 = vunpack.c.h.b16 %v196
      %v301 = vunpack.c.l.b16 %v197
      %v302 = vunpack.c.h.b16 %v197
      %v303 = vunpack.c.l.b16 %v198
      %v304 = vunpack.c.h.b16 %v198
      %v305 = vunpack.c.l.b16 %v199
      %v306 = vunpack.c.h.b16 %v199
      %v307 = vunpack.c.l.b16 %v200
      %v308 = vunpack.c.h.b16 %v200
      %v309 = vunpack.c.l.b16 %v201
      %v310 = vunpack.c.h.b16 %v201
      %v311 = vunpack.c.l.b16 %v202
      %v312 = vunpack.c.h.b16 %v202
      %v313 = vunpack.c.l.b16 %v203
      %v314 = vunpack.c.h.b16 %v203
      %v315 = vunpack.c.l.b16 %v204
      %v316 = vunpack.c.h.b16 %v204
      %v317 = vunpack.c.l.b16 %v205
      %v318 = vunpack.c.h.b16 %v205
      %v319 = vunpack.c.l.b16 %v206
      %v320 = vunpack.c.h.b16 %v206
      %v321 = vunpack.c.l.b16 %v207
      %v322 = vunpack.c.h.b16 %v207
      %v323 = vunpack.c.l.b16 %v208
      %v324 = vunpack.c.h.b16 %v208
      %v325 = vunpack.c.l.b16 %v209
      %v326 = vunpack.c.h.b16 %v209
      %v327 = vunpack.c.l.b16 %v210
      %v328 = vunpack.c.h.b16 %v210
      %v329 = vunpack.c.l.b16 %v211
      %v330 = vunpack.c.h.b16 %v211
      %v331 = vunpack.c.l.b16 %v212
      %v332 = vunpack.c.h.b16 %v212
      %v333 = vunpack.c.l.b16 %v213
      %v334 = vunpack.c.h.b16 %v213
      %v335 = vunpack.c.l.b16 %v214
      %v336 = vunpack.c.h.b16 %v214
      %v337 = vunpack.c.l.b16 %v215
      %v338 = vunpack.c.h.b16 %v215
      %v339 = vunpack.c.l.b16 %v216
      %v340 = vunpack.c.h.b16 %v216
      %v341 = vunpack.c.l.b16 %v217
      %v342 = vunpack.c.h.b16 %v217
      %v343 = vunpack.c.l.b16 %v218
      %v344 = vunpack.c.h.b16 %v218
      %v345 = vunpack.c.l.b16 %v219
      %v346 = vunpack.c.h.b16 %v219
      %v347 = vunpack.c.l.b16 %v220
      %v348 = vunpack.c.h.b16 %v220
      %v349 = vpack.c.b16 %v287, %v285
      %v350 = vpack.c.b16 %v288, %v286
      %v351 = vpack.c.b16 %v291, %v289
      %v352 = vpack.c.b16 %v292, %v290
      %v353 = vpack.c.b16 %v295, %v293
      %v354 = vpack.c.b16 %v296, %v294
      %v355 = vpack.c.b16 %v299, %v297
      %v356 = vpack.c.b16 %v300, %v298
      %v357 = vpack.c.b16 %v303, %v301
      %v358 = vpack.c.b16 %v304, %v302
      %v359 = vpack.c.b16 %v307, %v305
      %v360 = vpack.c.b16 %v308, %v306
      %v361 = vpack.c.b16 %v311, %v309
      %v362 = vpack.c.b16 %v312, %v310
      %v363 = vpack.c.b16 %v315, %v313
      %v364 = vpack.c.b16 %v316, %v314
      %v365 = vpack.c.b16 %v319, %v317
      %v366 = vpack.c.b16 %v320, %v318
      %v367 = vpack.c.b16 %v323, %v321
      %v368 = vpack.c.b16 %v324, %v322
      %v369 = vpack.c.b16 %v327, %v325
      %v370 = vpack.c.b16 %v328, %v326
      %v371 = vpack.c.b16 %v331, %v329
      %v372 = vpack.c.b16 %v332, %v330
      %v373 = vpack.c.b16 %v335, %v333
      %v374 = vpack.c.b16 %v336, %v334
      %v375 = vpack.c.b16 %v339, %v337
      %v376 = vpack.c.b16 %v340, %v338
      %v377 = vpack.c.b16 %v343, %v341
      %v378 = vpack.c.b16 %v344, %v342
      %v379 = vpack.c.b16 %v347, %v345
      %v380 = vpack.c.b16 %v348, %v346
      %v445 = vunpack.c.l.b16 %v221
      %v446 = vunpack.c.l.b16 %v222
      %v447 = vunpack.c.l.b16 %v223
      %v448 = vunpack.c.l.b16 %v224
      %v449 = vunpack.c.l.b16 %v225
      %v450 = vunpack.c.l.b16 %v226
      %v451 = vunpack.c.l.b16 %v227
      %v452 = vunpack.c.l.b16 %v228
      %v453 = vunpack.c.l.b16 %v229
      %v454 = vunpack.c.l.b16 %v230
      %v455 = vunpack.c.l.b16 %v231
      %v456 = vunpack.c.l.b16 %v232
      %v457 = vunpack.c.l.b16 %v233
      %v458 = vunpack.c.l.b16 %v234
      %v459 = vunpack.c.l.b16 %v235
      %v460 = vunpack.c.l.b16 %v236
      %v461 = vunpack.c.l.b16 %v237
      %v462 = vunpack.c.l.b16 %v238
      %v463 = vunpack.c.l.b16 %v239
      %v464 = vunpack.c.l.b16 %v240
      %v465 = vunpack.c.l.b16 %v241
      %v466 = vunpack.c.l.b16 %v242
      %v467 = vunpack.c.l.b16 %v243
      %v468 = vunpack.c.l.b16 %v244
      %v469 = vunpack.c.l.b16 %v245
      %v470 = vunpack.c.l.b16 %v246
      %v471 = vunpack.c.l.b16 %v247
      %v472 = vunpack.c.l.b16 %v248
      %v473 = vunpack.c.l.b16 %v249
      %v474 = vunpack.c.l.b16 %v250
      %v475 = vunpack.c.l.b16 %v251
      %v476 = vunpack.c.l.b16 %v252
      %v477 = vpack.c.b16 %v446, %v445
      %v478 = vpack.c.b16 %v448, %v447
      %v479 = vpack.c.b16 %v450, %v449
      %v480 = vpack.c.b16 %v452, %v451
      %v481 = vpack.c.b16 %v454, %v453
      %v482 = vpack.c.b16 %v456, %v455
      %v483 = vpack.c.b16 %v458, %v457
      %v484 = vpack.c.b16 %v460, %v459
      %v485 = vpack.c.b16 %v462, %v461
      %v486 = vpack.c.b16 %v464, %v463
      %v487 = vpack.c.b16 %v466, %v465
      %v488 = vpack.c.b16 %v468, %v467
      %v489 = vpack.c.b16 %v470, %v469
      %v490 = vpack.c.b16 %v472, %v471
      %v491 = vpack.c.b16 %v474, %v473
      %v492 = vpack.c.b16 %v476, %v475
      %509 = vmatprep.subr.bf16.mxu0 0
      %510 = vmatpush1.bf16.msra.mxu0 %v484
      %511 = vmatprep.subr.bf16.mxu0 0
      %512 = vmatpush1.bf16.msra.mxu0 %v483
      %513 = vmatprep.subr.bf16.mxu0 0
      %514 = vmatpush1.bf16.msra.mxu0 %v482
      %515 = vmatprep.subr.bf16.mxu0 0
      %516 = vmatpush1.bf16.msra.mxu0 %v481
      %517 = vmatprep.subr.bf16.mxu0 0
      %518 = vmatpush1.bf16.msra.mxu0 %v480
      %519 = vmatprep.subr.bf16.mxu0 0
      %520 = vmatpush1.bf16.msra.mxu0 %v479
      %521 = vmatprep.subr.bf16.mxu0 0
      %522 = vmatpush1.bf16.msra.mxu0 %v478
      %523 = vmatprep.subr.bf16.mxu0 0
      %524 = vmatpush1.bf16.msra.mxu0 %v477
      %525 = vmatprep.subr.bf16.mxu0 0
      %526 = vmatpush2.bf16.msra.mxu0 %v492
      %527 = vmatprep.subr.bf16.mxu0 0
      %528 = vmatpush2.bf16.msra.mxu0 %v491
      %529 = vmatprep.subr.bf16.mxu0 0
      %530 = vmatpush2.bf16.msra.mxu0 %v490
      %531 = vmatprep.subr.bf16.mxu0 0
      %532 = vmatpush2.bf16.msra.mxu0 %v489
      %533 = vmatprep.subr.bf16.mxu0 0
      %534 = vmatpush2.bf16.msra.mxu0 %v488
      %535 = vmatprep.subr.bf16.mxu0 0
      %536 = vmatpush2.bf16.msra.mxu0 %v487
      %537 = vmatprep.subr.bf16.mxu0 0
      %538 = vmatpush2.bf16.msra.mxu0 %v486
      %539 = vmatprep.subr.bf16.mxu0 0
      %540 = vmatpush2.bf16.msra.mxu0 %v485
      %541 = vmatprep.mubr.bf16.mxu0 %v350
      %542 = vmatmul.mubr.bf16.gmra.mxu0 %v349
      %v543 = vpop.f32.mrf.mxu0
      %v544 = vadd.f32 0.0, %v543
      %v545 = vpop.f32.mrf.mxu0
      %v546 = vpop.f32.mrf.mxu0
      %v547 = vadd.f32 0.0, %v546
      %v548 = vpop.f32.mrf.mxu0
      %549 = vmatprep.mubr.bf16.mxu0 %v352
      %550 = vmatmul.mubr.bf16.gmra.mxu0 %v351
      %v551 = vpop.f32.mrf.mxu0
      %v552 = vadd.f32 0.0, %v551
      %v553 = vpop.f32.mrf.mxu0
      %v554 = vpop.f32.mrf.mxu0
      %v555 = vadd.f32 0.0, %v554
      %v556 = vpop.f32.mrf.mxu0
      %557 = vmatprep.mubr.bf16.mxu0 %v354
      %558 = vmatmul.mubr.bf16.gmra.mxu0 %v353
      %v559 = vpop.f32.mrf.mxu0
      %v560 = vadd.f32 0.0, %v559
      %v561 = vpop.f32.mrf.mxu0
      %v562 = vpop.f32.mrf.mxu0
      %v563 = vadd.f32 0.0, %v562
      %v564 = vpop.f32.mrf.mxu0
      %565 = vmatprep.mubr.bf16.mxu0 %v356
      %566 = vmatmul.mubr.bf16.gmra.mxu0 %v355
      %v567 = vpop.f32.mrf.mxu0
      %v568 = vadd.f32 0.0, %v567
      %v569 = vpop.f32.mrf.mxu0
      %v570 = vpop.f32.mrf.mxu0
      %v571 = vadd.f32 0.0, %v570
      %v572 = vpop.f32.mrf.mxu0
      %573 = vmatprep.mubr.bf16.mxu0 %v358
      %574 = vmatmul.mubr.bf16.gmra.mxu0 %v357
      %v575 = vpop.f32.mrf.mxu0
      %v576 = vadd.f32 0.0, %v575
      %v577 = vpop.f32.mrf.mxu0
      %v578 = vpop.f32.mrf.mxu0
      %v579 = vadd.f32 0.0, %v578
      %v580 = vpop.f32.mrf.mxu0
      %581 = vmatprep.mubr.bf16.mxu0 %v360
      %582 = vmatmul.mubr.bf16.gmra.mxu0 %v359
      %v583 = vpop.f32.mrf.mxu0
      %v584 = vadd.f32 0.0, %v583
      %v585 = vpop.f32.mrf.mxu0
      %v586 = vpop.f32.mrf.mxu0
      %v587 = vadd.f32 0.0, %v586
      %v588 = vpop.f32.mrf.mxu0
      %589 = vmatprep.mubr.bf16.mxu0 %v362
      %590 = vmatmul.mubr.bf16.gmra.mxu0 %v361
      %v591 = vpop.f32.mrf.mxu0
      %v592 = vadd.f32 0.0, %v591
      %v593 = vpop.f32.mrf.mxu0
      %v594 = vpop.f32.mrf.mxu0
      %v595 = vadd.f32 0.0, %v594
      %v596 = vpop.f32.mrf.mxu0
      %597 = vmatprep.mubr.bf16.mxu0 %v364
      %598 = vmatmul.mubr.bf16.gmra.mxu0 %v363
      %v599 = vpop.f32.mrf.mxu0
      %v600 = vadd.f32 0.0, %v599
      %v601 = vpop.f32.mrf.mxu0
      %v602 = vpop.f32.mrf.mxu0
      %v603 = vadd.f32 0.0, %v602
      %v604 = vpop.f32.mrf.mxu0
      %605 = vmatprep.mubr.bf16.mxu0 %v366
      %606 = vmatmul.mubr.bf16.gmra.mxu0 %v365
      %v607 = vpop.f32.mrf.mxu0
      %v608 = vadd.f32 0.0, %v607
      %v609 = vpop.f32.mrf.mxu0
      %v610 = vpop.f32.mrf.mxu0
      %v611 = vadd.f32 0.0, %v610
      %v612 = vpop.f32.mrf.mxu0
      %613 = vmatprep.mubr.bf16.mxu0 %v368
      %614 = vmatmul.mubr.bf16.gmra.mxu0 %v367
      %v615 = vpop.f32.mrf.mxu0
      %v616 = vadd.f32 0.0, %v615
      %v617 = vpop.f32.mrf.mxu0
      %v618 = vpop.f32.mrf.mxu0
      %v619 = vadd.f32 0.0, %v618
      %v620 = vpop.f32.mrf.mxu0
      %621 = vmatprep.mubr.bf16.mxu0 %v370
      %622 = vmatmul.mubr.bf16.gmra.mxu0 %v369
      %v623 = vpop.f32.mrf.mxu0
      %v624 = vadd.f32 0.0, %v623
      %v625 = vpop.f32.mrf.mxu0
      %v626 = vpop.f32.mrf.mxu0
      %v627 = vadd.f32 0.0, %v626
      %v628 = vpop.f32.mrf.mxu0
      %629 = vmatprep.mubr.bf16.mxu0 %v372
      %630 = vmatmul.mubr.bf16.gmra.mxu0 %v371
      %v631 = vpop.f32.mrf.mxu0
      %v632 = vadd.f32 0.0, %v631
      %v633 = vpop.f32.mrf.mxu0
      %v634 = vpop.f32.mrf.mxu0
      %v635 = vadd.f32 0.0, %v634
      %v636 = vpop.f32.mrf.mxu0
      %637 = vmatprep.mubr.bf16.mxu0 %v374
      %638 = vmatmul.mubr.bf16.gmra.mxu0 %v373
      %v639 = vpop.f32.mrf.mxu0
      %v640 = vadd.f32 0.0, %v639
      %v641 = vpop.f32.mrf.mxu0
      %v642 = vpop.f32.mrf.mxu0
      %v643 = vadd.f32 0.0, %v642
      %v644 = vpop.f32.mrf.mxu0
      %645 = vmatprep.mubr.bf16.mxu0 %v376
      %646 = vmatmul.mubr.bf16.gmra.mxu0 %v375
      %v647 = vpop.f32.mrf.mxu0
      %v648 = vadd.f32 0.0, %v647
      %v649 = vpop.f32.mrf.mxu0
      %v650 = vpop.f32.mrf.mxu0
      %v651 = vadd.f32 0.0, %v650
      %v652 = vpop.f32.mrf.mxu0
      %653 = vmatprep.mubr.bf16.mxu0 %v378
      %654 = vmatmul.mubr.bf16.gmra.mxu0 %v377
      %v655 = vpop.f32.mrf.mxu0
      %v656 = vadd.f32 0.0, %v655
      %v657 = vpop.f32.mrf.mxu0
      %v658 = vpop.f32.mrf.mxu0
      %v659 = vadd.f32 0.0, %v658
      %v660 = vpop.f32.mrf.mxu0
      %661 = vmatprep.mubr.bf16.mxu0 %v380
      %662 = vmatmul.mubr.bf16.gmra.mxu0 %v379
      %v663 = vpop.f32.mrf.mxu0
      %v664 = vadd.f32 0.0, %v663
      %v665 = vpop.f32.mrf.mxu0
      %v666 = vpop.f32.mrf.mxu0
      %v667 = vadd.f32 0.0, %v666
      %v668 = vpop.f32.mrf.mxu0
      %669 = vdwg.mxu0
      %v670 = vpack.c.bf16 %v547, %v544
      %v671 = vpack.c.bf16 %v555, %v552
      %v672 = vpack.c.bf16 %v563, %v560
      %v673 = vpack.c.bf16 %v571, %v568
      %v674 = vpack.c.bf16 %v579, %v576
      %v675 = vpack.c.bf16 %v587, %v584
      %v676 = vpack.c.bf16 %v595, %v592
      %v677 = vpack.c.bf16 %v603, %v600
      %v678 = vpack.c.bf16 %v611, %v608
      %v679 = vpack.c.bf16 %v619, %v616
      %v680 = vpack.c.bf16 %v627, %v624
      %v681 = vpack.c.bf16 %v635, %v632
      %v682 = vpack.c.bf16 %v643, %v640
      %v683 = vpack.c.bf16 %v651, %v648
      %v684 = vpack.c.bf16 %v659, %v656
      %v685 = vpack.c.bf16 %v667, %v664
      %v702 = vunpack.c.l.b16 %v670
      %v703 = vunpack.c.h.b16 %v670
      %v704 = vunpack.c.l.b16 %v671
      %v705 = vunpack.c.h.b16 %v671
      %v706 = vunpack.c.l.b16 %v672
      %v707 = vunpack.c.h.b16 %v672
      %v708 = vunpack.c.l.b16 %v673
      %v709 = vunpack.c.h.b16 %v673
      %v710 = vunpack.c.l.b16 %v674
      %v711 = vunpack.c.h.b16 %v674
      %v712 = vunpack.c.l.b16 %v675
      %v713 = vunpack.c.h.b16 %v675
      %v714 = vunpack.c.l.b16 %v676
      %v715 = vunpack.c.h.b16 %v676
      %v716 = vunpack.c.l.b16 %v677
      %v717 = vunpack.c.h.b16 %v677
      %v718 = vunpack.c.l.b16 %v678
      %v719 = vunpack.c.h.b16 %v678
      %v720 = vunpack.c.l.b16 %v679
      %v721 = vunpack.c.h.b16 %v679
      %v722 = vunpack.c.l.b16 %v680
      %v723 = vunpack.c.h.b16 %v680
      %v724 = vunpack.c.l.b16 %v681
      %v725 = vunpack.c.h.b16 %v681
      %v726 = vunpack.c.l.b16 %v682
      %v727 = vunpack.c.h.b16 %v682
      %v728 = vunpack.c.l.b16 %v683
      %v729 = vunpack.c.h.b16 %v683
      %v730 = vunpack.c.l.b16 %v684
      %v731 = vunpack.c.h.b16 %v684
      %v732 = vunpack.c.l.b16 %v685
      %v733 = vunpack.c.h.b16 %v685
      %v734 = vpack.c.b16 %v702, %v702
      %v735 = vpack.c.b16 %v703, %v703
      %v736 = vpack.c.b16 %v704, %v704
      %v737 = vpack.c.b16 %v705, %v705
      %v738 = vpack.c.b16 %v706, %v706
      %v739 = vpack.c.b16 %v707, %v707
      %v740 = vpack.c.b16 %v708, %v708
      %v741 = vpack.c.b16 %v709, %v709
      %v742 = vpack.c.b16 %v710, %v710
      %v743 = vpack.c.b16 %v711, %v711
      %v744 = vpack.c.b16 %v712, %v712
      %v745 = vpack.c.b16 %v713, %v713
      %v746 = vpack.c.b16 %v714, %v714
      %v747 = vpack.c.b16 %v715, %v715
      %v748 = vpack.c.b16 %v716, %v716
      %v749 = vpack.c.b16 %v717, %v717
      %v750 = vpack.c.b16 %v718, %v718
      %v751 = vpack.c.b16 %v719, %v719
      %v752 = vpack.c.b16 %v720, %v720
      %v753 = vpack.c.b16 %v721, %v721
      %v754 = vpack.c.b16 %v722, %v722
      %v755 = vpack.c.b16 %v723, %v723
      %v756 = vpack.c.b16 %v724, %v724
      %v757 = vpack.c.b16 %v725, %v725
      %v758 = vpack.c.b16 %v726, %v726
      %v759 = vpack.c.b16 %v727, %v727
      %v760 = vpack.c.b16 %v728, %v728
      %v761 = vpack.c.b16 %v729, %v729
      %v762 = vpack.c.b16 %v730, %v730
      %v763 = vpack.c.b16 %v731, %v731
      %v764 = vpack.c.b16 %v732, %v732
      %v765 = vpack.c.b16 %v733, %v733
      %798 = vst [vmem:[%s182] sm:$0xf] %v734
      %799 = vst [vmem:[%s182 + $0x4] sm:$0xf] %v735
      %800 = vst [vmem:[%s182 + $0x8] sm:$0xf] %v736
      %801 = vst [vmem:[%s182 + $0xc] sm:$0xf] %v737
      %802 = vst [vmem:[%s182 + $0x10] sm:$0xf] %v738
      %803 = vst [vmem:[%s182 + $0x14] sm:$0xf] %v739
      %804 = vst [vmem:[%s182 + $0x18] sm:$0xf] %v740
      %805 = vst [vmem:[%s182 + $0x1c] sm:$0xf] %v741
      %806 = vst [vmem:[%s182 + $0x20] sm:$0xf] %v742
      %807 = vst [vmem:[%s182 + $0x24] sm:$0xf] %v743
      %808 = vst [vmem:[%s182 + $0x28] sm:$0xf] %v744
      %809 = vst [vmem:[%s182 + $0x2c] sm:$0xf] %v745
      %810 = vst [vmem:[%s182 + $0x30] sm:$0xf] %v746
      %811 = vst [vmem:[%s182 + $0x34] sm:$0xf] %v747
      %812 = vst [vmem:[%s182 + $0x38] sm:$0xf] %v748
      %813 = vst [vmem:[%s182 + $0x3c] sm:$0xf] %v749
      %814 = vst [vmem:[%s182 + $0x40] sm:$0xf] %v750
      %815 = vst [vmem:[%s182 + $0x44] sm:$0xf] %v751
      %816 = vst [vmem:[%s182 + $0x48] sm:$0xf] %v752
      %817 = vst [vmem:[%s182 + $0x4c] sm:$0xf] %v753
      %818 = vst [vmem:[%s182 + $0x50] sm:$0xf] %v754
      %819 = vst [vmem:[%s182 + $0x54] sm:$0xf] %v755
      %820 = vst [vmem:[%s182 + $0x58] sm:$0xf] %v756
      %821 = vst [vmem:[%s182 + $0x5c] sm:$0xf] %v757
      %822 = vst [vmem:[%s182 + $0x60] sm:$0xf] %v758
      %823 = vst [vmem:[%s182 + $0x64] sm:$0xf] %v759
      %824 = vst [vmem:[%s182 + $0x68] sm:$0xf] %v760
      %825 = vst [vmem:[%s182 + $0x6c] sm:$0xf] %v761
      %826 = vst [vmem:[%s182 + $0x70] sm:$0xf] %v762
      %827 = vst [vmem:[%s182 + $0x74] sm:$0xf] %v763
      %828 = vst [vmem:[%s182 + $0x78] sm:$0xf] %v764
      %829 = vst [vmem:[%s182 + $0x7c] sm:$0xf] %v765
      %v830 = vadd.f32 %v544, %v547
      %v831 = vadd.f32 %v830, %v552
      %v832 = vadd.f32 %v831, %v555
      %v833 = vadd.f32 %v832, %v560
      %v834 = vadd.f32 %v833, %v563
      %v835 = vadd.f32 %v834, %v568
      %v836 = vadd.f32 %v835, %v571
      %v837 = vadd.f32 %v836, %v576
      %v838 = vadd.f32 %v837, %v579
      %v839 = vadd.f32 %v838, %v584
      %v840 = vadd.f32 %v839, %v587
      %v841 = vadd.f32 %v840, %v592
      %v842 = vadd.f32 %v841, %v595
      %v843 = vadd.f32 %v842, %v600
      %v844 = vadd.f32 %v843, %v603
      %v845 = vadd.f32 %v844, %v608
      %v846 = vadd.f32 %v845, %v611
      %v847 = vadd.f32 %v846, %v616
      %v848 = vadd.f32 %v847, %v619
      %v849 = vadd.f32 %v848, %v624
      %v850 = vadd.f32 %v849, %v627
      %v851 = vadd.f32 %v850, %v632
      %v852 = vadd.f32 %v851, %v635
      %v853 = vadd.f32 %v852, %v640
      %v854 = vadd.f32 %v853, %v643
      %v855 = vadd.f32 %v854, %v648
      %v856 = vadd.f32 %v855, %v651
      %v857 = vadd.f32 %v856, %v656
      %v858 = vadd.f32 %v857, %v659
      %v859 = vadd.f32 %v858, %v664
      %v860 = vadd.f32 %v859, %v667
      %v861 = vrot.slane %v860, 4
      %v862 = vadd.f32 %v860, %v861
      %v863 = vrot.slane %v862, 2
      %v864 = vadd.f32 %v862, %v863
      %v865 = vrot.slane %v864, 1
      %v866 = vadd.f32 %v864, %v865
      %v867 = vmul.f32 %v544, %v544
      %v868 = vmul.f32 %v547, %v547
      %v869 = vmul.f32 %v552, %v552
      %v870 = vmul.f32 %v555, %v555
      %v871 = vmul.f32 %v560, %v560
      %v872 = vmul.f32 %v563, %v563
      %v873 = vmul.f32 %v568, %v568
      %v874 = vmul.f32 %v571, %v571
      %v875 = vmul.f32 %v576, %v576
      %v876 = vmul.f32 %v579, %v579
      %v877 = vmul.f32 %v584, %v584
      %v878 = vmul.f32 %v587, %v587
      %v879 = vmul.f32 %v592, %v592
      %v880 = vmul.f32 %v595, %v595
      %v881 = vmul.f32 %v600, %v600
      %v882 = vmul.f32 %v603, %v603
      %v883 = vmul.f32 %v608, %v608
      %v884 = vmul.f32 %v611, %v611
      %v885 = vmul.f32 %v616, %v616
      %v886 = vmul.f32 %v619, %v619
      %v887 = vmul.f32 %v624, %v624
      %v888 = vmul.f32 %v627, %v627
      %v889 = vmul.f32 %v632, %v632
      %v890 = vmul.f32 %v635, %v635
      %v891 = vmul.f32 %v640, %v640
      %v892 = vmul.f32 %v643, %v643
      %v893 = vmul.f32 %v648, %v648
      %v894 = vmul.f32 %v651, %v651
      %v895 = vmul.f32 %v656, %v656
      %v896 = vmul.f32 %v659, %v659
      %v897 = vmul.f32 %v664, %v664
      %v898 = vmul.f32 %v667, %v667
      %v899 = vadd.f32 %v867, %v868
      %v900 = vadd.f32 %v899, %v869
      %v901 = vadd.f32 %v900, %v870
      %v902 = vadd.f32 %v901, %v871
      %v903 = vadd.f32 %v902, %v872
      %v904 = vadd.f32 %v903, %v873
      %v905 = vadd.f32 %v904, %v874
      %v906 = vadd.f32 %v905, %v875
      %v907 = vadd.f32 %v906, %v876
      %v908 = vadd.f32 %v907, %v877
      %v909 = vadd.f32 %v908, %v878
      %v910 = vadd.f32 %v909, %v879
      %v911 = vadd.f32 %v910, %v880
      %v912 = vadd.f32 %v911, %v881
      %v913 = vadd.f32 %v912, %v882
      %v914 = vadd.f32 %v913, %v883
      %v915 = vadd.f32 %v914, %v884
      %v916 = vadd.f32 %v915, %v885
      %v917 = vadd.f32 %v916, %v886
      %v918 = vadd.f32 %v917, %v887
      %v919 = vadd.f32 %v918, %v888
      %v920 = vadd.f32 %v919, %v889
      %v921 = vadd.f32 %v920, %v890
      %v922 = vadd.f32 %v921, %v891
      %v923 = vadd.f32 %v922, %v892
      %v924 = vadd.f32 %v923, %v893
      %v925 = vadd.f32 %v924, %v894
      %v926 = vadd.f32 %v925, %v895
      %v927 = vadd.f32 %v926, %v896
      %v928 = vadd.f32 %v927, %v897
      %v929 = vadd.f32 %v928, %v898
      %v930 = vrot.slane %v929, 4
      %v931 = vadd.f32 %v929, %v930
      %v932 = vrot.slane %v931, 2
      %v933 = vadd.f32 %v931, %v932
      %v934 = vrot.slane %v933, 1
      %v935 = vadd.f32 %v933, %v934
      %vm936 = vcmask 1040384
      %v937 = vsel %vm936, %v866, %v935
      %vm938 = vcmask 1041408
      %v939 = vsel %vm938, %v937, 0.0
      %940 = vst [vmem:[%s187] sm:$0xff] %v939
      %s941 = smul.u32 32, %s15
      %p942 = scmp.lt.s32.totalorder %s941, 63
      %s943 = scalar_select %p942, %s941, 63
      %s944 = smul.addr %s943, 4
      %s945 = scalar_lea.vmem %s2, %s944
      %p946 = scmp.lt.s32.totalorder %s15, 1
      %s947 = scalar_select %p946, %s15, 1
      %s948 = smul.addr %s947, 8
      %s949 = scalar_lea.vmem %s3, %s948
      // Predicated region
      $region29: #{discriminator_forward.5} parent=27 // pred_check
        %p950 = pneg %p80
      $region30: #{discriminator_forward.5} parent=27 // pred_check_branch
        %952 = sbr.rel (%p950) target = $region32
      $region31: #{discriminator_forward.5} parent=27 // pred_region
        %s953 = smul.u32 32, %s15
      $region32: #{discriminator_forward.5} parent=27 // pred_fallthru
        _
      // Predicated region
      $region33: #{discriminator_forward.5} parent=27 // pred_check
        %p954 = pneg %p106
      $region34: #{discriminator_forward.5} parent=27 // pred_check_branch
        %956 = sbr.rel (%p954) target = $region36
      $region35: #{discriminator_forward.5} parent=27 // pred_region
        _
      $region36: #{discriminator_forward.5} parent=27 // pred_fallthru
        _
    $region28: #{discriminator_forward.5} parent=5 // pred_fallthru
      _
    %p957 = scmp.le.s32.totalorder 2, %s10
    // Predicated region
    $region37: #{discriminator_forward.5} parent=5 // pred_check
      %p958 = pneg %p957
    $region38: #{discriminator_forward.5} parent=5 // pred_check_branch
      %960 = sbr.rel (%p958) target = $region40
    $region39: #{discriminator_forward.5} parent=5 // pred_region
      %s961 = ssub.s32 %s10, 2
      // Predicated region
      $region41: #{discriminator_forward.5} parent=39 // pred_check
        %p962 = pneg %p86
      $region42: #{discriminator_forward.5} parent=39 // pred_check_branch
        %964 = sbr.rel (%p962) target = $region44
      $region43: #{discriminator_forward.5} parent=39 // pred_region
        %s965 = smul.u32 32, %s16
        %p966 = scmp.lt.s32.totalorder %s965, 63
        %s967 = scalar_select %p966, %s965, 63
        %s968 = smul.addr %s967, 4
        %s969 = scalar_lea.vmem %s2, %s968
      $region44: #{discriminator_forward.5} parent=39 // pred_fallthru
        _
      // Predicated region
      $region45: #{discriminator_forward.5} parent=39 // pred_check
        %p970 = pneg %p112
      $region46: #{discriminator_forward.5} parent=39 // pred_check_branch
        %972 = sbr.rel (%p970) target = $region48
      $region47: #{discriminator_forward.5} parent=39 // pred_region
        %p973 = scmp.lt.s32.totalorder %s16, 1
        %s974 = scalar_select %p973, %s16, 1
        %s975 = smul.addr %s974, 8
        %s976 = scalar_lea.vmem %s3, %s975
      $region48: #{discriminator_forward.5} parent=39 // pred_fallthru
        _
    $region40: #{discriminator_forward.5} parent=5 // pred_fallthru
      _
  $region6: #{discriminator_forward.5} parent=0 // loop_footer
    %s14 = sadd.s32 1, %s10
  $region7: #{discriminator_forward.5} parent=0 // loop_footer_branch
    %9 = sbr.rel target = $region3
  $region8: #{discriminator_forward.5} parent=0 // loop_exit
    _

// kernel: discriminator_forward.6
$region0: #{discriminator_forward.6}
  #allocation0 [shape = 'u32[]', space=smem, size = 0x4, offset = 0x4, fixed_abs, tag = 'smem constant byte address 0x4 - core index']
  #allocation1 [shape = 'u32[144,128]{1,0:T(1,128)}', space=vmem, size = 0x12000, scoped, tag = 'internal scratch']
  %s0 = inlined_call_operand.vmem [shape: bf16[128,512], index: 0, kind: input, shape index: {}]
  %s1 = inlined_call_operand.vmem [shape: bf16[512,128], index: 1, kind: input, shape index: {}]
  %s2 = inlined_call_operand.vmem [shape: bf16[128,128], index: 2, kind: output, shape index: {0}]
  %s3 = inlined_call_operand.vmem [shape: f32[1,8,128], index: 3, kind: output, shape index: {1}]
  %4 = xla_tuple %s2, %s3
  %s5 = sld [smem:[#allocation0]]
  $region26: #{discriminator_forward.6} parent=0
    _
  %s7 = ssub.s32 1, %s5
  %s8 = scalar_select 0, %s7, %s5
  // Predicated region
  $region2: #{discriminator_forward.6} parent=0 // pred_check
    _
  $region3: #{discriminator_forward.6} parent=0 // pred_check_branch
    %10 = sbr.rel (0) target = $region5
  $region4: #{discriminator_forward.6} parent=0 // pred_region
    _
  $region5: #{discriminator_forward.6} parent=0 // pred_fallthru
    _
  // Predicated region
  $region6: #{discriminator_forward.6} parent=0 // pred_check
    _
  $region7: #{discriminator_forward.6} parent=0 // pred_check_branch
    %12 = sbr.rel (0) target = $region9
  $region8: #{discriminator_forward.6} parent=0 // pred_region
    _
  $region9: #{discriminator_forward.6} parent=0 // pred_fallthru
    _
  %v14 = vld [vmem:[%s0] sm:$0xff]
  %v15 = vld [vmem:[%s0 + $0x8] sm:$0xff]
  %v16 = vld [vmem:[%s0 + $0x10] sm:$0xff]
  %v17 = vld [vmem:[%s0 + $0x18] sm:$0xff]
  %v18 = vld [vmem:[%s0 + $0x20] sm:$0xff]
  %v19 = vld [vmem:[%s0 + $0x28] sm:$0xff]
  %v20 = vld [vmem:[%s0 + $0x30] sm:$0xff]
  %v21 = vld [vmem:[%s0 + $0x38] sm:$0xff]
  %v22 = vld [vmem:[%s0 + $0x40] sm:$0xff]
  %v23 = vld [vmem:[%s0 + $0x48] sm:$0xff]
  %v24 = vld [vmem:[%s0 + $0x50] sm:$0xff]
  %v25 = vld [vmem:[%s0 + $0x58] sm:$0xff]
  %v26 = vld [vmem:[%s0 + $0x60] sm:$0xff]
  %v27 = vld [vmem:[%s0 + $0x68] sm:$0xff]
  %v28 = vld [vmem:[%s0 + $0x70] sm:$0xff]
  %v29 = vld [vmem:[%s0 + $0x78] sm:$0xff]
  %v30 = vld [vmem:[%s0 + $0x80] sm:$0xff]
  %v31 = vld [vmem:[%s0 + $0x88] sm:$0xff]
  %v32 = vld [vmem:[%s0 + $0x90] sm:$0xff]
  %v33 = vld [vmem:[%s0 + $0x98] sm:$0xff]
  %v34 = vld [vmem:[%s0 + $0xa0] sm:$0xff]
  %v35 = vld [vmem:[%s0 + $0xa8] sm:$0xff]
  %v36 = vld [vmem:[%s0 + $0xb0] sm:$0xff]
  %v37 = vld [vmem:[%s0 + $0xb8] sm:$0xff]
  %v38 = vld [vmem:[%s0 + $0xc0] sm:$0xff]
  %v39 = vld [vmem:[%s0 + $0xc8] sm:$0xff]
  %v40 = vld [vmem:[%s0 + $0xd0] sm:$0xff]
  %v41 = vld [vmem:[%s0 + $0xd8] sm:$0xff]
  %v42 = vld [vmem:[%s0 + $0xe0] sm:$0xff]
  %v43 = vld [vmem:[%s0 + $0xe8] sm:$0xff]
  %v44 = vld [vmem:[%s0 + $0xf0] sm:$0xff]
  %v45 = vld [vmem:[%s0 + $0xf8] sm:$0xff]
  %v46 = vld [vmem:[%s1] sm:$0xf]
  %v47 = vld [vmem:[%s1 + $0x4] sm:$0xf]
  %v48 = vld [vmem:[%s1 + $0x8] sm:$0xf]
  %v49 = vld [vmem:[%s1 + $0xc] sm:$0xf]
  %v50 = vld [vmem:[%s1 + $0x10] sm:$0xf]
  %v51 = vld [vmem:[%s1 + $0x14] sm:$0xf]
  %v52 = vld [vmem:[%s1 + $0x18] sm:$0xf]
  %v53 = vld [vmem:[%s1 + $0x1c] sm:$0xf]
  %v54 = vld [vmem:[%s1 + $0x20] sm:$0xf]
  %v55 = vld [vmem:[%s1 + $0x24] sm:$0xf]
  %v56 = vld [vmem:[%s1 + $0x28] sm:$0xf]
  %v57 = vld [vmem:[%s1 + $0x2c] sm:$0xf]
  %v58 = vld [vmem:[%s1 + $0x30] sm:$0xf]
  %v59 = vld [vmem:[%s1 + $0x34] sm:$0xf]
  %v60 = vld [vmem:[%s1 + $0x38] sm:$0xf]
  %v61 = vld [vmem:[%s1 + $0x3c] sm:$0xf]
  %v62 = vld [vmem:[%s1 + $0x40] sm:$0xf]
  %v63 = vld [vmem:[%s1 + $0x44] sm:$0xf]
  %v64 = vld [vmem:[%s1 + $0x48] sm:$0xf]
  %v65 = vld [vmem:[%s1 + $0x4c] sm:$0xf]
  %v66 = vld [vmem:[%s1 + $0x50] sm:$0xf]
  %v67 = vld [vmem:[%s1 + $0x54] sm:$0xf]
  %v68 = vld [vmem:[%s1 + $0x58] sm:$0xf]
  %v69 = vld [vmem:[%s1 + $0x5c] sm:$0xf]
  %v70 = vld [vmem:[%s1 + $0x60] sm:$0xf]
  %v71 = vld [vmem:[%s1 + $0x64] sm:$0xf]
  %v72 = vld [vmem:[%s1 + $0x68] sm:$0xf]
  %v73 = vld [vmem:[%s1 + $0x6c] sm:$0xf]
  %v74 = vld [vmem:[%s1 + $0x70] sm:$0xf]
  %v75 = vld [vmem:[%s1 + $0x74] sm:$0xf]
  %v76 = vld [vmem:[%s1 + $0x78] sm:$0xf]
  %v77 = vld [vmem:[%s1 + $0x7c] sm:$0xf]
  %v78 = vld [vmem:[%s1 + $0x80] sm:$0xf]
  %v79 = vld [vmem:[%s1 + $0x84] sm:$0xf]
  %v80 = vld [vmem:[%s1 + $0x88] sm:$0xf]
  %v81 = vld [vmem:[%s1 + $0x8c] sm:$0xf]
  %v82 = vld [vmem:[%s1 + $0x90] sm:$0xf]
  %v83 = vld [vmem:[%s1 + $0x94] sm:$0xf]
  %v84 = vld [vmem:[%s1 + $0x98] sm:$0xf]
  %v85 = vld [vmem:[%s1 + $0x9c] sm:$0xf]
  %v86 = vld [vmem:[%s1 + $0xa0] sm:$0xf]
  %v87 = vld [vmem:[%s1 + $0xa4] sm:$0xf]
  %v88 = vld [vmem:[%s1 + $0xa8] sm:$0xf]
  %v89 = vld [vmem:[%s1 + $0xac] sm:$0xf]
  %v90 = vld [vmem:[%s1 + $0xb0] sm:$0xf]
  %v91 = vld [vmem:[%s1 + $0xb4] sm:$0xf]
  %v92 = vld [vmem:[%s1 + $0xb8] sm:$0xf]
  %v93 = vld [vmem:[%s1 + $0xbc] sm:$0xf]
  %v94 = vld [vmem:[%s1 + $0xc0] sm:$0xf]
  %v95 = vld [vmem:[%s1 + $0xc4] sm:$0xf]
  %v96 = vld [vmem:[%s1 + $0xc8] sm:$0xf]
  %v97 = vld [vmem:[%s1 + $0xcc] sm:$0xf]
  %v98 = vld [vmem:[%s1 + $0xd0] sm:$0xf]
  %v99 = vld [vmem:[%s1 + $0xd4] sm:$0xf]
  %v100 = vld [vmem:[%s1 + $0xd8] sm:$0xf]
  %v101 = vld [vmem:[%s1 + $0xdc] sm:$0xf]
  %v102 = vld [vmem:[%s1 + $0xe0] sm:$0xf]
  %v103 = vld [vmem:[%s1 + $0xe4] sm:$0xf]
  %v104 = vld [vmem:[%s1 + $0xe8] sm:$0xf]
  %v105 = vld [vmem:[%s1 + $0xec] sm:$0xf]
  %v106 = vld [vmem:[%s1 + $0xf0] sm:$0xf]
  %v107 = vld [vmem:[%s1 + $0xf4] sm:$0xf]
  %v108 = vld [vmem:[%s1 + $0xf8] sm:$0xf]
  %v109 = vld [vmem:[%s1 + $0xfc] sm:$0xf]
  %v142 = vunpack.c.l.b16 %v14
  %v143 = vunpack.c.h.b16 %v14
  %v144 = vunpack.c.l.b16 %v15
  %v145 = vunpack.c.h.b16 %v15
  %v146 = vunpack.c.l.b16 %v16
  %v147 = vunpack.c.h.b16 %v16
  %v148 = vunpack.c.l.b16 %v17
  %v149 = vunpack.c.h.b16 %v17
  %v150 = vunpack.c.l.b16 %v18
  %v151 = vunpack.c.h.b16 %v18
  %v152 = vunpack.c.l.b16 %v19
  %v153 = vunpack.c.h.b16 %v19
  %v154 = vunpack.c.l.b16 %v20
  %v155 = vunpack.c.h.b16 %v20
  %v156 = vunpack.c.l.b16 %v21
  %v157 = vunpack.c.h.b16 %v21
  %v158 = vunpack.c.l.b16 %v22
  %v159 = vunpack.c.h.b16 %v22
  %v160 = vunpack.c.l.b16 %v23
  %v161 = vunpack.c.h.b16 %v23
  %v162 = vunpack.c.l.b16 %v24
  %v163 = vunpack.c.h.b16 %v24
  %v164 = vunpack.c.l.b16 %v25
  %v165 = vunpack.c.h.b16 %v25
  %v166 = vunpack.c.l.b16 %v26
  %v167 = vunpack.c.h.b16 %v26
  %v168 = vunpack.c.l.b16 %v27
  %v169 = vunpack.c.h.b16 %v27
  %v170 = vunpack.c.l.b16 %v28
  %v171 = vunpack.c.h.b16 %v28
  %v172 = vunpack.c.l.b16 %v29
  %v173 = vunpack.c.h.b16 %v29
  %v174 = vunpack.c.l.b16 %v30
  %v175 = vunpack.c.h.b16 %v30
  %v176 = vunpack.c.l.b16 %v31
  %v177 = vunpack.c.h.b16 %v31
  %v178 = vunpack.c.l.b16 %v32
  %v179 = vunpack.c.h.b16 %v32
  %v180 = vunpack.c.l.b16 %v33
  %v181 = vunpack.c.h.b16 %v33
  %v182 = vunpack.c.l.b16 %v34
  %v183 = vunpack.c.h.b16 %v34
  %v184 = vunpack.c.l.b16 %v35
  %v185 = vunpack.c.h.b16 %v35
  %v186 = vunpack.c.l.b16 %v36
  %v187 = vunpack.c.h.b16 %v36
  %v188 = vunpack.c.l.b16 %v37
  %v189 = vunpack.c.h.b16 %v37
  %v190 = vunpack.c.l.b16 %v38
  %v191 = vunpack.c.h.b16 %v38
  %v192 = vunpack.c.l.b16 %v39
  %v193 = vunpack.c.h.b16 %v39
  %v194 = vunpack.c.l.b16 %v40
  %v195 = vunpack.c.h.b16 %v40
  %v196 = vunpack.c.l.b16 %v41
  %v197 = vunpack.c.h.b16 %v41
  %v198 = vunpack.c.l.b16 %v42
  %v199 = vunpack.c.h.b16 %v42
  %v200 = vunpack.c.l.b16 %v43
  %v201 = vunpack.c.h.b16 %v43
  %v202 = vunpack.c.l.b16 %v44
  %v203 = vunpack.c.h.b16 %v44
  %v204 = vunpack.c.l.b16 %v45
  %v205 = vunpack.c.h.b16 %v45
  %v206 = vpack.c.b16 %v146, %v142
  %v207 = vpack.c.b16 %v147, %v143
  %v208 = vpack.c.b16 %v148, %v144
  %v209 = vpack.c.b16 %v149, %v145
  %v210 = vpack.c.b16 %v154, %v150
  %v211 = vpack.c.b16 %v155, %v151
  %v212 = vpack.c.b16 %v156, %v152
  %v213 = vpack.c.b16 %v157, %v153
  %v214 = vpack.c.b16 %v162, %v158
  %v215 = vpack.c.b16 %v163, %v159
  %v216 = vpack.c.b16 %v164, %v160
  %v217 = vpack.c.b16 %v165, %v161
  %v218 = vpack.c.b16 %v170, %v166
  %v219 = vpack.c.b16 %v171, %v167
  %v220 = vpack.c.b16 %v172, %v168
  %v221 = vpack.c.b16 %v173, %v169
  %v222 = vpack.c.b16 %v178, %v174
  %v223 = vpack.c.b16 %v179, %v175
  %v224 = vpack.c.b16 %v180, %v176
  %v225 = vpack.c.b16 %v181, %v177
  %v226 = vpack.c.b16 %v186, %v182
  %v227 = vpack.c.b16 %v187, %v183
  %v228 = vpack.c.b16 %v188, %v184
  %v229 = vpack.c.b16 %v189, %v185
  %v230 = vpack.c.b16 %v194, %v190
  %v231 = vpack.c.b16 %v195, %v191
  %v232 = vpack.c.b16 %v196, %v192
  %v233 = vpack.c.b16 %v197, %v193
  %v234 = vpack.c.b16 %v202, %v198
  %v235 = vpack.c.b16 %v203, %v199
  %v236 = vpack.c.b16 %v204, %v200
  %v237 = vpack.c.b16 %v205, %v201
  %v334 = vunpack.c.l.b16 %v46
  %v335 = vunpack.c.l.b16 %v47
  %v336 = vunpack.c.l.b16 %v48
  %v337 = vunpack.c.l.b16 %v49
  %v338 = vunpack.c.l.b16 %v50
  %v339 = vunpack.c.l.b16 %v51
  %v340 = vunpack.c.l.b16 %v52
  %v341 = vunpack.c.l.b16 %v53
  %v342 = vunpack.c.l.b16 %v54
  %v343 = vunpack.c.l.b16 %v55
  %v344 = vunpack.c.l.b16 %v56
  %v345 = vunpack.c.l.b16 %v57
  %v346 = vunpack.c.l.b16 %v58
  %v347 = vunpack.c.l.b16 %v59
  %v348 = vunpack.c.l.b16 %v60
  %v349 = vunpack.c.l.b16 %v61
  %v350 = vunpack.c.l.b16 %v62
  %v351 = vunpack.c.l.b16 %v63
  %v352 = vunpack.c.l.b16 %v64
  %v353 = vunpack.c.l.b16 %v65
  %v354 = vunpack.c.l.b16 %v66
  %v355 = vunpack.c.l.b16 %v67
  %v356 = vunpack.c.l.b16 %v68
  %v357 = vunpack.c.l.b16 %v69
  %v358 = vunpack.c.l.b16 %v70
  %v359 = vunpack.c.l.b16 %v71
  %v360 = vunpack.c.l.b16 %v72
  %v361 = vunpack.c.l.b16 %v73
  %v362 = vunpack.c.l.b16 %v74
  %v363 = vunpack.c.l.b16 %v75
  %v364 = vunpack.c.l.b16 %v76
  %v365 = vunpack.c.l.b16 %v77
  %v366 = vunpack.c.l.b16 %v78
  %v367 = vunpack.c.l.b16 %v79
  %v368 = vunpack.c.l.b16 %v80
  %v369 = vunpack.c.l.b16 %v81
  %v370 = vunpack.c.l.b16 %v82
  %v371 = vunpack.c.l.b16 %v83
  %v372 = vunpack.c.l.b16 %v84
  %v373 = vunpack.c.l.b16 %v85
  %v374 = vunpack.c.l.b16 %v86
  %v375 = vunpack.c.l.b16 %v87
  %v376 = vunpack.c.l.b16 %v88
  %v377 = vunpack.c.l.b16 %v89
  %v378 = vunpack.c.l.b16 %v90
  %v379 = vunpack.c.l.b16 %v91
  %v380 = vunpack.c.l.b16 %v92
  %v381 = vunpack.c.l.b16 %v93
  %v382 = vunpack.c.l.b16 %v94
  %v383 = vunpack.c.l.b16 %v95
  %v384 = vunpack.c.l.b16 %v96
  %v385 = vunpack.c.l.b16 %v97
  %v386 = vunpack.c.l.b16 %v98
  %v387 = vunpack.c.l.b16 %v99
  %v388 = vunpack.c.l.b16 %v100
  %v389 = vunpack.c.l.b16 %v101
  %v390 = vunpack.c.l.b16 %v102
  %v391 = vunpack.c.l.b16 %v103
  %v392 = vunpack.c.l.b16 %v104
  %v393 = vunpack.c.l.b16 %v105
  %v394 = vunpack.c.l.b16 %v106
  %v395 = vunpack.c.l.b16 %v107
  %v396 = vunpack.c.l.b16 %v108
  %v397 = vunpack.c.l.b16 %v109
  %v398 = vpack.c.b16 %v335, %v334
  %v399 = vpack.c.b16 %v337, %v336
  %v400 = vpack.c.b16 %v339, %v338
  %v401 = vpack.c.b16 %v341, %v340
  %v402 = vpack.c.b16 %v343, %v342
  %v403 = vpack.c.b16 %v345, %v344
  %v404 = vpack.c.b16 %v347, %v346
  %v405 = vpack.c.b16 %v349, %v348
  %v406 = vpack.c.b16 %v351, %v350
  %v407 = vpack.c.b16 %v353, %v352
  %v408 = vpack.c.b16 %v355, %v354
  %v409 = vpack.c.b16 %v357, %v356
  %v410 = vpack.c.b16 %v359, %v358
  %v411 = vpack.c.b16 %v361, %v360
  %v412 = vpack.c.b16 %v363, %v362
  %v413 = vpack.c.b16 %v365, %v364
  %v414 = vpack.c.b16 %v367, %v366
  %v415 = vpack.c.b16 %v369, %v368
  %v416 = vpack.c.b16 %v371, %v370
  %v417 = vpack.c.b16 %v373, %v372
  %v418 = vpack.c.b16 %v375, %v374
  %v419 = vpack.c.b16 %v377, %v376
  %v420 = vpack.c.b16 %v379, %v378
  %v421 = vpack.c.b16 %v381, %v380
  %v422 = vpack.c.b16 %v383, %v382
  %v423 = vpack.c.b16 %v385, %v384
  %v424 = vpack.c.b16 %v387, %v386
  %v425 = vpack.c.b16 %v389, %v388
  %v426 = vpack.c.b16 %v391, %v390
  %v427 = vpack.c.b16 %v393, %v392
  %v428 = vpack.c.b16 %v395, %v394
  %v429 = vpack.c.b16 %v397, %v396
  %462 = vmatprep.subr.bf16.mxu0 0
  %463 = vmatpush1.bf16.msra.mxu0 %v405
  %464 = vmatprep.subr.bf16.mxu0 0
  %465 = vmatpush1.bf16.msra.mxu0 %v404
  %466 = vmatprep.subr.bf16.mxu0 0
  %467 = vmatpush1.bf16.msra.mxu0 %v403
  %468 = vmatprep.subr.bf16.mxu0 0
  %469 = vmatpush1.bf16.msra.mxu0 %v402
  %470 = vmatprep.subr.bf16.mxu0 0
  %471 = vmatpush1.bf16.msra.mxu0 %v401
  %472 = vmatprep.subr.bf16.mxu0 0
  %473 = vmatpush1.bf16.msra.mxu0 %v400
  %474 = vmatprep.subr.bf16.mxu0 0
  %475 = vmatpush1.bf16.msra.mxu0 %v399
  %476 = vmatprep.subr.bf16.mxu0 0
  %477 = vmatpush1.bf16.msra.mxu0 %v398
  %478 = vmatprep.subr.bf16.mxu0 0
  %479 = vmatpush2.bf16.msra.mxu0 %v413
  %480 = vmatprep.subr.bf16.mxu0 0
  %481 = vmatpush2.bf16.msra.mxu0 %v412
  %482 = vmatprep.subr.bf16.mxu0 0
  %483 = vmatpush2.bf16.msra.mxu0 %v411
  %484 = vmatprep.subr.bf16.mxu0 0
  %485 = vmatpush2.bf16.msra.mxu0 %v410
  %486 = vmatprep.subr.bf16.mxu0 0
  %487 = vmatpush2.bf16.msra.mxu0 %v409
  %488 = vmatprep.subr.bf16.mxu0 0
  %489 = vmatpush2.bf16.msra.mxu0 %v408
  %490 = vmatprep.subr.bf16.mxu0 0
  %491 = vmatpush2.bf16.msra.mxu0 %v407
  %492 = vmatprep.subr.bf16.mxu0 0
  %493 = vmatpush2.bf16.msra.mxu0 %v406
  %494 = vmatprep.mubr.bf16.mxu0 %v207
  %495 = vmatmul.mubr.bf16.gmra.mxu0 %v206
  %v496 = vpop.f32.mrf.mxu0
  %v497 = vadd.f32 0.0, %v496
  %v498 = vpop.f32.mrf.mxu0
  %v499 = vpop.f32.mrf.mxu0
  %v500 = vadd.f32 0.0, %v499
  %v501 = vpop.f32.mrf.mxu0
  %502 = vmatprep.mubr.bf16.mxu0 %v211
  %503 = vmatmul.mubr.bf16.gmra.mxu0 %v210
  %v504 = vpop.f32.mrf.mxu0
  %v505 = vadd.f32 0.0, %v504
  %v506 = vpop.f32.mrf.mxu0
  %v507 = vpop.f32.mrf.mxu0
  %v508 = vadd.f32 0.0, %v507
  %v509 = vpop.f32.mrf.mxu0
  %510 = vmatprep.mubr.bf16.mxu0 %v215
  %511 = vmatmul.mubr.bf16.gmra.mxu0 %v214
  %v512 = vpop.f32.mrf.mxu0
  %v513 = vadd.f32 0.0, %v512
  %v514 = vpop.f32.mrf.mxu0
  %v515 = vpop.f32.mrf.mxu0
  %v516 = vadd.f32 0.0, %v515
  %v517 = vpop.f32.mrf.mxu0
  %518 = vmatprep.mubr.bf16.mxu0 %v219
  %519 = vmatmul.mubr.bf16.gmra.mxu0 %v218
  %v520 = vpop.f32.mrf.mxu0
  %v521 = vadd.f32 0.0, %v520
  %v522 = vpop.f32.mrf.mxu0
  %v523 = vpop.f32.mrf.mxu0
  %v524 = vadd.f32 0.0, %v523
  %v525 = vpop.f32.mrf.mxu0
  %526 = vmatprep.mubr.bf16.mxu0 %v223
  %527 = vmatmul.mubr.bf16.gmra.mxu0 %v222
  %v528 = vpop.f32.mrf.mxu0
  %v529 = vadd.f32 0.0, %v528
  %v530 = vpop.f32.mrf.mxu0
  %v531 = vpop.f32.mrf.mxu0
  %v532 = vadd.f32 0.0, %v531
  %v533 = vpop.f32.mrf.mxu0
  %534 = vmatprep.mubr.bf16.mxu0 %v227
  %535 = vmatmul.mubr.bf16.gmra.mxu0 %v226
  %v536 = vpop.f32.mrf.mxu0
  %v537 = vadd.f32 0.0, %v536
  %v538 = vpop.f32.mrf.mxu0
  %v539 = vpop.f32.mrf.mxu0
  %v540 = vadd.f32 0.0, %v539
  %v541 = vpop.f32.mrf.mxu0
  %542 = vmatprep.mubr.bf16.mxu0 %v231
  %543 = vmatmul.mubr.bf16.gmra.mxu0 %v230
  %v544 = vpop.f32.mrf.mxu0
  %v545 = vadd.f32 0.0, %v544
  %v546 = vpop.f32.mrf.mxu0
  %v547 = vpop.f32.mrf.mxu0
  %v548 = vadd.f32 0.0, %v547
  %v549 = vpop.f32.mrf.mxu0
  %550 = vmatprep.mubr.bf16.mxu0 %v235
  %551 = vmatmul.mubr.bf16.gmra.mxu0 %v234
  %v552 = vpop.f32.mrf.mxu0
  %v553 = vadd.f32 0.0, %v552
  %v554 = vpop.f32.mrf.mxu0
  %v555 = vpop.f32.mrf.mxu0
  %v556 = vadd.f32 0.0, %v555
  %v557 = vpop.f32.mrf.mxu0
  %558 = vdwg.mxu0
  %559 = vmatprep.subr.bf16.mxu0 0
  %560 = vmatpush1.bf16.msra.mxu0 %v421
  %561 = vmatprep.subr.bf16.mxu0 0
  %562 = vmatpush1.bf16.msra.mxu0 %v420
  %563 = vmatprep.subr.bf16.mxu0 0
  %564 = vmatpush1.bf16.msra.mxu0 %v419
  %565 = vmatprep.subr.bf16.mxu0 0
  %566 = vmatpush1.bf16.msra.mxu0 %v418
  %567 = vmatprep.subr.bf16.mxu0 0
  %568 = vmatpush1.bf16.msra.mxu0 %v417
  %569 = vmatprep.subr.bf16.mxu0 0
  %570 = vmatpush1.bf16.msra.mxu0 %v416
  %571 = vmatprep.subr.bf16.mxu0 0
  %572 = vmatpush1.bf16.msra.mxu0 %v415
  %573 = vmatprep.subr.bf16.mxu0 0
  %574 = vmatpush1.bf16.msra.mxu0 %v414
  %575 = vmatprep.subr.bf16.mxu0 0
  %576 = vmatpush2.bf16.msra.mxu0 %v429
  %577 = vmatprep.subr.bf16.mxu0 0
  %578 = vmatpush2.bf16.msra.mxu0 %v428
  %579 = vmatprep.subr.bf16.mxu0 0
  %580 = vmatpush2.bf16.msra.mxu0 %v427
  %581 = vmatprep.subr.bf16.mxu0 0
  %582 = vmatpush2.bf16.msra.mxu0 %v426
  %583 = vmatprep.subr.bf16.mxu0 0
  %584 = vmatpush2.bf16.msra.mxu0 %v425
  %585 = vmatprep.subr.bf16.mxu0 0
  %586 = vmatpush2.bf16.msra.mxu0 %v424
  %587 = vmatprep.subr.bf16.mxu0 0
  %588 = vmatpush2.bf16.msra.mxu0 %v423
  %589 = vmatprep.subr.bf16.mxu0 0
  %590 = vmatpush2.bf16.msra.mxu0 %v422
  %591 = vmatprep.mubr.bf16.mxu0 %v209
  %592 = vmatmul.mubr.bf16.gmra.mxu0 %v208
  %v593 = vpop.f32.mrf.mxu0
  %v594 = vadd.f32 %v497, %v593
  %v595 = vpop.f32.mrf.mxu0
  %v596 = vpop.f32.mrf.mxu0
  %v597 = vadd.f32 %v500, %v596
  %v598 = vpop.f32.mrf.mxu0
  %599 = vmatprep.mubr.bf16.mxu0 %v213
  %600 = vmatmul.mubr.bf16.gmra.mxu0 %v212
  %v601 = vpop.f32.mrf.mxu0
  %v602 = vadd.f32 %v505, %v601
  %v603 = vpop.f32.mrf.mxu0
  %v604 = vpop.f32.mrf.mxu0
  %v605 = vadd.f32 %v508, %v604
  %v606 = vpop.f32.mrf.mxu0
  %607 = vmatprep.mubr.bf16.mxu0 %v217
  %608 = vmatmul.mubr.bf16.gmra.mxu0 %v216
  %v609 = vpop.f32.mrf.mxu0
  %v610 = vadd.f32 %v513, %v609
  %v611 = vpop.f32.mrf.mxu0
  %v612 = vpop.f32.mrf.mxu0
  %v613 = vadd.f32 %v516, %v612
  %v614 = vpop.f32.mrf.mxu0
  %615 = vmatprep.mubr.bf16.mxu0 %v221
  %616 = vmatmul.mubr.bf16.gmra.mxu0 %v220
  %v617 = vpop.f32.mrf.mxu0
  %v618 = vadd.f32 %v521, %v617
  %v619 = vpop.f32.mrf.mxu0
  %v620 = vpop.f32.mrf.mxu0
  %v621 = vadd.f32 %v524, %v620
  %v622 = vpop.f32.mrf.mxu0
  %623 = vmatprep.mubr.bf16.mxu0 %v225
  %624 = vmatmul.mubr.bf16.gmra.mxu0 %v224
  %v625 = vpop.f32.mrf.mxu0
  %v626 = vadd.f32 %v529, %v625
  %v627 = vpop.f32.mrf.mxu0
  %v628 = vpop.f32.mrf.mxu0
  %v629 = vadd.f32 %v532, %v628
  %v630 = vpop.f32.mrf.mxu0
  %631 = vmatprep.mubr.bf16.mxu0 %v229
  %632 = vmatmul.mubr.bf16.gmra.mxu0 %v228
  %v633 = vpop.f32.mrf.mxu0
  %v634 = vadd.f32 %v537, %v633
  %v635 = vpop.f32.mrf.mxu0
  %v636 = vpop.f32.mrf.mxu0
  %v637 = vadd.f32 %v540, %v636
  %v638 = vpop.f32.mrf.mxu0
  %639 = vmatprep.mubr.bf16.mxu0 %v233
  %640 = vmatmul.mubr.bf16.gmra.mxu0 %v232
  %v641 = vpop.f32.mrf.mxu0
  %v642 = vadd.f32 %v545, %v641
  %v643 = vpop.f32.mrf.mxu0
  %v644 = vpop.f32.mrf.mxu0
  %v645 = vadd.f32 %v548, %v644
  %v646 = vpop.f32.mrf.mxu0
  %647 = vmatprep.mubr.bf16.mxu0 %v237
  %648 = vmatmul.mubr.bf16.gmra.mxu0 %v236
  %v649 = vpop.f32.mrf.mxu0
  %v650 = vadd.f32 %v553, %v649
  %v651 = vpop.f32.mrf.mxu0
  %v652 = vpop.f32.mrf.mxu0
  %v653 = vadd.f32 %v556, %v652
  %v654 = vpop.f32.mrf.mxu0
  %655 = vdwg.mxu0
  %v656 = vpack.c.bf16 %v597, %v594
  %v657 = vpack.c.bf16 %v605, %v602
  %v658 = vpack.c.bf16 %v613, %v610
  %v659 = vpack.c.bf16 %v621, %v618
  %v660 = vpack.c.bf16 %v629, %v626
  %v661 = vpack.c.bf16 %v637, %v634
  %v662 = vpack.c.bf16 %v645, %v642
  %v663 = vpack.c.bf16 %v653, %v650
  %v672 = vunpack.c.l.b16 %v656
  %v673 = vunpack.c.h.b16 %v656
  %v674 = vunpack.c.l.b16 %v657
  %v675 = vunpack.c.h.b16 %v657
  %v676 = vunpack.c.l.b16 %v658
  %v677 = vunpack.c.h.b16 %v658
  %v678 = vunpack.c.l.b16 %v659
  %v679 = vunpack.c.h.b16 %v659
  %v680 = vunpack.c.l.b16 %v660
  %v681 = vunpack.c.h.b16 %v660
  %v682 = vunpack.c.l.b16 %v661
  %v683 = vunpack.c.h.b16 %v661
  %v684 = vunpack.c.l.b16 %v662
  %v685 = vunpack.c.h.b16 %v662
  %v686 = vunpack.c.l.b16 %v663
  %v687 = vunpack.c.h.b16 %v663
  %v688 = vpack.c.b16 %v672, %v672
  %v689 = vpack.c.b16 %v673, %v673
  %v690 = vpack.c.b16 %v674, %v674
  %v691 = vpack.c.b16 %v675, %v675
  %v692 = vpack.c.b16 %v676, %v676
  %v693 = vpack.c.b16 %v677, %v677
  %v694 = vpack.c.b16 %v678, %v678
  %v695 = vpack.c.b16 %v679, %v679
  %v696 = vpack.c.b16 %v680, %v680
  %v697 = vpack.c.b16 %v681, %v681
  %v698 = vpack.c.b16 %v682, %v682
  %v699 = vpack.c.b16 %v683, %v683
  %v700 = vpack.c.b16 %v684, %v684
  %v701 = vpack.c.b16 %v685, %v685
  %v702 = vpack.c.b16 %v686, %v686
  %v703 = vpack.c.b16 %v687, %v687
  %720 = vst [vmem:[%s2] sm:$0xf] %v688
  %721 = vst [vmem:[%s2 + $0x4] sm:$0xf] %v689
  %722 = vst [vmem:[%s2 + $0x8] sm:$0xf] %v690
  %723 = vst [vmem:[%s2 + $0xc] sm:$0xf] %v691
  %724 = vst [vmem:[%s2 + $0x10] sm:$0xf] %v692
  %725 = vst [vmem:[%s2 + $0x14] sm:$0xf] %v693
  %726 = vst [vmem:[%s2 + $0x18] sm:$0xf] %v694
  %727 = vst [vmem:[%s2 + $0x1c] sm:$0xf] %v695
  %728 = vst [vmem:[%s2 + $0x20] sm:$0xf] %v696
  %729 = vst [vmem:[%s2 + $0x24] sm:$0xf] %v697
  %730 = vst [vmem:[%s2 + $0x28] sm:$0xf] %v698
  %731 = vst [vmem:[%s2 + $0x2c] sm:$0xf] %v699
  %732 = vst [vmem:[%s2 + $0x30] sm:$0xf] %v700
  %733 = vst [vmem:[%s2 + $0x34] sm:$0xf] %v701
  %734 = vst [vmem:[%s2 + $0x38] sm:$0xf] %v702
  %735 = vst [vmem:[%s2 + $0x3c] sm:$0xf] %v703
  %v736 = vadd.f32 %v594, %v597
  %v737 = vadd.f32 %v736, %v602
  %v738 = vadd.f32 %v737, %v605
  %v739 = vadd.f32 %v738, %v610
  %v740 = vadd.f32 %v739, %v613
  %v741 = vadd.f32 %v740, %v618
  %v742 = vadd.f32 %v741, %v621
  %v743 = vadd.f32 %v742, %v626
  %v744 = vadd.f32 %v743, %v629
  %v745 = vadd.f32 %v744, %v634
  %v746 = vadd.f32 %v745, %v637
  %v747 = vadd.f32 %v746, %v642
  %v748 = vadd.f32 %v747, %v645
  %v749 = vadd.f32 %v748, %v650
  %v750 = vadd.f32 %v749, %v653
  %v751 = vrot.slane %v750, 4
  %v752 = vadd.f32 %v750, %v751
  %v753 = vrot.slane %v752, 2
  %v754 = vadd.f32 %v752, %v753
  %v755 = vrot.slane %v754, 1
  %v756 = vadd.f32 %v754, %v755
  %v757 = vmul.f32 %v594, %v594
  %v758 = vmul.f32 %v597, %v597
  %v759 = vmul.f32 %v602, %v602
  %v760 = vmul.f32 %v605, %v605
  %v761 = vmul.f32 %v610, %v610
  %v762 = vmul.f32 %v613, %v613
  %v763 = vmul.f32 %v618, %v618
  %v764 = vmul.f32 %v621, %v621
  %v765 = vmul.f32 %v626, %v626
  %v766 = vmul.f32 %v629, %v629
  %v767 = vmul.f32 %v634, %v634
  %v768 = vmul.f32 %v637, %v637
  %v769 = vmul.f32 %v642, %v642
  %v770 = vmul.f32 %v645, %v645
  %v771 = vmul.f32 %v650, %v650
  %v772 = vmul.f32 %v653, %v653
  %v773 = vadd.f32 %v757, %v758
  %v774 = vadd.f32 %v773, %v759
  %v775 = vadd.f32 %v774, %v760
  %v776 = vadd.f32 %v775, %v761
  %v777 = vadd.f32 %v776, %v762
  %v778 = vadd.f32 %v777, %v763
  %v779 = vadd.f32 %v778, %v764
  %v780 = vadd.f32 %v779, %v765
  %v781 = vadd.f32 %v780, %v766
  %v782 = vadd.f32 %v781, %v767
  %v783 = vadd.f32 %v782, %v768
  %v784 = vadd.f32 %v783, %v769
  %v785 = vadd.f32 %v784, %v770
  %v786 = vadd.f32 %v785, %v771
  %v787 = vadd.f32 %v786, %v772
  %v788 = vrot.slane %v787, 4
  %v789 = vadd.f32 %v787, %v788
  %v790 = vrot.slane %v789, 2
  %v791 = vadd.f32 %v789, %v790
  %v792 = vrot.slane %v791, 1
  %v793 = vadd.f32 %v791, %v792
  %vm794 = vcmask 1040384
  %v795 = vsel %vm794, %v756, %v793
  %vm796 = vcmask 1041408
  %v797 = vsel %vm796, %v795, 0.0
  %798 = vst [vmem:[%s3] sm:$0xff] %v797
  // Predicated region
  $region10: #{discriminator_forward.6} parent=0 // pred_check
    _
  $region11: #{discriminator_forward.6} parent=0 // pred_check_branch
    %800 = sbr.rel (0) target = $region13
  $region12: #{discriminator_forward.6} parent=0 // pred_region
    _
  $region13: #{discriminator_forward.6} parent=0 // pred_fallthru
    _
  // Predicated region
  $region14: #{discriminator_forward.6} parent=0 // pred_check
    _
  $region15: #{discriminator_forward.6} parent=0 // pred_check_branch
    %802 = sbr.rel (0) target = $region17
  $region16: #{discriminator_forward.6} parent=0 // pred_region
    _
  $region17: #{discriminator_forward.6} parent=0 // pred_fallthru
    _
  // Predicated region
  $region18: #{discriminator_forward.6} parent=0 // pred_check
    _
  $region19: #{discriminator_forward.6} parent=0 // pred_check_branch
    %804 = sbr.rel (0) target = $region21
  $region20: #{discriminator_forward.6} parent=0 // pred_region
    _
  $region21: #{discriminator_forward.6} parent=0 // pred_fallthru
    _
  // Predicated region
  $region22: #{discriminator_forward.6} parent=0 // pred_check
    _
  $region23: #{discriminator_forward.6} parent=0 // pred_check_branch
    %806 = sbr.rel (0) target = $region25
  $region24: #{discriminator_forward.6} parent=0 // pred_region
    _
  $region25: #{discriminator_forward.6} parent=0 // pred_fallthru
    _

// kernel: discriminator_forward.7
$region0: #{discriminator_forward.7}
  #allocation0 [shape = 'u32[]', space=smem, size = 0x4, offset = 0x4, fixed_abs, tag = 'smem constant byte address 0x4 - core index']
  #allocation1 [shape = 'u32[144,128]{1,0:T(1,128)}', space=vmem, size = 0x12000, scoped, tag = 'internal scratch']
  %s0 = inlined_call_operand.vmem [shape: bf16[32,1024], index: 0, kind: input, shape index: {}]
  %s1 = inlined_call_operand.vmem [shape: bf16[1024,128], index: 1, kind: input, shape index: {}]
  %s2 = inlined_call_operand.vmem [shape: bf16[32,128], index: 2, kind: output, shape index: {0}]
  %s3 = inlined_call_operand.vmem [shape: f32[1,8,128], index: 3, kind: output, shape index: {1}]
  %4 = xla_tuple %s2, %s3
  %s5 = sld [smem:[#allocation0]]
  $region26: #{discriminator_forward.7} parent=0
    _
  %s7 = ssub.s32 1, %s5
  %s8 = scalar_select 0, %s7, %s5
  // Predicated region
  $region2: #{discriminator_forward.7} parent=0 // pred_check
    _
  $region3: #{discriminator_forward.7} parent=0 // pred_check_branch
    %10 = sbr.rel (0) target = $region5
  $region4: #{discriminator_forward.7} parent=0 // pred_region
    _
  $region5: #{discriminator_forward.7} parent=0 // pred_fallthru
    _
  // Predicated region
  $region6: #{discriminator_forward.7} parent=0 // pred_check
    _
  $region7: #{discriminator_forward.7} parent=0 // pred_check_branch
    %12 = sbr.rel (0) target = $region9
  $region8: #{discriminator_forward.7} parent=0 // pred_region
    _
  $region9: #{discriminator_forward.7} parent=0 // pred_fallthru
    _
  %v14 = vld [vmem:[%s0] sm:$0xff]
  %v15 = vld [vmem:[%s0 + $0x8] sm:$0xff]
  %v16 = vld [vmem:[%s0 + $0x10] sm:$0xff]
  %v17 = vld [vmem:[%s0 + $0x18] sm:$0xff]
  %v18 = vld [vmem:[%s0 + $0x20] sm:$0xff]
  %v19 = vld [vmem:[%s0 + $0x28] sm:$0xff]
  %v20 = vld [vmem:[%s0 + $0x30] sm:$0xff]
  %v21 = vld [vmem:[%s0 + $0x38] sm:$0xff]
  %v22 = vld [vmem:[%s0 + $0x40] sm:$0xff]
  %v23 = vld [vmem:[%s0 + $0x48] sm:$0xff]
  %v24 = vld [vmem:[%s0 + $0x50] sm:$0xff]
  %v25 = vld [vmem:[%s0 + $0x58] sm:$0xff]
  %v26 = vld [vmem:[%s0 + $0x60] sm:$0xff]
  %v27 = vld [vmem:[%s0 + $0x68] sm:$0xff]
  %v28 = vld [vmem:[%s0 + $0x70] sm:$0xff]
  %v29 = vld [vmem:[%s0 + $0x78] sm:$0xff]
  %v30 = vld [vmem:[%s1] sm:$0xf]
  %v31 = vld [vmem:[%s1 + $0x4] sm:$0xf]
  %v32 = vld [vmem:[%s1 + $0x8] sm:$0xf]
  %v33 = vld [vmem:[%s1 + $0xc] sm:$0xf]
  %v34 = vld [vmem:[%s1 + $0x10] sm:$0xf]
  %v35 = vld [vmem:[%s1 + $0x14] sm:$0xf]
  %v36 = vld [vmem:[%s1 + $0x18] sm:$0xf]
  %v37 = vld [vmem:[%s1 + $0x1c] sm:$0xf]
  %v38 = vld [vmem:[%s1 + $0x20] sm:$0xf]
  %v39 = vld [vmem:[%s1 + $0x24] sm:$0xf]
  %v40 = vld [vmem:[%s1 + $0x28] sm:$0xf]
  %v41 = vld [vmem:[%s1 + $0x2c] sm:$0xf]
  %v42 = vld [vmem:[%s1 + $0x30] sm:$0xf]
  %v43 = vld [vmem:[%s1 + $0x34] sm:$0xf]
  %v44 = vld [vmem:[%s1 + $0x38] sm:$0xf]
  %v45 = vld [vmem:[%s1 + $0x3c] sm:$0xf]
  %v46 = vld [vmem:[%s1 + $0x40] sm:$0xf]
  %v47 = vld [vmem:[%s1 + $0x44] sm:$0xf]
  %v48 = vld [vmem:[%s1 + $0x48] sm:$0xf]
  %v49 = vld [vmem:[%s1 + $0x4c] sm:$0xf]
  %v50 = vld [vmem:[%s1 + $0x50] sm:$0xf]
  %v51 = vld [vmem:[%s1 + $0x54] sm:$0xf]
  %v52 = vld [vmem:[%s1 + $0x58] sm:$0xf]
  %v53 = vld [vmem:[%s1 + $0x5c] sm:$0xf]
  %v54 = vld [vmem:[%s1 + $0x60] sm:$0xf]
  %v55 = vld [vmem:[%s1 + $0x64] sm:$0xf]
  %v56 = vld [vmem:[%s1 + $0x68] sm:$0xf]
  %v57 = vld [vmem:[%s1 + $0x6c] sm:$0xf]
  %v58 = vld [vmem:[%s1 + $0x70] sm:$0xf]
  %v59 = vld [vmem:[%s1 + $0x74] sm:$0xf]
  %v60 = vld [vmem:[%s1 + $0x78] sm:$0xf]
  %v61 = vld [vmem:[%s1 + $0x7c] sm:$0xf]
  %v62 = vld [vmem:[%s1 + $0x80] sm:$0xf]
  %v63 = vld [vmem:[%s1 + $0x84] sm:$0xf]
  %v64 = vld [vmem:[%s1 + $0x88] sm:$0xf]
  %v65 = vld [vmem:[%s1 + $0x8c] sm:$0xf]
  %v66 = vld [vmem:[%s1 + $0x90] sm:$0xf]
  %v67 = vld [vmem:[%s1 + $0x94] sm:$0xf]
  %v68 = vld [vmem:[%s1 + $0x98] sm:$0xf]
  %v69 = vld [vmem:[%s1 + $0x9c] sm:$0xf]
  %v70 = vld [vmem:[%s1 + $0xa0] sm:$0xf]
  %v71 = vld [vmem:[%s1 + $0xa4] sm:$0xf]
  %v72 = vld [vmem:[%s1 + $0xa8] sm:$0xf]
  %v73 = vld [vmem:[%s1 + $0xac] sm:$0xf]
  %v74 = vld [vmem:[%s1 + $0xb0] sm:$0xf]
  %v75 = vld [vmem:[%s1 + $0xb4] sm:$0xf]
  %v76 = vld [vmem:[%s1 + $0xb8] sm:$0xf]
  %v77 = vld [vmem:[%s1 + $0xbc] sm:$0xf]
  %v78 = vld [vmem:[%s1 + $0xc0] sm:$0xf]
  %v79 = vld [vmem:[%s1 + $0xc4] sm:$0xf]
  %v80 = vld [vmem:[%s1 + $0xc8] sm:$0xf]
  %v81 = vld [vmem:[%s1 + $0xcc] sm:$0xf]
  %v82 = vld [vmem:[%s1 + $0xd0] sm:$0xf]
  %v83 = vld [vmem:[%s1 + $0xd4] sm:$0xf]
  %v84 = vld [vmem:[%s1 + $0xd8] sm:$0xf]
  %v85 = vld [vmem:[%s1 + $0xdc] sm:$0xf]
  %v86 = vld [vmem:[%s1 + $0xe0] sm:$0xf]
  %v87 = vld [vmem:[%s1 + $0xe4] sm:$0xf]
  %v88 = vld [vmem:[%s1 + $0xe8] sm:$0xf]
  %v89 = vld [vmem:[%s1 + $0xec] sm:$0xf]
  %v90 = vld [vmem:[%s1 + $0xf0] sm:$0xf]
  %v91 = vld [vmem:[%s1 + $0xf4] sm:$0xf]
  %v92 = vld [vmem:[%s1 + $0xf8] sm:$0xf]
  %v93 = vld [vmem:[%s1 + $0xfc] sm:$0xf]
  %v94 = vld [vmem:[%s1 + $0x100] sm:$0xf]
  %v95 = vld [vmem:[%s1 + $0x104] sm:$0xf]
  %v96 = vld [vmem:[%s1 + $0x108] sm:$0xf]
  %v97 = vld [vmem:[%s1 + $0x10c] sm:$0xf]
  %v98 = vld [vmem:[%s1 + $0x110] sm:$0xf]
  %v99 = vld [vmem:[%s1 + $0x114] sm:$0xf]
  %v100 = vld [vmem:[%s1 + $0x118] sm:$0xf]
  %v101 = vld [vmem:[%s1 + $0x11c] sm:$0xf]
  %v102 = vld [vmem:[%s1 + $0x120] sm:$0xf]
  %v103 = vld [vmem:[%s1 + $0x124] sm:$0xf]
  %v104 = vld [vmem:[%s1 + $0x128] sm:$0xf]
  %v105 = vld [vmem:[%s1 + $0x12c] sm:$0xf]
  %v106 = vld [vmem:[%s1 + $0x130] sm:$0xf]
  %v107 = vld [vmem:[%s1 + $0x134] sm:$0xf]
  %v108 = vld [vmem:[%s1 + $0x138] sm:$0xf]
  %v109 = vld [vmem:[%s1 + $0x13c] sm:$0xf]
  %v110 = vld [vmem:[%s1 + $0x140] sm:$0xf]
  %v111 = vld [vmem:[%s1 + $0x144] sm:$0xf]
  %v112 = vld [vmem:[%s1 + $0x148] sm:$0xf]
  %v113 = vld [vmem:[%s1 + $0x14c] sm:$0xf]
  %v114 = vld [vmem:[%s1 + $0x150] sm:$0xf]
  %v115 = vld [vmem:[%s1 + $0x154] sm:$0xf]
  %v116 = vld [vmem:[%s1 + $0x158] sm:$0xf]
  %v117 = vld [vmem:[%s1 + $0x15c] sm:$0xf]
  %v118 = vld [vmem:[%s1 + $0x160] sm:$0xf]
  %v119 = vld [vmem:[%s1 + $0x164] sm:$0xf]
  %v120 = vld [vmem:[%s1 + $0x168] sm:$0xf]
  %v121 = vld [vmem:[%s1 + $0x16c] sm:$0xf]
  %v122 = vld [vmem:[%s1 + $0x170] sm:$0xf]
  %v123 = vld [vmem:[%s1 + $0x174] sm:$0xf]
  %v124 = vld [vmem:[%s1 + $0x178] sm:$0xf]
  %v125 = vld [vmem:[%s1 + $0x17c] sm:$0xf]
  %v126 = vld [vmem:[%s1 + $0x180] sm:$0xf]
  %v127 = vld [vmem:[%s1 + $0x184] sm:$0xf]
  %v128 = vld [vmem:[%s1 + $0x188] sm:$0xf]
  %v129 = vld [vmem:[%s1 + $0x18c] sm:$0xf]
  %v130 = vld [vmem:[%s1 + $0x190] sm:$0xf]
  %v131 = vld [vmem:[%s1 + $0x194] sm:$0xf]
  %v132 = vld [vmem:[%s1 + $0x198] sm:$0xf]
  %v133 = vld [vmem:[%s1 + $0x19c] sm:$0xf]
  %v134 = vld [vmem:[%s1 + $0x1a0] sm:$0xf]
  %v135 = vld [vmem:[%s1 + $0x1a4] sm:$0xf]
  %v136 = vld [vmem:[%s1 + $0x1a8] sm:$0xf]
  %v137 = vld [vmem:[%s1 + $0x1ac] sm:$0xf]
  %v138 = vld [vmem:[%s1 + $0x1b0] sm:$0xf]
  %v139 = vld [vmem:[%s1 + $0x1b4] sm:$0xf]
  %v140 = vld [vmem:[%s1 + $0x1b8] sm:$0xf]
  %v141 = vld [vmem:[%s1 + $0x1bc] sm:$0xf]
  %v142 = vld [vmem:[%s1 + $0x1c0] sm:$0xf]
  %v143 = vld [vmem:[%s1 + $0x1c4] sm:$0xf]
  %v144 = vld [vmem:[%s1 + $0x1c8] sm:$0xf]
  %v145 = vld [vmem:[%s1 + $0x1cc] sm:$0xf]
  %v146 = vld [vmem:[%s1 + $0x1d0] sm:$0xf]
  %v147 = vld [vmem:[%s1 + $0x1d4] sm:$0xf]
  %v148 = vld [vmem:[%s1 + $0x1d8] sm:$0xf]
  %v149 = vld [vmem:[%s1 + $0x1dc] sm:$0xf]
  %v150 = vld [vmem:[%s1 + $0x1e0] sm:$0xf]
  %v151 = vld [vmem:[%s1 + $0x1e4] sm:$0xf]
  %v152 = vld [vmem:[%s1 + $0x1e8] sm:$0xf]
  %v153 = vld [vmem:[%s1 + $0x1ec] sm:$0xf]
  %v154 = vld [vmem:[%s1 + $0x1f0] sm:$0xf]
  %v155 = vld [vmem:[%s1 + $0x1f4] sm:$0xf]
  %v156 = vld [vmem:[%s1 + $0x1f8] sm:$0xf]
  %v157 = vld [vmem:[%s1 + $0x1fc] sm:$0xf]
  %v174 = vunpack.c.l.b16 %v14
  %v175 = vunpack.c.h.b16 %v14
  %v176 = vunpack.c.l.b16 %v15
  %v177 = vunpack.c.h.b16 %v15
  %v178 = vunpack.c.l.b16 %v16
  %v179 = vunpack.c.h.b16 %v16
  %v180 = vunpack.c.l.b16 %v17
  %v181 = vunpack.c.h.b16 %v17
  %v182 = vunpack.c.l.b16 %v18
  %v183 = vunpack.c.h.b16 %v18
  %v184 = vunpack.c.l.b16 %v19
  %v185 = vunpack.c.h.b16 %v19
  %v186 = vunpack.c.l.b16 %v20
  %v187 = vunpack.c.h.b16 %v20
  %v188 = vunpack.c.l.b16 %v21
  %v189 = vunpack.c.h.b16 %v21
  %v190 = vunpack.c.l.b16 %v22
  %v191 = vunpack.c.h.b16 %v22
  %v192 = vunpack.c.l.b16 %v23
  %v193 = vunpack.c.h.b16 %v23
  %v194 = vunpack.c.l.b16 %v24
  %v195 = vunpack.c.h.b16 %v24
  %v196 = vunpack.c.l.b16 %v25
  %v197 = vunpack.c.h.b16 %v25
  %v198 = vunpack.c.l.b16 %v26
  %v199 = vunpack.c.h.b16 %v26
  %v200 = vunpack.c.l.b16 %v27
  %v201 = vunpack.c.h.b16 %v27
  %v202 = vunpack.c.l.b16 %v28
  %v203 = vunpack.c.h.b16 %v28
  %v204 = vunpack.c.l.b16 %v29
  %v205 = vunpack.c.h.b16 %v29
  %v206 = vpack.c.b16 %v182, %v174
  %v207 = vpack.c.b16 %v183, %v175
  %v208 = vpack.c.b16 %v184, %v176
  %v209 = vpack.c.b16 %v185, %v177
  %v210 = vpack.c.b16 %v186, %v178
  %v211 = vpack.c.b16 %v187, %v179
  %v212 = vpack.c.b16 %v188, %v180
  %v213 = vpack.c.b16 %v189, %v181
  %v214 = vpack.c.b16 %v198, %v190
  %v215 = vpack.c.b16 %v199, %v191
  %v216 = vpack.c.b16 %v200, %v192
  %v217 = vpack.c.b16 %v201, %v193
  %v218 = vpack.c.b16 %v202, %v194
  %v219 = vpack.c.b16 %v203, %v195
  %v220 = vpack.c.b16 %v204, %v196
  %v221 = vpack.c.b16 %v205, %v197
  %v366 = vunpack.c.l.b16 %v30
  %v367 = vunpack.c.l.b16 %v31
  %v368 = vunpack.c.l.b16 %v32
  %v369 = vunpack.c.l.b16 %v33
  %v370 = vunpack.c.l.b16 %v34
  %v371 = vunpack.c.l.b16 %v35
  %v372 = vunpack.c.l.b16 %v36
  %v373 = vunpack.c.l.b16 %v37
  %v374 = vunpack.c.l.b16 %v38
  %v375 = vunpack.c.l.b16 %v39
  %v376 = vunpack.c.l.b16 %v40
  %v377 = vunpack.c.l.b16 %v41
  %v378 = vunpack.c.l.b16 %v42
  %v379 = vunpack.c.l.b16 %v43
  %v380 = vunpack.c.l.b16 %v44
  %v381 = vunpack.c.l.b16 %v45
  %v382 = vunpack.c.l.b16 %v46
  %v383 = vunpack.c.l.b16 %v47
  %v384 = vunpack.c.l.b16 %v48
  %v385 = vunpack.c.l.b16 %v49
  %v386 = vunpack.c.l.b16 %v50
  %v387 = vunpack.c.l.b16 %v51
  %v388 = vunpack.c.l.b16 %v52
  %v389 = vunpack.c.l.b16 %v53
  %v390 = vunpack.c.l.b16 %v54
  %v391 = vunpack.c.l.b16 %v55
  %v392 = vunpack.c.l.b16 %v56
  %v393 = vunpack.c.l.b16 %v57
  %v394 = vunpack.c.l.b16 %v58
  %v395 = vunpack.c.l.b16 %v59
  %v396 = vunpack.c.l.b16 %v60
  %v397 = vunpack.c.l.b16 %v61
  %v398 = vunpack.c.l.b16 %v62
  %v399 = vunpack.c.l.b16 %v63
  %v400 = vunpack.c.l.b16 %v64
  %v401 = vunpack.c.l.b16 %v65
  %v402 = vunpack.c.l.b16 %v66
  %v403 = vunpack.c.l.b16 %v67
  %v404 = vunpack.c.l.b16 %v68
  %v405 = vunpack.c.l.b16 %v69
  %v406 = vunpack.c.l.b16 %v70
  %v407 = vunpack.c.l.b16 %v71
  %v408 = vunpack.c.l.b16 %v72
  %v409 = vunpack.c.l.b16 %v73
  %v410 = vunpack.c.l.b16 %v74
  %v411 = vunpack.c.l.b16 %v75
  %v412 = vunpack.c.l.b16 %v76
  %v413 = vunpack.c.l.b16 %v77
  %v414 = vunpack.c.l.b16 %v78
  %v415 = vunpack.c.l.b16 %v79
  %v416 = vunpack.c.l.b16 %v80
  %v417 = vunpack.c.l.b16 %v81
  %v418 = vunpack.c.l.b16 %v82
  %v419 = vunpack.c.l.b16 %v83
  %v420 = vunpack.c.l.b16 %v84
  %v421 = vunpack.c.l.b16 %v85
  %v422 = vunpack.c.l.b16 %v86
  %v423 = vunpack.c.l.b16 %v87
  %v424 = vunpack.c.l.b16 %v88
  %v425 = vunpack.c.l.b16 %v89
  %v426 = vunpack.c.l.b16 %v90
  %v427 = vunpack.c.l.b16 %v91
  %v428 = vunpack.c.l.b16 %v92
  %v429 = vunpack.c.l.b16 %v93
  %v430 = vunpack.c.l.b16 %v94
  %v431 = vunpack.c.l.b16 %v95
  %v432 = vunpack.c.l.b16 %v96
  %v433 = vunpack.c.l.b16 %v97
  %v434 = vunpack.c.l.b16 %v98
  %v435 = vunpack.c.l.b16 %v99
  %v436 = vunpack.c.l.b16 %v100
  %v437 = vunpack.c.l.b16 %v101
  %v438 = vunpack.c.l.b16 %v102
  %v439 = vunpack.c.l.b16 %v103
  %v440 = vunpack.c.l.b16 %v104
  %v441 = vunpack.c.l.b16 %v105
  %v442 = vunpack.c.l.b16 %v106
  %v443 = vunpack.c.l.b16 %v107
  %v444 = vunpack.c.l.b16 %v108
  %v445 = vunpack.c.l.b16 %v109
  %v446 = vunpack.c.l.b16 %v110
  %v447 = vunpack.c.l.b16 %v111
  %v448 = vunpack.c.l.b16 %v112
  %v449 = vunpack.c.l.b16 %v113
  %v450 = vunpack.c.l.b16 %v114
  %v451 = vunpack.c.l.b16 %v115
  %v452 = vunpack.c.l.b16 %v116
  %v453 = vunpack.c.l.b16 %v117
  %v454 = vunpack.c.l.b16 %v118
  %v455 = vunpack.c.l.b16 %v119
  %v456 = vunpack.c.l.b16 %v120
  %v457 = vunpack.c.l.b16 %v121
  %v458 = vunpack.c.l.b16 %v122
  %v459 = vunpack.c.l.b16 %v123
  %v460 = vunpack.c.l.b16 %v124
  %v461 = vunpack.c.l.b16 %v125
  %v462 = vunpack.c.l.b16 %v126
  %v463 = vunpack.c.l.b16 %v127
  %v464 = vunpack.c.l.b16 %v128
  %v465 = vunpack.c.l.b16 %v129
  %v466 = vunpack.c.l.b16 %v130
  %v467 = vunpack.c.l.b16 %v131
  %v468 = vunpack.c.l.b16 %v132
  %v469 = vunpack.c.l.b16 %v133
  %v470 = vunpack.c.l.b16 %v134
  %v471 = vunpack.c.l.b16 %v135
  %v472 = vunpack.c.l.b16 %v136
  %v473 = vunpack.c.l.b16 %v137
  %v474 = vunpack.c.l.b16 %v138
  %v475 = vunpack.c.l.b16 %v139
  %v476 = vunpack.c.l.b16 %v140
  %v477 = vunpack.c.l.b16 %v141
  %v478 = vunpack.c.l.b16 %v142
  %v479 = vunpack.c.l.b16 %v143
  %v480 = vunpack.c.l.b16 %v144
  %v481 = vunpack.c.l.b16 %v145
  %v482 = vunpack.c.l.b16 %v146
  %v483 = vunpack.c.l.b16 %v147
  %v484 = vunpack.c.l.b16 %v148
  %v485 = vunpack.c.l.b16 %v149
  %v486 = vunpack.c.l.b16 %v150
  %v487 = vunpack.c.l.b16 %v151
  %v488 = vunpack.c.l.b16 %v152
  %v489 = vunpack.c.l.b16 %v153
  %v490 = vunpack.c.l.b16 %v154
  %v491 = vunpack.c.l.b16 %v155
  %v492 = vunpack.c.l.b16 %v156
  %v493 = vunpack.c.l.b16 %v157
  %v494 = vpack.c.b16 %v367, %v366
  %v495 = vpack.c.b16 %v369, %v368
  %v496 = vpack.c.b16 %v371, %v370
  %v497 = vpack.c.b16 %v373, %v372
  %v498 = vpack.c.b16 %v375, %v374
  %v499 = vpack.c.b16 %v377, %v376
  %v500 = vpack.c.b16 %v379, %v378
  %v501 = vpack.c.b16 %v381, %v380
  %v502 = vpack.c.b16 %v383, %v382
  %v503 = vpack.c.b16 %v385, %v384
  %v504 = vpack.c.b16 %v387, %v386
  %v505 = vpack.c.b16 %v389, %v388
  %v506 = vpack.c.b16 %v391, %v390
  %v507 = vpack.c.b16 %v393, %v392
  %v508 = vpack.c.b16 %v395, %v394
  %v509 = vpack.c.b16 %v397, %v396
  %v510 = vpack.c.b16 %v399, %v398
  %v511 = vpack.c.b16 %v401, %v400
  %v512 = vpack.c.b16 %v403, %v402
  %v513 = vpack.c.b16 %v405, %v404
  %v514 = vpack.c.b16 %v407, %v406
  %v515 = vpack.c.b16 %v409, %v408
  %v516 = vpack.c.b16 %v411, %v410
  %v517 = vpack.c.b16 %v413, %v412
  %v518 = vpack.c.b16 %v415, %v414
  %v519 = vpack.c.b16 %v417, %v416
  %v520 = vpack.c.b16 %v419, %v418
  %v521 = vpack.c.b16 %v421, %v420
  %v522 = vpack.c.b16 %v423, %v422
  %v523 = vpack.c.b16 %v425, %v424
  %v524 = vpack.c.b16 %v427, %v426
  %v525 = vpack.c.b16 %v429, %v428
  %v526 = vpack.c.b16 %v431, %v430
  %v527 = vpack.c.b16 %v433, %v432
  %v528 = vpack.c.b16 %v435, %v434
  %v529 = vpack.c.b16 %v437, %v436
  %v530 = vpack.c.b16 %v439, %v438
  %v531 = vpack.c.b16 %v441, %v440
  %v532 = vpack.c.b16 %v443, %v442
  %v533 = vpack.c.b16 %v445, %v444
  %v534 = vpack.c.b16 %v447, %v446
  %v535 = vpack.c.b16 %v449, %v448
  %v536 = vpack.c.b16 %v451, %v450
  %v537 = vpack.c.b16 %v453, %v452
  %v538 = vpack.c.b16 %v455, %v454
  %v539 = vpack.c.b16 %v457, %v456
  %v540 = vpack.c.b16 %v459, %v458
  %v541 = vpack.c.b16 %v461, %v460
  %v542 = vpack.c.b16 %v463, %v462
  %v543 = vpack.c.b16 %v465, %v464
  %v544 = vpack.c.b16 %v467, %v466
  %v545 = vpack.c.b16 %v469, %v468
  %v546 = vpack.c.b16 %v471, %v470
  %v547 = vpack.c.b16 %v473, %v472
  %v548 = vpack.c.b16 %v475, %v474
  %v549 = vpack.c.b16 %v477, %v476
  %v550 = vpack.c.b16 %v479, %v478
  %v551 = vpack.c.b16 %v481, %v480
  %v552 = vpack.c.b16 %v483, %v482
  %v553 = vpack.c.b16 %v485, %v484
  %v554 = vpack.c.b16 %v487, %v486
  %v555 = vpack.c.b16 %v489, %v488
  %v556 = vpack.c.b16 %v491, %v490
  %v557 = vpack.c.b16 %v493, %v492
  %622 = vmatprep.subr.bf16.mxu0 0
  %623 = vmatpush1.bf16.msra.mxu0 %v501
  %624 = vmatprep.subr.bf16.mxu0 0
  %625 = vmatpush1.bf16.msra.mxu0 %v500
  %626 = vmatprep.subr.bf16.mxu0 0
  %627 = vmatpush1.bf16.msra.mxu0 %v499
  %628 = vmatprep.subr.bf16.mxu0 0
  %629 = vmatpush1.bf16.msra.mxu0 %v498
  %630 = vmatprep.subr.bf16.mxu0 0
  %631 = vmatpush1.bf16.msra.mxu0 %v497
  %632 = vmatprep.subr.bf16.mxu0 0
  %633 = vmatpush1.bf16.msra.mxu0 %v496
  %634 = vmatprep.subr.bf16.mxu0 0
  %635 = vmatpush1.bf16.msra.mxu0 %v495
  %636 = vmatprep.subr.bf16.mxu0 0
  %637 = vmatpush1.bf16.msra.mxu0 %v494
  %638 = vmatprep.subr.bf16.mxu0 0
  %639 = vmatpush2.bf16.msra.mxu0 %v509
  %640 = vmatprep.subr.bf16.mxu0 0
  %641 = vmatpush2.bf16.msra.mxu0 %v508
  %642 = vmatprep.subr.bf16.mxu0 0
  %643 = vmatpush2.bf16.msra.mxu0 %v507
  %644 = vmatprep.subr.bf16.mxu0 0
  %645 = vmatpush2.bf16.msra.mxu0 %v506
  %646 = vmatprep.subr.bf16.mxu0 0
  %647 = vmatpush2.bf16.msra.mxu0 %v505
  %648 = vmatprep.subr.bf16.mxu0 0
  %649 = vmatpush2.bf16.msra.mxu0 %v504
  %650 = vmatprep.subr.bf16.mxu0 0
  %651 = vmatpush2.bf16.msra.mxu0 %v503
  %652 = vmatprep.subr.bf16.mxu0 0
  %653 = vmatpush2.bf16.msra.mxu0 %v502
  %654 = vmatprep.mubr.bf16.mxu0 %v207
  %655 = vmatmul.mubr.bf16.gmra.mxu0 %v206
  %v656 = vpop.f32.mrf.mxu0
  %v657 = vadd.f32 0.0, %v656
  %v658 = vpop.f32.mrf.mxu0
  %v659 = vpop.f32.mrf.mxu0
  %v660 = vadd.f32 0.0, %v659
  %v661 = vpop.f32.mrf.mxu0
  %662 = vmatprep.mubr.bf16.mxu0 %v215
  %663 = vmatmul.mubr.bf16.gmra.mxu0 %v214
  %v664 = vpop.f32.mrf.mxu0
  %v665 = vadd.f32 0.0, %v664
  %v666 = vpop.f32.mrf.mxu0
  %v667 = vpop.f32.mrf.mxu0
  %v668 = vadd.f32 0.0, %v667
  %v669 = vpop.f32.mrf.mxu0
  %670 = vdwg.mxu0
  %671 = vmatprep.subr.bf16.mxu0 0
  %672 = vmatpush1.bf16.msra.mxu0 %v517
  %673 = vmatprep.subr.bf16.mxu0 0
  %674 = vmatpush1.bf16.msra.mxu0 %v516
  %675 = vmatprep.subr.bf16.mxu0 0
  %676 = vmatpush1.bf16.msra.mxu0 %v515
  %677 = vmatprep.subr.bf16.mxu0 0
  %678 = vmatpush1.bf16.msra.mxu0 %v514
  %679 = vmatprep.subr.bf16.mxu0 0
  %680 = vmatpush1.bf16.msra.mxu0 %v513
  %681 = vmatprep.subr.bf16.mxu0 0
  %682 = vmatpush1.bf16.msra.mxu0 %v512
  %683 = vmatprep.subr.bf16.mxu0 0
  %684 = vmatpush1.bf16.msra.mxu0 %v511
  %685 = vmatprep.subr.bf16.mxu0 0
  %686 = vmatpush1.bf16.msra.mxu0 %v510
  %687 = vmatprep.subr.bf16.mxu0 0
  %688 = vmatpush2.bf16.msra.mxu0 %v525
  %689 = vmatprep.subr.bf16.mxu0 0
  %690 = vmatpush2.bf16.msra.mxu0 %v524
  %691 = vmatprep.subr.bf16.mxu0 0
  %692 = vmatpush2.bf16.msra.mxu0 %v523
  %693 = vmatprep.subr.bf16.mxu0 0
  %694 = vmatpush2.bf16.msra.mxu0 %v522
  %695 = vmatprep.subr.bf16.mxu0 0
  %696 = vmatpush2.bf16.msra.mxu0 %v521
  %697 = vmatprep.subr.bf16.mxu0 0
  %698 = vmatpush2.bf16.msra.mxu0 %v520
  %699 = vmatprep.subr.bf16.mxu0 0
  %700 = vmatpush2.bf16.msra.mxu0 %v519
  %701 = vmatprep.subr.bf16.mxu0 0
  %702 = vmatpush2.bf16.msra.mxu0 %v518
  %703 = vmatprep.mubr.bf16.mxu0 %v209
  %704 = vmatmul.mubr.bf16.gmra.mxu0 %v208
  %v705 = vpop.f32.mrf.mxu0
  %v706 = vadd.f32 %v657, %v705
  %v707 = vpop.f32.mrf.mxu0
  %v708 = vpop.f32.mrf.mxu0
  %v709 = vadd.f32 %v660, %v708
  %v710 = vpop.f32.mrf.mxu0
  %711 = vmatprep.mubr.bf16.mxu0 %v217
  %712 = vmatmul.mubr.bf16.gmra.mxu0 %v216
  %v713 = vpop.f32.mrf.mxu0
  %v714 = vadd.f32 %v665, %v713
  %v715 = vpop.f32.mrf.mxu0
  %v716 = vpop.f32.mrf.mxu0
  %v717 = vadd.f32 %v668, %v716
  %v718 = vpop.f32.mrf.mxu0
  %719 = vdwg.mxu0
  %720 = vmatprep.subr.bf16.mxu0 0
  %721 = vmatpush1.bf16.msra.mxu0 %v533
  %722 = vmatprep.subr.bf16.mxu0 0
  %723 = vmatpush1.bf16.msra.mxu0 %v532
  %724 = vmatprep.subr.bf16.mxu0 0
  %725 = vmatpush1.bf16.msra.mxu0 %v531
  %726 = vmatprep.subr.bf16.mxu0 0
  %727 = vmatpush1.bf16.msra.mxu0 %v530
  %728 = vmatprep.subr.bf16.mxu0 0
  %729 = vmatpush1.bf16.msra.mxu0 %v529
  %730 = vmatprep.subr.bf16.mxu0 0
  %731 = vmatpush1.bf16.msra.mxu0 %v528
  %732 = vmatprep.subr.bf16.mxu0 0
  %733 = vmatpush1.bf16.msra.mxu0 %v527
  %734 = vmatprep.subr.bf16.mxu0 0
  %735 = vmatpush1.bf16.msra.mxu0 %v526
  %736 = vmatprep.subr.bf16.mxu0 0
  %737 = vmatpush2.bf16.msra.mxu0 %v541
  %738 = vmatprep.subr.bf16.mxu0 0
  %739 = vmatpush2.bf16.msra.mxu0 %v540
  %740 = vmatprep.subr.bf16.mxu0 0
  %741 = vmatpush2.bf16.msra.mxu0 %v539
  %742 = vmatprep.subr.bf16.mxu0 0
  %743 = vmatpush2.bf16.msra.mxu0 %v538
  %744 = vmatprep.subr.bf16.mxu0 0
  %745 = vmatpush2.bf16.msra.mxu0 %v537
  %746 = vmatprep.subr.bf16.mxu0 0
  %747 = vmatpush2.bf16.msra.mxu0 %v536
  %748 = vmatprep.subr.bf16.mxu0 0
  %749 = vmatpush2.bf16.msra.mxu0 %v535
  %750 = vmatprep.subr.bf16.mxu0 0
  %751 = vmatpush2.bf16.msra.mxu0 %v534
  %752 = vmatprep.mubr.bf16.mxu0 %v211
  %753 = vmatmul.mubr.bf16.gmra.mxu0 %v210
  %v754 = vpop.f32.mrf.mxu0
  %v755 = vadd.f32 %v706, %v754
  %v756 = vpop.f32.mrf.mxu0
  %v757 = vpop.f32.mrf.mxu0
  %v758 = vadd.f32 %v709, %v757
  %v759 = vpop.f32.mrf.mxu0
  %760 = vmatprep.mubr.bf16.mxu0 %v219
  %761 = vmatmul.mubr.bf16.gmra.mxu0 %v218
  %v762 = vpop.f32.mrf.mxu0
  %v763 = vadd.f32 %v714, %v762
  %v764 = vpop.f32.mrf.mxu0
  %v765 = vpop.f32.mrf.mxu0
  %v766 = vadd.f32 %v717, %v765
  %v767 = vpop.f32.mrf.mxu0
  %768 = vdwg.mxu0
  %769 = vmatprep.subr.bf16.mxu0 0
  %770 = vmatpush1.bf16.msra.mxu0 %v549
  %771 = vmatprep.subr.bf16.mxu0 0
  %772 = vmatpush1.bf16.msra.mxu0 %v548
  %773 = vmatprep.subr.bf16.mxu0 0
  %774 = vmatpush1.bf16.msra.mxu0 %v547
  %775 = vmatprep.subr.bf16.mxu0 0
  %776 = vmatpush1.bf16.msra.mxu0 %v546
  %777 = vmatprep.subr.bf16.mxu0 0
  %778 = vmatpush1.bf16.msra.mxu0 %v545
  %779 = vmatprep.subr.bf16.mxu0 0
  %780 = vmatpush1.bf16.msra.mxu0 %v544
  %781 = vmatprep.subr.bf16.mxu0 0
  %782 = vmatpush1.bf16.msra.mxu0 %v543
  %783 = vmatprep.subr.bf16.mxu0 0
  %784 = vmatpush1.bf16.msra.mxu0 %v542
  %785 = vmatprep.subr.bf16.mxu0 0
  %786 = vmatpush2.bf16.msra.mxu0 %v557
  %787 = vmatprep.subr.bf16.mxu0 0
  %788 = vmatpush2.bf16.msra.mxu0 %v556
  %789 = vmatprep.subr.bf16.mxu0 0
  %790 = vmatpush2.bf16.msra.mxu0 %v555
  %791 = vmatprep.subr.bf16.mxu0 0
  %792 = vmatpush2.bf16.msra.mxu0 %v554
  %793 = vmatprep.subr.bf16.mxu0 0
  %794 = vmatpush2.bf16.msra.mxu0 %v553
  %795 = vmatprep.subr.bf16.mxu0 0
  %796 = vmatpush2.bf16.msra.mxu0 %v552
  %797 = vmatprep.subr.bf16.mxu0 0
  %798 = vmatpush2.bf16.msra.mxu0 %v551
  %799 = vmatprep.subr.bf16.mxu0 0
  %800 = vmatpush2.bf16.msra.mxu0 %v550
  %801 = vmatprep.mubr.bf16.mxu0 %v213
  %802 = vmatmul.mubr.bf16.gmra.mxu0 %v212
  %v803 = vpop.f32.mrf.mxu0
  %v804 = vadd.f32 %v755, %v803
  %v805 = vpop.f32.mrf.mxu0
  %v806 = vpop.f32.mrf.mxu0
  %v807 = vadd.f32 %v758, %v806
  %v808 = vpop.f32.mrf.mxu0
  %809 = vmatprep.mubr.bf16.mxu0 %v221
  %810 = vmatmul.mubr.bf16.gmra.mxu0 %v220
  %v811 = vpop.f32.mrf.mxu0
  %v812 = vadd.f32 %v763, %v811
  %v813 = vpop.f32.mrf.mxu0
  %v814 = vpop.f32.mrf.mxu0
  %v815 = vadd.f32 %v766, %v814
  %v816 = vpop.f32.mrf.mxu0
  %817 = vdwg.mxu0
  %v818 = vpack.c.bf16 %v807, %v804
  %v819 = vpack.c.bf16 %v815, %v812
  %v822 = vunpack.c.l.b16 %v818
  %v823 = vunpack.c.h.b16 %v818
  %v824 = vunpack.c.l.b16 %v819
  %v825 = vunpack.c.h.b16 %v819
  %v826 = vpack.c.b16 %v822, %v822
  %v827 = vpack.c.b16 %v823, %v823
  %v828 = vpack.c.b16 %v824, %v824
  %v829 = vpack.c.b16 %v825, %v825
  %834 = vst [vmem:[%s2] sm:$0xf] %v826
  %835 = vst [vmem:[%s2 + $0x4] sm:$0xf] %v827
  %836 = vst [vmem:[%s2 + $0x8] sm:$0xf] %v828
  %837 = vst [vmem:[%s2 + $0xc] sm:$0xf] %v829
  %v838 = vadd.f32 %v804, %v807
  %v839 = vadd.f32 %v838, %v812
  %v840 = vadd.f32 %v839, %v815
  %v841 = vrot.slane %v840, 4
  %v842 = vadd.f32 %v840, %v841
  %v843 = vrot.slane %v842, 2
  %v844 = vadd.f32 %v842, %v843
  %v845 = vrot.slane %v844, 1
  %v846 = vadd.f32 %v844, %v845
  %v847 = vmul.f32 %v804, %v804
  %v848 = vmul.f32 %v807, %v807
  %v849 = vmul.f32 %v812, %v812
  %v850 = vmul.f32 %v815, %v815
  %v851 = vadd.f32 %v847, %v848
  %v852 = vadd.f32 %v851, %v849
  %v853 = vadd.f32 %v852, %v850
  %v854 = vrot.slane %v853, 4
  %v855 = vadd.f32 %v853, %v854
  %v856 = vrot.slane %v855, 2
  %v857 = vadd.f32 %v855, %v856
  %v858 = vrot.slane %v857, 1
  %v859 = vadd.f32 %v857, %v858
  %vm860 = vcmask 1040384
  %v861 = vsel %vm860, %v846, %v859
  %vm862 = vcmask 1041408
  %v863 = vsel %vm862, %v861, 0.0
  %864 = vst [vmem:[%s3] sm:$0xff] %v863
  // Predicated region
  $region10: #{discriminator_forward.7} parent=0 // pred_check
    _
  $region11: #{discriminator_forward.7} parent=0 // pred_check_branch
    %866 = sbr.rel (0) target = $region13
  $region12: #{discriminator_forward.7} parent=0 // pred_region
    _
  $region13: #{discriminator_forward.7} parent=0 // pred_fallthru
    _
  // Predicated region
  $region14: #{discriminator_forward.7} parent=0 // pred_check
    _
  $region15: #{discriminator_forward.7} parent=0 // pred_check_branch
    %868 = sbr.rel (0) target = $region17
  $region16: #{discriminator_forward.7} parent=0 // pred_region
    _
  $region17: #{discriminator_forward.7} parent=0 // pred_fallthru
    _
  // Predicated region
  $region18: #{discriminator_forward.7} parent=0 // pred_check
    _
  $region19: #{discriminator_forward.7} parent=0 // pred_check_branch
    %870 = sbr.rel (0) target = $region21
  $region20: #{discriminator_forward.7} parent=0 // pred_region
    _
  $region21: #{discriminator_forward.7} parent=0 // pred_fallthru
    _
  // Predicated region
  $region22: #{discriminator_forward.7} parent=0 // pred_check
    _
  $region23: #{discriminator_forward.7} parent=0 // pred_check_branch
    %872 = sbr.rel (0) target = $region25
  $region24: #{discriminator_forward.7} parent=0 // pred_region
    _
  $region25: #{discriminator_forward.7} parent=0 // pred_fallthru
    _

</llo_original>
